<compile_context>
chip_gen: v6e
topology: v6e:2x2x1
jax: 0.10.0
libtpu: 0.0.40
codegen_flags: <defaults>
</compile_context>

<pallas_src>
import jax
import jax.numpy as jnp
from jax import lax
from jax.experimental import pallas as pl
from jax.experimental.pallas import tpu as pltpu

_LANES = 128
_SUBLANES = 8


def _round_up(n, m):
    return ((n + m - 1) // m) * m


# --------------------------------------------------------------------------------------
# Kernels
# --------------------------------------------------------------------------------------
def _mlp_mxu_kernel(x_ref, w1_ref, b1_ref, w2_ref, b2_ref, w3_ref, b3_ref, o_ref):
    """x_ref: (4, TB); weights (out, in) f32 VMEM; biases (out, 1) f32 VMEM."""
    x = x_ref[...].astype(jnp.float32)                                   # (4, TB)
    h1 = jnp.dot(w1_ref[...], x, preferred_element_type=jnp.float32)     # (16, TB)
    h1 = jnp.maximum(h1 + b1_ref[...], 0.0)
    h2 = jnp.dot(w2_ref[...], h1, preferred_element_type=jnp.float32)    # (16, TB)
    h2 = jnp.maximum(h2 + b2_ref[...], 0.0)
    y = jnp.dot(w3_ref[...], h2, preferred_element_type=jnp.float32)     # (8, TB)
    o_ref[...] = (y + b3_ref[...]).astype(o_ref.dtype)


def _mlp_vpu_kernel(x_ref, w1_ref, b1_ref, w2_ref, b2_ref, w3_ref, b3_ref, o_ref):
    """VPU scalar-broadcast path.

    x_ref: (4, TILE_SUB, 128) VMEM; o_ref: (8, TILE_SUB, 128) VMEM;
    w*/b*: flattened f32 vectors resident in SMEM (read as scalars).
    """
    n_in = x_ref.shape[0]
    n_h1 = b1_ref.shape[0]
    n_h2 = b2_ref.shape[0]
    n_out = o_ref.shape[0]
    tile_sub = x_ref.shape[1]
    n_chunks = tile_sub // _SUBLANES                     # static at trace time

    def chunk_body(c, carry):
        base = pl.multiple_of(c * _SUBLANES, _SUBLANES)
        # Full-occupancy (8,128) slabs per input feature.
        xs = [x_ref[i, pl.ds(base, _SUBLANES), :].astype(jnp.float32)
              for i in range(n_in)]

        h1 = []
        for j in range(n_h1):
            acc = xs[0] * w1_ref[j * n_in]
            for i in range(1, n_in):
                acc = acc + xs[i] * w1_ref[j * n_in + i]
            h1.append(jnp.maximum(acc + b1_ref[j], 0.0))

        h2 = []
        for k in range(n_h2):
            acc = h1[0] * w2_ref[k * n_h1]
            for j in range(1, n_h1):
                acc = acc + h1[j] * w2_ref[k * n_h1 + j]
            h2.append(jnp.maximum(acc + b2_ref[k], 0.0))

        for m in range(n_out):
            acc = h2[0] * w3_ref[m * n_h2]
            for k in range(1, n_h2):
                acc = acc + h2[k] * w3_ref[m * n_h2 + k]
            o_ref[m, pl.ds(base, _SUBLANES), :] = (acc + b3_ref[m]).astype(o_ref.dtype)
        return carry

    lax.fori_loop(0, n_chunks, chunk_body, 0)


# --------------------------------------------------------------------------------------
# Wrapper
# --------------------------------------------------------------------------------------
def _pick_tile(tile_b, batch, in_itemsize, out_itemsize, n_in, n_out, vmem_budget_bytes):
    """Tile in lanes: multiple of 1024 (8 sublane-rows x 128 lanes), capped so the
    double-buffered x + y tiles stay inside the VMEM budget."""
    min_tile = _SUBLANES * _LANES                                  # 1024
    bytes_per_lane = 2 * (n_in * in_itemsize + n_out * out_itemsize)   # double-buffered
    cap = max(min_tile, (vmem_budget_bytes // bytes_per_lane) // min_tile * min_tile)
    tile_b = max(min_tile, (int(tile_b) // min_tile) * min_tile)
    tile_b = min(tile_b, cap)
    tile_b = min(tile_b, _round_up(max(batch, 1), min_tile))       # don't tile past batch
    b_pad = _round_up(max(batch, 1), tile_b)
    return tile_b, b_pad


def _batch_dim_semantics(n_tiles):
    """'parallel' everywhere; CORE_PARALLEL on v7x so the batch grid splits across
    both TensorCores (plain 'parallel' does not change codegen there)."""
    try:
        kind = jax.devices()[0].device_kind.lower()
        if "v7" in kind and n_tiles >= 2:
            return (pltpu.CORE_PARALLEL,)
    except Exception:
        pass
    return ("parallel",)


def service_model_forward(
    x,
    params,
    *,
    impl="vpu",                  # "vpu" (scalar-broadcast VALU) or "mxu" (jnp.dot)
    tile_b=65536,                # batch tile (lanes); large to amortize ~0.35us/step
    transfer_dtype=None,         # e.g. jnp.bfloat16: HBM->VMEM dtype for x
    out_dtype=jnp.float32,       # e.g. jnp.bfloat16: halves output HBM traffic
    feature_major_io=False,      # True: x is (4, B) and (8, B) is returned (no transposes)
    vmem_budget_bytes=24 << 20,  # cap for double-buffered x+y tiles (v5e/v7x safe)
):
    """ServiceModel forward.  Default I/O matches the PyTorch module: x of shape
    (B, ...) flattening to 4 features, returns (B, 8).  With feature_major_io=True the
    wrapper-side HBM round-trip transposes are skipped entirely."""
    w1, b1 = params["w1"], params["b1"]   # (10, 4), (10, 1)
    w2, b2 = params["w2"], params["b2"]   # (16, 10), (16, 1)
    w3, b3 = params["w3"], params["b3"]   # (8, 16), (8, 1)
    n_in, n_h1, n_h2, n_out = w1.shape[1], w1.shape[0], w2.shape[0], w3.shape[0]

    if feature_major_io:
        assert x.shape[0] == n_in, "feature_major_io expects x of shape (4, B)"
        batch = x.shape[1]
        x_fm = x
    else:
        batch = x.shape[0]
        x_flat = x.reshape(batch, -1)     # torch.nn.Flatten
        assert x_flat.shape[1] == n_in, "ServiceModel expects 4 input features"
        # XLA glue: this transpose round-trips HBM; pass feature-major data with
        # feature_major_io=True to avoid it (largest end-to-end lever per review).
        x_fm = x_flat.T                                             # (4, B)

    in_itemsize = jnp.dtype(transfer_dtype).itemsize if transfer_dtype is not None \
        else jnp.dtype(x_fm.dtype).itemsize
    out_itemsize = jnp.dtype(out_dtype).itemsize
    tile_b, b_pad = _pick_tile(tile_b, batch, in_itemsize, out_itemsize,
                               n_in, n_out, vmem_budget_bytes)
    n_tiles = b_pad // tile_b

    if b_pad > batch:
        x_fm = jnp.pad(x_fm, ((0, 0), (0, b_pad - batch)))          # zero cols: harmless
    if transfer_dtype is not None:
        x_fm = x_fm.astype(transfer_dtype)

    cparams = pltpu.CompilerParams(
        dimension_semantics=_batch_dim_semantics(n_tiles),
        vmem_limit_bytes=32 * 1024 * 1024)

    if impl == "vpu":
        tile_sub = tile_b // _LANES
        n_sub = b_pad // _LANES
        x_3d = x_fm.reshape(n_in, n_sub, _LANES)      # free, contiguous reshape
        flat = lambda a: a.reshape(-1).astype(jnp.float32)
        smem = lambda: pl.BlockSpec(memory_space=pltpu.MemorySpace.SMEM)
        y_3d = pl.pallas_call(
            _mlp_vpu_kernel,
            out_shape=jax.ShapeDtypeStruct((n_out, n_sub, _LANES), out_dtype),
            grid=(n_tiles,),
            in_specs=[
                pl.BlockSpec((n_in, tile_sub, _LANES), lambda i: (0, i, 0)),
                smem(), smem(), smem(), smem(), smem(), smem(),
            ],
            out_specs=pl.BlockSpec((n_out, tile_sub, _LANES), lambda i: (0, i, 0)),
            compiler_params=cparams,
        )(x_3d, flat(w1), flat(b1), flat(w2), flat(b2), flat(w3), flat(b3))
        y_fm = y_3d.reshape(n_out, b_pad)
    elif impl == "mxu":
        w1, w2, w3 = (a.astype(jnp.float32) for a in (w1, w2, w3))
        b1, b2, b3 = (a.astype(jnp.float32).reshape(-1, 1) for a in (b1, b2, b3))
        # Zero-pad hidden dim 10 -> 16: (8,128)-aligned intermediates, identical math.
        h1_pad = _round_up(n_h1, _SUBLANES)
        if h1_pad != n_h1:
            extra = h1_pad - n_h1
            w1 = jnp.pad(w1, ((0, extra), (0, 0)))
            b1 = jnp.pad(b1, ((0, extra), (0, 0)))
            w2 = jnp.pad(w2, ((0, 0), (0, extra)))
        resident = lambda a: pl.BlockSpec(a.shape, lambda i, _nd=a.ndim: (0,) * _nd)
        y_fm = pl.pallas_call(
            _mlp_mxu_kernel,
            out_shape=jax.ShapeDtypeStruct((n_out, b_pad), out_dtype),
            grid=(n_tiles,),
            in_specs=[
                pl.BlockSpec((n_in, tile_b), lambda i: (0, i)),
                resident(w1), resident(b1), resident(w2), resident(b2),
                resident(w3), resident(b3),
            ],
            out_specs=pl.BlockSpec((n_out, tile_b), lambda i: (0, i)),
            compiler_params=cparams,
        )(x_fm, w1, b1, w2, b2, w3, b3)
    else:
        raise ValueError(f"unknown impl: {impl!r}")

    y_fm = y_fm[:, :batch]              # slice padded batch BEFORE any transpose
    return y_fm if feature_major_io else y_fm.T


# --------------------------------------------------------------------------------------
# Params / reference
# --------------------------------------------------------------------------------------
def init_params(key):
    """PyTorch-default Linear init: U(-1/sqrt(fan_in), +1/sqrt(fan_in)) for W and b.
    Weights stored PyTorch-style (out_features, in_features); biases (out, 1)."""
    dims = [(4, 10), (10, 16), (16, 8)]
    params = {}
    for i, (fan_in, fan_out) in enumerate(dims, start=1):
        key, kw, kb = jax.random.split(key, 3)
        bound = 1.0 / jnp.sqrt(float(fan_in))
        params[f"w{i}"] = jax.random.uniform(
            kw, (fan_out, fan_in), jnp.float32, minval=-bound, maxval=bound)
        params[f"b{i}"] = jax.random.uniform(
            kb, (fan_out, 1), jnp.float32, minval=-bound, maxval=bound)
    return params


def reference_forward(x, params):
    """Pure-JAX reference for correctness checks."""
    h = x.reshape(x.shape[0], -1)
    h = jnp.maximum(h @ params["w1"].T + params["b1"].T, 0.0)
    h = jnp.maximum(h @ params["w2"].T + params["b2"].T, 0.0)
    return h @ params["w3"].T + params["b3"].T


# --------------------------------------------------------------------------------------
# Tests
# --------------------------------------------------------------------------------------
if __name__ == "__main__":
    key = jax.random.PRNGKey(0)
    key, k1, k2 = jax.random.split(key, 3)
    params = init_params(key)

    # --- Test 1: tiny batch matching the module spec (B=2, flattens to 4 features),
    #             default VPU path and default (clamped) tile.
    x_small = jax.random.normal(k1, (2, 2, 2), dtype=jnp.float32)
    y1 = jax.block_until_ready(service_model_forward(x_small, params))
    ref1 = reference_forward(x_small, params)
    assert y1.shape == (2, 8)
    assert jnp.allclose(y1, ref1, atol=2e-3, rtol=2e-3), "mismatch vs reference (small)"

    # --- Test 2: VPU path, multi-tile grid + batch-remainder padding.
    # (tile_b=1024 here is only to exercise multi-tile at test-sized batches; the
    #  production default is 65536 lanes to amortize the ~0.35us per-grid-step cost.)
    x_big = jax.random.normal(k2, (1500, 4), dtype=jnp.float32)
    ref2 = reference_forward(x_big, params)
    y2 = jax.block_until_ready(
        service_model_forward(x_big, params, impl="vpu", tile_b=1024))
    assert y2.shape == (1500, 8)
    assert jnp.allclose(y2, ref2, atol=2e-3, rtol=2e-3), "mismatch vs reference (vpu tiled)"

    # --- Test 3: MXU fallback path (hidden dim zero-padded 10->16) on the same data.
    y3 = jax.block_until_ready(
        service_model_forward(x_big, params, impl="mxu", tile_b=1024))
    assert jnp.allclose(y3, ref2, atol=2e-3, rtol=2e-3), "mismatch vs reference (mxu)"

    # --- Test 4: bandwidth levers: bf16 HBM transfer for x, bf16 output, and
    #             feature-major I/O (no wrapper transposes), on the MXU path.
    x_fm = x_big.T                                     # (4, B) producer-side layout
    y4 = jax.block_until_ready(
        service_model_forward(x_fm, params, impl="mxu", tile_b=1024,
                              transfer_dtype=jnp.bfloat16, out_dtype=jnp.bfloat16,
                              feature_major_io=True))
    ref4 = reference_forward(x_big.astype(jnp.bfloat16).astype(jnp.float32), params)
    assert y4.shape == (8, 1500)
    assert jnp.allclose(y4.astype(jnp.float32).T, ref4, atol=5e-2, rtol=5e-2), \
        "mismatch vs reference (bf16, feature-major)"

    print("KERNEL_OK")
</pallas_src>

<mosaic_0001>
module attributes {stable_mosaic.version = 11 : i64} {
  func.func @_mlp_vpu_kernel(%arg0: i32, %arg1: memref<4x8x128xf32, #tpu.memory_space<vmem>>, %arg2: memref<40xf32, #tpu.memory_space<smem>>, %arg3: memref<10xf32, #tpu.memory_space<smem>>, %arg4: memref<160xf32, #tpu.memory_space<smem>>, %arg5: memref<16xf32, #tpu.memory_space<smem>>, %arg6: memref<128xf32, #tpu.memory_space<smem>>, %arg7: memref<8xf32, #tpu.memory_space<smem>>, %arg8: memref<8x8x128xf32, #tpu.memory_space<vmem>>) attributes {dimension_semantics = [#tpu.dimension_semantics<parallel>], iteration_bounds = array<i64: 1>, scalar_prefetch = 0 : i64, scratch_operands = 0 : i64, tpu.core_type = #tpu.core_type<tc>, window_params = [{transform_indices = @transform_0, window_bounds = array<i64: 4, 8, 128>}, {transform_indices = @transform_1, window_bounds = array<i64: 40>}, {transform_indices = @transform_2, window_bounds = array<i64: 10>}, {transform_indices = @transform_3, window_bounds = array<i64: 160>}, {transform_indices = @transform_4, window_bounds = array<i64: 16>}, {transform_indices = @transform_5, window_bounds = array<i64: 128>}, {transform_indices = @transform_6, window_bounds = array<i64: 8>}, {transform_indices = @transform_7, window_bounds = array<i64: 8, 8, 128>}]} {
    %c0_i32 = arith.constant 0 : i32
    %c8_i32 = arith.constant 8 : i32
    %0 = arith.muli %c0_i32, %c8_i32 : i32
    %1 = tpu.assume_multiple %0, 8 : i32
    %c0 = arith.constant 0 : index
    %2 = arith.index_cast %1 : i32 to index
    %c0_0 = arith.constant 0 : index
    %3 = vector.load %arg1[%c0, %2, %c0_0] : memref<4x8x128xf32, #tpu.memory_space<vmem>>, vector<1x8x128xf32>
    %4 = vector.shape_cast %3 : vector<1x8x128xf32> to vector<8x128xf32>
    %c1 = arith.constant 1 : index
    %5 = arith.index_cast %1 : i32 to index
    %c0_1 = arith.constant 0 : index
    %6 = vector.load %arg1[%c1, %5, %c0_1] : memref<4x8x128xf32, #tpu.memory_space<vmem>>, vector<1x8x128xf32>
    %7 = vector.shape_cast %6 : vector<1x8x128xf32> to vector<8x128xf32>
    %c2 = arith.constant 2 : index
    %8 = arith.index_cast %1 : i32 to index
    %c0_2 = arith.constant 0 : index
    %9 = vector.load %arg1[%c2, %8, %c0_2] : memref<4x8x128xf32, #tpu.memory_space<vmem>>, vector<1x8x128xf32>
    %10 = vector.shape_cast %9 : vector<1x8x128xf32> to vector<8x128xf32>
    %c3 = arith.constant 3 : index
    %11 = arith.index_cast %1 : i32 to index
    %c0_3 = arith.constant 0 : index
    %12 = vector.load %arg1[%c3, %11, %c0_3] : memref<4x8x128xf32, #tpu.memory_space<vmem>>, vector<1x8x128xf32>
    %13 = vector.shape_cast %12 : vector<1x8x128xf32> to vector<8x128xf32>
    %c0_4 = arith.constant 0 : index
    %14 = memref.load %arg2[%c0_4] : memref<40xf32, #tpu.memory_space<smem>>
    %15 = vector.broadcast %14 : f32 to vector<8x128xf32>
    %16 = arith.mulf %4, %15 : vector<8x128xf32>
    %c1_5 = arith.constant 1 : index
    %17 = memref.load %arg2[%c1_5] : memref<40xf32, #tpu.memory_space<smem>>
    %18 = vector.broadcast %17 : f32 to vector<8x128xf32>
    %19 = arith.mulf %7, %18 : vector<8x128xf32>
    %20 = arith.addf %16, %19 : vector<8x128xf32>
    %c2_6 = arith.constant 2 : index
    %21 = memref.load %arg2[%c2_6] : memref<40xf32, #tpu.memory_space<smem>>
    %22 = vector.broadcast %21 : f32 to vector<8x128xf32>
    %23 = arith.mulf %10, %22 : vector<8x128xf32>
    %24 = arith.addf %20, %23 : vector<8x128xf32>
    %c3_7 = arith.constant 3 : index
    %25 = memref.load %arg2[%c3_7] : memref<40xf32, #tpu.memory_space<smem>>
    %26 = vector.broadcast %25 : f32 to vector<8x128xf32>
    %27 = arith.mulf %13, %26 : vector<8x128xf32>
    %28 = arith.addf %24, %27 : vector<8x128xf32>
    %c0_8 = arith.constant 0 : index
    %29 = memref.load %arg3[%c0_8] : memref<10xf32, #tpu.memory_space<smem>>
    %30 = vector.broadcast %29 : f32 to vector<8x128xf32>
    %31 = arith.addf %28, %30 : vector<8x128xf32>
    %cst = arith.constant 0.000000e+00 : f32
    %32 = vector.broadcast %cst : f32 to vector<8x128xf32>
    %33 = arith.maximumf %31, %32 : vector<8x128xf32>
    %c4 = arith.constant 4 : index
    %34 = memref.load %arg2[%c4] : memref<40xf32, #tpu.memory_space<smem>>
    %35 = vector.broadcast %34 : f32 to vector<8x128xf32>
    %36 = arith.mulf %4, %35 : vector<8x128xf32>
    %c5 = arith.constant 5 : index
    %37 = memref.load %arg2[%c5] : memref<40xf32, #tpu.memory_space<smem>>
    %38 = vector.broadcast %37 : f32 to vector<8x128xf32>
    %39 = arith.mulf %7, %38 : vector<8x128xf32>
    %40 = arith.addf %36, %39 : vector<8x128xf32>
    %c6 = arith.constant 6 : index
    %41 = memref.load %arg2[%c6] : memref<40xf32, #tpu.memory_space<smem>>
    %42 = vector.broadcast %41 : f32 to vector<8x128xf32>
    %43 = arith.mulf %10, %42 : vector<8x128xf32>
    %44 = arith.addf %40, %43 : vector<8x128xf32>
    %c7 = arith.constant 7 : index
    %45 = memref.load %arg2[%c7] : memref<40xf32, #tpu.memory_space<smem>>
    %46 = vector.broadcast %45 : f32 to vector<8x128xf32>
    %47 = arith.mulf %13, %46 : vector<8x128xf32>
    %48 = arith.addf %44, %47 : vector<8x128xf32>
    %c1_9 = arith.constant 1 : index
    %49 = memref.load %arg3[%c1_9] : memref<10xf32, #tpu.memory_space<smem>>
    %50 = vector.broadcast %49 : f32 to vector<8x128xf32>
    %51 = arith.addf %48, %50 : vector<8x128xf32>
    %cst_10 = arith.constant 0.000000e+00 : f32
    %52 = vector.broadcast %cst_10 : f32 to vector<8x128xf32>
    %53 = arith.maximumf %51, %52 : vector<8x128xf32>
    %c8 = arith.constant 8 : index
    %54 = memref.load %arg2[%c8] : memref<40xf32, #tpu.memory_space<smem>>
    %55 = vector.broadcast %54 : f32 to vector<8x128xf32>
    %56 = arith.mulf %4, %55 : vector<8x128xf32>
    %c9 = arith.constant 9 : index
    %57 = memref.load %arg2[%c9] : memref<40xf32, #tpu.memory_space<smem>>
    %58 = vector.broadcast %57 : f32 to vector<8x128xf32>
    %59 = arith.mulf %7, %58 : vector<8x128xf32>
    %60 = arith.addf %56, %59 : vector<8x128xf32>
    %c10 = arith.constant 10 : index
    %61 = memref.load %arg2[%c10] : memref<40xf32, #tpu.memory_space<smem>>
    %62 = vector.broadcast %61 : f32 to vector<8x128xf32>
    %63 = arith.mulf %10, %62 : vector<8x128xf32>
    %64 = arith.addf %60, %63 : vector<8x128xf32>
    %c11 = arith.constant 11 : index
    %65 = memref.load %arg2[%c11] : memref<40xf32, #tpu.memory_space<smem>>
    %66 = vector.broadcast %65 : f32 to vector<8x128xf32>
    %67 = arith.mulf %13, %66 : vector<8x128xf32>
    %68 = arith.addf %64, %67 : vector<8x128xf32>
    %c2_11 = arith.constant 2 : index
    %69 = memref.load %arg3[%c2_11] : memref<10xf32, #tpu.memory_space<smem>>
    %70 = vector.broadcast %69 : f32 to vector<8x128xf32>
    %71 = arith.addf %68, %70 : vector<8x128xf32>
    %cst_12 = arith.constant 0.000000e+00 : f32
    %72 = vector.broadcast %cst_12 : f32 to vector<8x128xf32>
    %73 = arith.maximumf %71, %72 : vector<8x128xf32>
    %c12 = arith.constant 12 : index
    %74 = memref.load %arg2[%c12] : memref<40xf32, #tpu.memory_space<smem>>
    %75 = vector.broadcast %74 : f32 to vector<8x128xf32>
    %76 = arith.mulf %4, %75 : vector<8x128xf32>
    %c13 = arith.constant 13 : index
    %77 = memref.load %arg2[%c13] : memref<40xf32, #tpu.memory_space<smem>>
    %78 = vector.broadcast %77 : f32 to vector<8x128xf32>
    %79 = arith.mulf %7, %78 : vector<8x128xf32>
    %80 = arith.addf %76, %79 : vector<8x128xf32>
    %c14 = arith.constant 14 : index
    %81 = memref.load %arg2[%c14] : memref<40xf32, #tpu.memory_space<smem>>
    %82 = vector.broadcast %81 : f32 to vector<8x128xf32>
    %83 = arith.mulf %10, %82 : vector<8x128xf32>
    %84 = arith.addf %80, %83 : vector<8x128xf32>
    %c15 = arith.constant 15 : index
    %85 = memref.load %arg2[%c15] : memref<40xf32, #tpu.memory_space<smem>>
    %86 = vector.broadcast %85 : f32 to vector<8x128xf32>
    %87 = arith.mulf %13, %86 : vector<8x128xf32>
    %88 = arith.addf %84, %87 : vector<8x128xf32>
    %c3_13 = arith.constant 3 : index
    %89 = memref.load %arg3[%c3_13] : memref<10xf32, #tpu.memory_space<smem>>
    %90 = vector.broadcast %89 : f32 to vector<8x128xf32>
    %91 = arith.addf %88, %90 : vector<8x128xf32>
    %cst_14 = arith.constant 0.000000e+00 : f32
    %92 = vector.broadcast %cst_14 : f32 to vector<8x128xf32>
    %93 = arith.maximumf %91, %92 : vector<8x128xf32>
    %c16 = arith.constant 16 : index
    %94 = memref.load %arg2[%c16] : memref<40xf32, #tpu.memory_space<smem>>
    %95 = vector.broadcast %94 : f32 to vector<8x128xf32>
    %96 = arith.mulf %4, %95 : vector<8x128xf32>
    %c17 = arith.constant 17 : index
    %97 = memref.load %arg2[%c17] : memref<40xf32, #tpu.memory_space<smem>>
    %98 = vector.broadcast %97 : f32 to vector<8x128xf32>
    %99 = arith.mulf %7, %98 : vector<8x128xf32>
    %100 = arith.addf %96, %99 : vector<8x128xf32>
    %c18 = arith.constant 18 : index
    %101 = memref.load %arg2[%c18] : memref<40xf32, #tpu.memory_space<smem>>
    %102 = vector.broadcast %101 : f32 to vector<8x128xf32>
    %103 = arith.mulf %10, %102 : vector<8x128xf32>
    %104 = arith.addf %100, %103 : vector<8x128xf32>
    %c19 = arith.constant 19 : index
    %105 = memref.load %arg2[%c19] : memref<40xf32, #tpu.memory_space<smem>>
    %106 = vector.broadcast %105 : f32 to vector<8x128xf32>
    %107 = arith.mulf %13, %106 : vector<8x128xf32>
    %108 = arith.addf %104, %107 : vector<8x128xf32>
    %c4_15 = arith.constant 4 : index
    %109 = memref.load %arg3[%c4_15] : memref<10xf32, #tpu.memory_space<smem>>
    %110 = vector.broadcast %109 : f32 to vector<8x128xf32>
    %111 = arith.addf %108, %110 : vector<8x128xf32>
    %cst_16 = arith.constant 0.000000e+00 : f32
    %112 = vector.broadcast %cst_16 : f32 to vector<8x128xf32>
    %113 = arith.maximumf %111, %112 : vector<8x128xf32>
    %c20 = arith.constant 20 : index
    %114 = memref.load %arg2[%c20] : memref<40xf32, #tpu.memory_space<smem>>
    %115 = vector.broadcast %114 : f32 to vector<8x128xf32>
    %116 = arith.mulf %4, %115 : vector<8x128xf32>
    %c21 = arith.constant 21 : index
    %117 = memref.load %arg2[%c21] : memref<40xf32, #tpu.memory_space<smem>>
    %118 = vector.broadcast %117 : f32 to vector<8x128xf32>
    %119 = arith.mulf %7, %118 : vector<8x128xf32>
    %120 = arith.addf %116, %119 : vector<8x128xf32>
    %c22 = arith.constant 22 : index
    %121 = memref.load %arg2[%c22] : memref<40xf32, #tpu.memory_space<smem>>
    %122 = vector.broadcast %121 : f32 to vector<8x128xf32>
    %123 = arith.mulf %10, %122 : vector<8x128xf32>
    %124 = arith.addf %120, %123 : vector<8x128xf32>
    %c23 = arith.constant 23 : index
    %125 = memref.load %arg2[%c23] : memref<40xf32, #tpu.memory_space<smem>>
    %126 = vector.broadcast %125 : f32 to vector<8x128xf32>
    %127 = arith.mulf %13, %126 : vector<8x128xf32>
    %128 = arith.addf %124, %127 : vector<8x128xf32>
    %c5_17 = arith.constant 5 : index
    %129 = memref.load %arg3[%c5_17] : memref<10xf32, #tpu.memory_space<smem>>
    %130 = vector.broadcast %129 : f32 to vector<8x128xf32>
    %131 = arith.addf %128, %130 : vector<8x128xf32>
    %cst_18 = arith.constant 0.000000e+00 : f32
    %132 = vector.broadcast %cst_18 : f32 to vector<8x128xf32>
    %133 = arith.maximumf %131, %132 : vector<8x128xf32>
    %c24 = arith.constant 24 : index
    %134 = memref.load %arg2[%c24] : memref<40xf32, #tpu.memory_space<smem>>
    %135 = vector.broadcast %134 : f32 to vector<8x128xf32>
    %136 = arith.mulf %4, %135 : vector<8x128xf32>
    %c25 = arith.constant 25 : index
    %137 = memref.load %arg2[%c25] : memref<40xf32, #tpu.memory_space<smem>>
    %138 = vector.broadcast %137 : f32 to vector<8x128xf32>
    %139 = arith.mulf %7, %138 : vector<8x128xf32>
    %140 = arith.addf %136, %139 : vector<8x128xf32>
    %c26 = arith.constant 26 : index
    %141 = memref.load %arg2[%c26] : memref<40xf32, #tpu.memory_space<smem>>
    %142 = vector.broadcast %141 : f32 to vector<8x128xf32>
    %143 = arith.mulf %10, %142 : vector<8x128xf32>
    %144 = arith.addf %140, %143 : vector<8x128xf32>
    %c27 = arith.constant 27 : index
    %145 = memref.load %arg2[%c27] : memref<40xf32, #tpu.memory_space<smem>>
    %146 = vector.broadcast %145 : f32 to vector<8x128xf32>
    %147 = arith.mulf %13, %146 : vector<8x128xf32>
    %148 = arith.addf %144, %147 : vector<8x128xf32>
    %c6_19 = arith.constant 6 : index
    %149 = memref.load %arg3[%c6_19] : memref<10xf32, #tpu.memory_space<smem>>
    %150 = vector.broadcast %149 : f32 to vector<8x128xf32>
    %151 = arith.addf %148, %150 : vector<8x128xf32>
    %cst_20 = arith.constant 0.000000e+00 : f32
    %152 = vector.broadcast %cst_20 : f32 to vector<8x128xf32>
    %153 = arith.maximumf %151, %152 : vector<8x128xf32>
    %c28 = arith.constant 28 : index
    %154 = memref.load %arg2[%c28] : memref<40xf32, #tpu.memory_space<smem>>
    %155 = vector.broadcast %154 : f32 to vector<8x128xf32>
    %156 = arith.mulf %4, %155 : vector<8x128xf32>
    %c29 = arith.constant 29 : index
    %157 = memref.load %arg2[%c29] : memref<40xf32, #tpu.memory_space<smem>>
    %158 = vector.broadcast %157 : f32 to vector<8x128xf32>
    %159 = arith.mulf %7, %158 : vector<8x128xf32>
    %160 = arith.addf %156, %159 : vector<8x128xf32>
    %c30 = arith.constant 30 : index
    %161 = memref.load %arg2[%c30] : memref<40xf32, #tpu.memory_space<smem>>
    %162 = vector.broadcast %161 : f32 to vector<8x128xf32>
    %163 = arith.mulf %10, %162 : vector<8x128xf32>
    %164 = arith.addf %160, %163 : vector<8x128xf32>
    %c31 = arith.constant 31 : index
    %165 = memref.load %arg2[%c31] : memref<40xf32, #tpu.memory_space<smem>>
    %166 = vector.broadcast %165 : f32 to vector<8x128xf32>
    %167 = arith.mulf %13, %166 : vector<8x128xf32>
    %168 = arith.addf %164, %167 : vector<8x128xf32>
    %c7_21 = arith.constant 7 : index
    %169 = memref.load %arg3[%c7_21] : memref<10xf32, #tpu.memory_space<smem>>
    %170 = vector.broadcast %169 : f32 to vector<8x128xf32>
    %171 = arith.addf %168, %170 : vector<8x128xf32>
    %cst_22 = arith.constant 0.000000e+00 : f32
    %172 = vector.broadcast %cst_22 : f32 to vector<8x128xf32>
    %173 = arith.maximumf %171, %172 : vector<8x128xf32>
    %c32 = arith.constant 32 : index
    %174 = memref.load %arg2[%c32] : memref<40xf32, #tpu.memory_space<smem>>
    %175 = vector.broadcast %174 : f32 to vector<8x128xf32>
    %176 = arith.mulf %4, %175 : vector<8x128xf32>
    %c33 = arith.constant 33 : index
    %177 = memref.load %arg2[%c33] : memref<40xf32, #tpu.memory_space<smem>>
    %178 = vector.broadcast %177 : f32 to vector<8x128xf32>
    %179 = arith.mulf %7, %178 : vector<8x128xf32>
    %180 = arith.addf %176, %179 : vector<8x128xf32>
    %c34 = arith.constant 34 : index
    %181 = memref.load %arg2[%c34] : memref<40xf32, #tpu.memory_space<smem>>
    %182 = vector.broadcast %181 : f32 to vector<8x128xf32>
    %183 = arith.mulf %10, %182 : vector<8x128xf32>
    %184 = arith.addf %180, %183 : vector<8x128xf32>
    %c35 = arith.constant 35 : index
    %185 = memref.load %arg2[%c35] : memref<40xf32, #tpu.memory_space<smem>>
    %186 = vector.broadcast %185 : f32 to vector<8x128xf32>
    %187 = arith.mulf %13, %186 : vector<8x128xf32>
    %188 = arith.addf %184, %187 : vector<8x128xf32>
    %c8_23 = arith.constant 8 : index
    %189 = memref.load %arg3[%c8_23] : memref<10xf32, #tpu.memory_space<smem>>
    %190 = vector.broadcast %189 : f32 to vector<8x128xf32>
    %191 = arith.addf %188, %190 : vector<8x128xf32>
    %cst_24 = arith.constant 0.000000e+00 : f32
    %192 = vector.broadcast %cst_24 : f32 to vector<8x128xf32>
    %193 = arith.maximumf %191, %192 : vector<8x128xf32>
    %c36 = arith.constant 36 : index
    %194 = memref.load %arg2[%c36] : memref<40xf32, #tpu.memory_space<smem>>
    %195 = vector.broadcast %194 : f32 to vector<8x128xf32>
    %196 = arith.mulf %4, %195 : vector<8x128xf32>
    %c37 = arith.constant 37 : index
    %197 = memref.load %arg2[%c37] : memref<40xf32, #tpu.memory_space<smem>>
    %198 = vector.broadcast %197 : f32 to vector<8x128xf32>
    %199 = arith.mulf %7, %198 : vector<8x128xf32>
    %200 = arith.addf %196, %199 : vector<8x128xf32>
    %c38 = arith.constant 38 : index
    %201 = memref.load %arg2[%c38] : memref<40xf32, #tpu.memory_space<smem>>
    %202 = vector.broadcast %201 : f32 to vector<8x128xf32>
    %203 = arith.mulf %10, %202 : vector<8x128xf32>
    %204 = arith.addf %200, %203 : vector<8x128xf32>
    %c39 = arith.constant 39 : index
    %205 = memref.load %arg2[%c39] : memref<40xf32, #tpu.memory_space<smem>>
    %206 = vector.broadcast %205 : f32 to vector<8x128xf32>
    %207 = arith.mulf %13, %206 : vector<8x128xf32>
    %208 = arith.addf %204, %207 : vector<8x128xf32>
    %c9_25 = arith.constant 9 : index
    %209 = memref.load %arg3[%c9_25] : memref<10xf32, #tpu.memory_space<smem>>
    %210 = vector.broadcast %209 : f32 to vector<8x128xf32>
    %211 = arith.addf %208, %210 : vector<8x128xf32>
    %cst_26 = arith.constant 0.000000e+00 : f32
    %212 = vector.broadcast %cst_26 : f32 to vector<8x128xf32>
    %213 = arith.maximumf %211, %212 : vector<8x128xf32>
    %c0_27 = arith.constant 0 : index
    %214 = memref.load %arg4[%c0_27] : memref<160xf32, #tpu.memory_space<smem>>
    %215 = vector.broadcast %214 : f32 to vector<8x128xf32>
    %216 = arith.mulf %33, %215 : vector<8x128xf32>
    %c1_28 = arith.constant 1 : index
    %217 = memref.load %arg4[%c1_28] : memref<160xf32, #tpu.memory_space<smem>>
    %218 = vector.broadcast %217 : f32 to vector<8x128xf32>
    %219 = arith.mulf %53, %218 : vector<8x128xf32>
    %220 = arith.addf %216, %219 : vector<8x128xf32>
    %c2_29 = arith.constant 2 : index
    %221 = memref.load %arg4[%c2_29] : memref<160xf32, #tpu.memory_space<smem>>
    %222 = vector.broadcast %221 : f32 to vector<8x128xf32>
    %223 = arith.mulf %73, %222 : vector<8x128xf32>
    %224 = arith.addf %220, %223 : vector<8x128xf32>
    %c3_30 = arith.constant 3 : index
    %225 = memref.load %arg4[%c3_30] : memref<160xf32, #tpu.memory_space<smem>>
    %226 = vector.broadcast %225 : f32 to vector<8x128xf32>
    %227 = arith.mulf %93, %226 : vector<8x128xf32>
    %228 = arith.addf %224, %227 : vector<8x128xf32>
    %c4_31 = arith.constant 4 : index
    %229 = memref.load %arg4[%c4_31] : memref<160xf32, #tpu.memory_space<smem>>
    %230 = vector.broadcast %229 : f32 to vector<8x128xf32>
    %231 = arith.mulf %113, %230 : vector<8x128xf32>
    %232 = arith.addf %228, %231 : vector<8x128xf32>
    %c5_32 = arith.constant 5 : index
    %233 = memref.load %arg4[%c5_32] : memref<160xf32, #tpu.memory_space<smem>>
    %234 = vector.broadcast %233 : f32 to vector<8x128xf32>
    %235 = arith.mulf %133, %234 : vector<8x128xf32>
    %236 = arith.addf %232, %235 : vector<8x128xf32>
    %c6_33 = arith.constant 6 : index
    %237 = memref.load %arg4[%c6_33] : memref<160xf32, #tpu.memory_space<smem>>
    %238 = vector.broadcast %237 : f32 to vector<8x128xf32>
    %239 = arith.mulf %153, %238 : vector<8x128xf32>
    %240 = arith.addf %236, %239 : vector<8x128xf32>
    %c7_34 = arith.constant 7 : index
    %241 = memref.load %arg4[%c7_34] : memref<160xf32, #tpu.memory_space<smem>>
    %242 = vector.broadcast %241 : f32 to vector<8x128xf32>
    %243 = arith.mulf %173, %242 : vector<8x128xf32>
    %244 = arith.addf %240, %243 : vector<8x128xf32>
    %c8_35 = arith.constant 8 : index
    %245 = memref.load %arg4[%c8_35] : memref<160xf32, #tpu.memory_space<smem>>
    %246 = vector.broadcast %245 : f32 to vector<8x128xf32>
    %247 = arith.mulf %193, %246 : vector<8x128xf32>
    %248 = arith.addf %244, %247 : vector<8x128xf32>
    %c9_36 = arith.constant 9 : index
    %249 = memref.load %arg4[%c9_36] : memref<160xf32, #tpu.memory_space<smem>>
    %250 = vector.broadcast %249 : f32 to vector<8x128xf32>
    %251 = arith.mulf %213, %250 : vector<8x128xf32>
    %252 = arith.addf %248, %251 : vector<8x128xf32>
    %c0_37 = arith.constant 0 : index
    %253 = memref.load %arg5[%c0_37] : memref<16xf32, #tpu.memory_space<smem>>
    %254 = vector.broadcast %253 : f32 to vector<8x128xf32>
    %255 = arith.addf %252, %254 : vector<8x128xf32>
    %cst_38 = arith.constant 0.000000e+00 : f32
    %256 = vector.broadcast %cst_38 : f32 to vector<8x128xf32>
    %257 = arith.maximumf %255, %256 : vector<8x128xf32>
    %c10_39 = arith.constant 10 : index
    %258 = memref.load %arg4[%c10_39] : memref<160xf32, #tpu.memory_space<smem>>
    %259 = vector.broadcast %258 : f32 to vector<8x128xf32>
    %260 = arith.mulf %33, %259 : vector<8x128xf32>
    %c11_40 = arith.constant 11 : index
    %261 = memref.load %arg4[%c11_40] : memref<160xf32, #tpu.memory_space<smem>>
    %262 = vector.broadcast %261 : f32 to vector<8x128xf32>
    %263 = arith.mulf %53, %262 : vector<8x128xf32>
    %264 = arith.addf %260, %263 : vector<8x128xf32>
    %c12_41 = arith.constant 12 : index
    %265 = memref.load %arg4[%c12_41] : memref<160xf32, #tpu.memory_space<smem>>
    %266 = vector.broadcast %265 : f32 to vector<8x128xf32>
    %267 = arith.mulf %73, %266 : vector<8x128xf32>
    %268 = arith.addf %264, %267 : vector<8x128xf32>
    %c13_42 = arith.constant 13 : index
    %269 = memref.load %arg4[%c13_42] : memref<160xf32, #tpu.memory_space<smem>>
    %270 = vector.broadcast %269 : f32 to vector<8x128xf32>
    %271 = arith.mulf %93, %270 : vector<8x128xf32>
    %272 = arith.addf %268, %271 : vector<8x128xf32>
    %c14_43 = arith.constant 14 : index
    %273 = memref.load %arg4[%c14_43] : memref<160xf32, #tpu.memory_space<smem>>
    %274 = vector.broadcast %273 : f32 to vector<8x128xf32>
    %275 = arith.mulf %113, %274 : vector<8x128xf32>
    %276 = arith.addf %272, %275 : vector<8x128xf32>
    %c15_44 = arith.constant 15 : index
    %277 = memref.load %arg4[%c15_44] : memref<160xf32, #tpu.memory_space<smem>>
    %278 = vector.broadcast %277 : f32 to vector<8x128xf32>
    %279 = arith.mulf %133, %278 : vector<8x128xf32>
    %280 = arith.addf %276, %279 : vector<8x128xf32>
    %c16_45 = arith.constant 16 : index
    %281 = memref.load %arg4[%c16_45] : memref<160xf32, #tpu.memory_space<smem>>
    %282 = vector.broadcast %281 : f32 to vector<8x128xf32>
    %283 = arith.mulf %153, %282 : vector<8x128xf32>
    %284 = arith.addf %280, %283 : vector<8x128xf32>
    %c17_46 = arith.constant 17 : index
    %285 = memref.load %arg4[%c17_46] : memref<160xf32, #tpu.memory_space<smem>>
    %286 = vector.broadcast %285 : f32 to vector<8x128xf32>
    %287 = arith.mulf %173, %286 : vector<8x128xf32>
    %288 = arith.addf %284, %287 : vector<8x128xf32>
    %c18_47 = arith.constant 18 : index
    %289 = memref.load %arg4[%c18_47] : memref<160xf32, #tpu.memory_space<smem>>
    %290 = vector.broadcast %289 : f32 to vector<8x128xf32>
    %291 = arith.mulf %193, %290 : vector<8x128xf32>
    %292 = arith.addf %288, %291 : vector<8x128xf32>
    %c19_48 = arith.constant 19 : index
    %293 = memref.load %arg4[%c19_48] : memref<160xf32, #tpu.memory_space<smem>>
    %294 = vector.broadcast %293 : f32 to vector<8x128xf32>
    %295 = arith.mulf %213, %294 : vector<8x128xf32>
    %296 = arith.addf %292, %295 : vector<8x128xf32>
    %c1_49 = arith.constant 1 : index
    %297 = memref.load %arg5[%c1_49] : memref<16xf32, #tpu.memory_space<smem>>
    %298 = vector.broadcast %297 : f32 to vector<8x128xf32>
    %299 = arith.addf %296, %298 : vector<8x128xf32>
    %cst_50 = arith.constant 0.000000e+00 : f32
    %300 = vector.broadcast %cst_50 : f32 to vector<8x128xf32>
    %301 = arith.maximumf %299, %300 : vector<8x128xf32>
    %c20_51 = arith.constant 20 : index
    %302 = memref.load %arg4[%c20_51] : memref<160xf32, #tpu.memory_space<smem>>
    %303 = vector.broadcast %302 : f32 to vector<8x128xf32>
    %304 = arith.mulf %33, %303 : vector<8x128xf32>
    %c21_52 = arith.constant 21 : index
    %305 = memref.load %arg4[%c21_52] : memref<160xf32, #tpu.memory_space<smem>>
    %306 = vector.broadcast %305 : f32 to vector<8x128xf32>
    %307 = arith.mulf %53, %306 : vector<8x128xf32>
    %308 = arith.addf %304, %307 : vector<8x128xf32>
    %c22_53 = arith.constant 22 : index
    %309 = memref.load %arg4[%c22_53] : memref<160xf32, #tpu.memory_space<smem>>
    %310 = vector.broadcast %309 : f32 to vector<8x128xf32>
    %311 = arith.mulf %73, %310 : vector<8x128xf32>
    %312 = arith.addf %308, %311 : vector<8x128xf32>
    %c23_54 = arith.constant 23 : index
    %313 = memref.load %arg4[%c23_54] : memref<160xf32, #tpu.memory_space<smem>>
    %314 = vector.broadcast %313 : f32 to vector<8x128xf32>
    %315 = arith.mulf %93, %314 : vector<8x128xf32>
    %316 = arith.addf %312, %315 : vector<8x128xf32>
    %c24_55 = arith.constant 24 : index
    %317 = memref.load %arg4[%c24_55] : memref<160xf32, #tpu.memory_space<smem>>
    %318 = vector.broadcast %317 : f32 to vector<8x128xf32>
    %319 = arith.mulf %113, %318 : vector<8x128xf32>
    %320 = arith.addf %316, %319 : vector<8x128xf32>
    %c25_56 = arith.constant 25 : index
    %321 = memref.load %arg4[%c25_56] : memref<160xf32, #tpu.memory_space<smem>>
    %322 = vector.broadcast %321 : f32 to vector<8x128xf32>
    %323 = arith.mulf %133, %322 : vector<8x128xf32>
    %324 = arith.addf %320, %323 : vector<8x128xf32>
    %c26_57 = arith.constant 26 : index
    %325 = memref.load %arg4[%c26_57] : memref<160xf32, #tpu.memory_space<smem>>
    %326 = vector.broadcast %325 : f32 to vector<8x128xf32>
    %327 = arith.mulf %153, %326 : vector<8x128xf32>
    %328 = arith.addf %324, %327 : vector<8x128xf32>
    %c27_58 = arith.constant 27 : index
    %329 = memref.load %arg4[%c27_58] : memref<160xf32, #tpu.memory_space<smem>>
    %330 = vector.broadcast %329 : f32 to vector<8x128xf32>
    %331 = arith.mulf %173, %330 : vector<8x128xf32>
    %332 = arith.addf %328, %331 : vector<8x128xf32>
    %c28_59 = arith.constant 28 : index
    %333 = memref.load %arg4[%c28_59] : memref<160xf32, #tpu.memory_space<smem>>
    %334 = vector.broadcast %333 : f32 to vector<8x128xf32>
    %335 = arith.mulf %193, %334 : vector<8x128xf32>
    %336 = arith.addf %332, %335 : vector<8x128xf32>
    %c29_60 = arith.constant 29 : index
    %337 = memref.load %arg4[%c29_60] : memref<160xf32, #tpu.memory_space<smem>>
    %338 = vector.broadcast %337 : f32 to vector<8x128xf32>
    %339 = arith.mulf %213, %338 : vector<8x128xf32>
    %340 = arith.addf %336, %339 : vector<8x128xf32>
    %c2_61 = arith.constant 2 : index
    %341 = memref.load %arg5[%c2_61] : memref<16xf32, #tpu.memory_space<smem>>
    %342 = vector.broadcast %341 : f32 to vector<8x128xf32>
    %343 = arith.addf %340, %342 : vector<8x128xf32>
    %cst_62 = arith.constant 0.000000e+00 : f32
    %344 = vector.broadcast %cst_62 : f32 to vector<8x128xf32>
    %345 = arith.maximumf %343, %344 : vector<8x128xf32>
    %c30_63 = arith.constant 30 : index
    %346 = memref.load %arg4[%c30_63] : memref<160xf32, #tpu.memory_space<smem>>
    %347 = vector.broadcast %346 : f32 to vector<8x128xf32>
    %348 = arith.mulf %33, %347 : vector<8x128xf32>
    %c31_64 = arith.constant 31 : index
    %349 = memref.load %arg4[%c31_64] : memref<160xf32, #tpu.memory_space<smem>>
    %350 = vector.broadcast %349 : f32 to vector<8x128xf32>
    %351 = arith.mulf %53, %350 : vector<8x128xf32>
    %352 = arith.addf %348, %351 : vector<8x128xf32>
    %c32_65 = arith.constant 32 : index
    %353 = memref.load %arg4[%c32_65] : memref<160xf32, #tpu.memory_space<smem>>
    %354 = vector.broadcast %353 : f32 to vector<8x128xf32>
    %355 = arith.mulf %73, %354 : vector<8x128xf32>
    %356 = arith.addf %352, %355 : vector<8x128xf32>
    %c33_66 = arith.constant 33 : index
    %357 = memref.load %arg4[%c33_66] : memref<160xf32, #tpu.memory_space<smem>>
    %358 = vector.broadcast %357 : f32 to vector<8x128xf32>
    %359 = arith.mulf %93, %358 : vector<8x128xf32>
    %360 = arith.addf %356, %359 : vector<8x128xf32>
    %c34_67 = arith.constant 34 : index
    %361 = memref.load %arg4[%c34_67] : memref<160xf32, #tpu.memory_space<smem>>
    %362 = vector.broadcast %361 : f32 to vector<8x128xf32>
    %363 = arith.mulf %113, %362 : vector<8x128xf32>
    %364 = arith.addf %360, %363 : vector<8x128xf32>
    %c35_68 = arith.constant 35 : index
    %365 = memref.load %arg4[%c35_68] : memref<160xf32, #tpu.memory_space<smem>>
    %366 = vector.broadcast %365 : f32 to vector<8x128xf32>
    %367 = arith.mulf %133, %366 : vector<8x128xf32>
    %368 = arith.addf %364, %367 : vector<8x128xf32>
    %c36_69 = arith.constant 36 : index
    %369 = memref.load %arg4[%c36_69] : memref<160xf32, #tpu.memory_space<smem>>
    %370 = vector.broadcast %369 : f32 to vector<8x128xf32>
    %371 = arith.mulf %153, %370 : vector<8x128xf32>
    %372 = arith.addf %368, %371 : vector<8x128xf32>
    %c37_70 = arith.constant 37 : index
    %373 = memref.load %arg4[%c37_70] : memref<160xf32, #tpu.memory_space<smem>>
    %374 = vector.broadcast %373 : f32 to vector<8x128xf32>
    %375 = arith.mulf %173, %374 : vector<8x128xf32>
    %376 = arith.addf %372, %375 : vector<8x128xf32>
    %c38_71 = arith.constant 38 : index
    %377 = memref.load %arg4[%c38_71] : memref<160xf32, #tpu.memory_space<smem>>
    %378 = vector.broadcast %377 : f32 to vector<8x128xf32>
    %379 = arith.mulf %193, %378 : vector<8x128xf32>
    %380 = arith.addf %376, %379 : vector<8x128xf32>
    %c39_72 = arith.constant 39 : index
    %381 = memref.load %arg4[%c39_72] : memref<160xf32, #tpu.memory_space<smem>>
    %382 = vector.broadcast %381 : f32 to vector<8x128xf32>
    %383 = arith.mulf %213, %382 : vector<8x128xf32>
    %384 = arith.addf %380, %383 : vector<8x128xf32>
    %c3_73 = arith.constant 3 : index
    %385 = memref.load %arg5[%c3_73] : memref<16xf32, #tpu.memory_space<smem>>
    %386 = vector.broadcast %385 : f32 to vector<8x128xf32>
    %387 = arith.addf %384, %386 : vector<8x128xf32>
    %cst_74 = arith.constant 0.000000e+00 : f32
    %388 = vector.broadcast %cst_74 : f32 to vector<8x128xf32>
    %389 = arith.maximumf %387, %388 : vector<8x128xf32>
    %c40 = arith.constant 40 : index
    %390 = memref.load %arg4[%c40] : memref<160xf32, #tpu.memory_space<smem>>
    %391 = vector.broadcast %390 : f32 to vector<8x128xf32>
    %392 = arith.mulf %33, %391 : vector<8x128xf32>
    %c41 = arith.constant 41 : index
    %393 = memref.load %arg4[%c41] : memref<160xf32, #tpu.memory_space<smem>>
    %394 = vector.broadcast %393 : f32 to vector<8x128xf32>
    %395 = arith.mulf %53, %394 : vector<8x128xf32>
    %396 = arith.addf %392, %395 : vector<8x128xf32>
    %c42 = arith.constant 42 : index
    %397 = memref.load %arg4[%c42] : memref<160xf32, #tpu.memory_space<smem>>
    %398 = vector.broadcast %397 : f32 to vector<8x128xf32>
    %399 = arith.mulf %73, %398 : vector<8x128xf32>
    %400 = arith.addf %396, %399 : vector<8x128xf32>
    %c43 = arith.constant 43 : index
    %401 = memref.load %arg4[%c43] : memref<160xf32, #tpu.memory_space<smem>>
    %402 = vector.broadcast %401 : f32 to vector<8x128xf32>
    %403 = arith.mulf %93, %402 : vector<8x128xf32>
    %404 = arith.addf %400, %403 : vector<8x128xf32>
    %c44 = arith.constant 44 : index
    %405 = memref.load %arg4[%c44] : memref<160xf32, #tpu.memory_space<smem>>
    %406 = vector.broadcast %405 : f32 to vector<8x128xf32>
    %407 = arith.mulf %113, %406 : vector<8x128xf32>
    %408 = arith.addf %404, %407 : vector<8x128xf32>
    %c45 = arith.constant 45 : index
    %409 = memref.load %arg4[%c45] : memref<160xf32, #tpu.memory_space<smem>>
    %410 = vector.broadcast %409 : f32 to vector<8x128xf32>
    %411 = arith.mulf %133, %410 : vector<8x128xf32>
    %412 = arith.addf %408, %411 : vector<8x128xf32>
    %c46 = arith.constant 46 : index
    %413 = memref.load %arg4[%c46] : memref<160xf32, #tpu.memory_space<smem>>
    %414 = vector.broadcast %413 : f32 to vector<8x128xf32>
    %415 = arith.mulf %153, %414 : vector<8x128xf32>
    %416 = arith.addf %412, %415 : vector<8x128xf32>
    %c47 = arith.constant 47 : index
    %417 = memref.load %arg4[%c47] : memref<160xf32, #tpu.memory_space<smem>>
    %418 = vector.broadcast %417 : f32 to vector<8x128xf32>
    %419 = arith.mulf %173, %418 : vector<8x128xf32>
    %420 = arith.addf %416, %419 : vector<8x128xf32>
    %c48 = arith.constant 48 : index
    %421 = memref.load %arg4[%c48] : memref<160xf32, #tpu.memory_space<smem>>
    %422 = vector.broadcast %421 : f32 to vector<8x128xf32>
    %423 = arith.mulf %193, %422 : vector<8x128xf32>
    %424 = arith.addf %420, %423 : vector<8x128xf32>
    %c49 = arith.constant 49 : index
    %425 = memref.load %arg4[%c49] : memref<160xf32, #tpu.memory_space<smem>>
    %426 = vector.broadcast %425 : f32 to vector<8x128xf32>
    %427 = arith.mulf %213, %426 : vector<8x128xf32>
    %428 = arith.addf %424, %427 : vector<8x128xf32>
    %c4_75 = arith.constant 4 : index
    %429 = memref.load %arg5[%c4_75] : memref<16xf32, #tpu.memory_space<smem>>
    %430 = vector.broadcast %429 : f32 to vector<8x128xf32>
    %431 = arith.addf %428, %430 : vector<8x128xf32>
    %cst_76 = arith.constant 0.000000e+00 : f32
    %432 = vector.broadcast %cst_76 : f32 to vector<8x128xf32>
    %433 = arith.maximumf %431, %432 : vector<8x128xf32>
    %c50 = arith.constant 50 : index
    %434 = memref.load %arg4[%c50] : memref<160xf32, #tpu.memory_space<smem>>
    %435 = vector.broadcast %434 : f32 to vector<8x128xf32>
    %436 = arith.mulf %33, %435 : vector<8x128xf32>
    %c51 = arith.constant 51 : index
    %437 = memref.load %arg4[%c51] : memref<160xf32, #tpu.memory_space<smem>>
    %438 = vector.broadcast %437 : f32 to vector<8x128xf32>
    %439 = arith.mulf %53, %438 : vector<8x128xf32>
    %440 = arith.addf %436, %439 : vector<8x128xf32>
    %c52 = arith.constant 52 : index
    %441 = memref.load %arg4[%c52] : memref<160xf32, #tpu.memory_space<smem>>
    %442 = vector.broadcast %441 : f32 to vector<8x128xf32>
    %443 = arith.mulf %73, %442 : vector<8x128xf32>
    %444 = arith.addf %440, %443 : vector<8x128xf32>
    %c53 = arith.constant 53 : index
    %445 = memref.load %arg4[%c53] : memref<160xf32, #tpu.memory_space<smem>>
    %446 = vector.broadcast %445 : f32 to vector<8x128xf32>
    %447 = arith.mulf %93, %446 : vector<8x128xf32>
    %448 = arith.addf %444, %447 : vector<8x128xf32>
    %c54 = arith.constant 54 : index
    %449 = memref.load %arg4[%c54] : memref<160xf32, #tpu.memory_space<smem>>
    %450 = vector.broadcast %449 : f32 to vector<8x128xf32>
    %451 = arith.mulf %113, %450 : vector<8x128xf32>
    %452 = arith.addf %448, %451 : vector<8x128xf32>
    %c55 = arith.constant 55 : index
    %453 = memref.load %arg4[%c55] : memref<160xf32, #tpu.memory_space<smem>>
    %454 = vector.broadcast %453 : f32 to vector<8x128xf32>
    %455 = arith.mulf %133, %454 : vector<8x128xf32>
    %456 = arith.addf %452, %455 : vector<8x128xf32>
    %c56 = arith.constant 56 : index
    %457 = memref.load %arg4[%c56] : memref<160xf32, #tpu.memory_space<smem>>
    %458 = vector.broadcast %457 : f32 to vector<8x128xf32>
    %459 = arith.mulf %153, %458 : vector<8x128xf32>
    %460 = arith.addf %456, %459 : vector<8x128xf32>
    %c57 = arith.constant 57 : index
    %461 = memref.load %arg4[%c57] : memref<160xf32, #tpu.memory_space<smem>>
    %462 = vector.broadcast %461 : f32 to vector<8x128xf32>
    %463 = arith.mulf %173, %462 : vector<8x128xf32>
    %464 = arith.addf %460, %463 : vector<8x128xf32>
    %c58 = arith.constant 58 : index
    %465 = memref.load %arg4[%c58] : memref<160xf32, #tpu.memory_space<smem>>
    %466 = vector.broadcast %465 : f32 to vector<8x128xf32>
    %467 = arith.mulf %193, %466 : vector<8x128xf32>
    %468 = arith.addf %464, %467 : vector<8x128xf32>
    %c59 = arith.constant 59 : index
    %469 = memref.load %arg4[%c59] : memref<160xf32, #tpu.memory_space<smem>>
    %470 = vector.broadcast %469 : f32 to vector<8x128xf32>
    %471 = arith.mulf %213, %470 : vector<8x128xf32>
    %472 = arith.addf %468, %471 : vector<8x128xf32>
    %c5_77 = arith.constant 5 : index
    %473 = memref.load %arg5[%c5_77] : memref<16xf32, #tpu.memory_space<smem>>
    %474 = vector.broadcast %473 : f32 to vector<8x128xf32>
    %475 = arith.addf %472, %474 : vector<8x128xf32>
    %cst_78 = arith.constant 0.000000e+00 : f32
    %476 = vector.broadcast %cst_78 : f32 to vector<8x128xf32>
    %477 = arith.maximumf %475, %476 : vector<8x128xf32>
    %c60 = arith.constant 60 : index
    %478 = memref.load %arg4[%c60] : memref<160xf32, #tpu.memory_space<smem>>
    %479 = vector.broadcast %478 : f32 to vector<8x128xf32>
    %480 = arith.mulf %33, %479 : vector<8x128xf32>
    %c61 = arith.constant 61 : index
    %481 = memref.load %arg4[%c61] : memref<160xf32, #tpu.memory_space<smem>>
    %482 = vector.broadcast %481 : f32 to vector<8x128xf32>
    %483 = arith.mulf %53, %482 : vector<8x128xf32>
    %484 = arith.addf %480, %483 : vector<8x128xf32>
    %c62 = arith.constant 62 : index
    %485 = memref.load %arg4[%c62] : memref<160xf32, #tpu.memory_space<smem>>
    %486 = vector.broadcast %485 : f32 to vector<8x128xf32>
    %487 = arith.mulf %73, %486 : vector<8x128xf32>
    %488 = arith.addf %484, %487 : vector<8x128xf32>
    %c63 = arith.constant 63 : index
    %489 = memref.load %arg4[%c63] : memref<160xf32, #tpu.memory_space<smem>>
    %490 = vector.broadcast %489 : f32 to vector<8x128xf32>
    %491 = arith.mulf %93, %490 : vector<8x128xf32>
    %492 = arith.addf %488, %491 : vector<8x128xf32>
    %c64 = arith.constant 64 : index
    %493 = memref.load %arg4[%c64] : memref<160xf32, #tpu.memory_space<smem>>
    %494 = vector.broadcast %493 : f32 to vector<8x128xf32>
    %495 = arith.mulf %113, %494 : vector<8x128xf32>
    %496 = arith.addf %492, %495 : vector<8x128xf32>
    %c65 = arith.constant 65 : index
    %497 = memref.load %arg4[%c65] : memref<160xf32, #tpu.memory_space<smem>>
    %498 = vector.broadcast %497 : f32 to vector<8x128xf32>
    %499 = arith.mulf %133, %498 : vector<8x128xf32>
    %500 = arith.addf %496, %499 : vector<8x128xf32>
    %c66 = arith.constant 66 : index
    %501 = memref.load %arg4[%c66] : memref<160xf32, #tpu.memory_space<smem>>
    %502 = vector.broadcast %501 : f32 to vector<8x128xf32>
    %503 = arith.mulf %153, %502 : vector<8x128xf32>
    %504 = arith.addf %500, %503 : vector<8x128xf32>
    %c67 = arith.constant 67 : index
    %505 = memref.load %arg4[%c67] : memref<160xf32, #tpu.memory_space<smem>>
    %506 = vector.broadcast %505 : f32 to vector<8x128xf32>
    %507 = arith.mulf %173, %506 : vector<8x128xf32>
    %508 = arith.addf %504, %507 : vector<8x128xf32>
    %c68 = arith.constant 68 : index
    %509 = memref.load %arg4[%c68] : memref<160xf32, #tpu.memory_space<smem>>
    %510 = vector.broadcast %509 : f32 to vector<8x128xf32>
    %511 = arith.mulf %193, %510 : vector<8x128xf32>
    %512 = arith.addf %508, %511 : vector<8x128xf32>
    %c69 = arith.constant 69 : index
    %513 = memref.load %arg4[%c69] : memref<160xf32, #tpu.memory_space<smem>>
    %514 = vector.broadcast %513 : f32 to vector<8x128xf32>
    %515 = arith.mulf %213, %514 : vector<8x128xf32>
    %516 = arith.addf %512, %515 : vector<8x128xf32>
    %c6_79 = arith.constant 6 : index
    %517 = memref.load %arg5[%c6_79] : memref<16xf32, #tpu.memory_space<smem>>
    %518 = vector.broadcast %517 : f32 to vector<8x128xf32>
    %519 = arith.addf %516, %518 : vector<8x128xf32>
    %cst_80 = arith.constant 0.000000e+00 : f32
    %520 = vector.broadcast %cst_80 : f32 to vector<8x128xf32>
    %521 = arith.maximumf %519, %520 : vector<8x128xf32>
    %c70 = arith.constant 70 : index
    %522 = memref.load %arg4[%c70] : memref<160xf32, #tpu.memory_space<smem>>
    %523 = vector.broadcast %522 : f32 to vector<8x128xf32>
    %524 = arith.mulf %33, %523 : vector<8x128xf32>
    %c71 = arith.constant 71 : index
    %525 = memref.load %arg4[%c71] : memref<160xf32, #tpu.memory_space<smem>>
    %526 = vector.broadcast %525 : f32 to vector<8x128xf32>
    %527 = arith.mulf %53, %526 : vector<8x128xf32>
    %528 = arith.addf %524, %527 : vector<8x128xf32>
    %c72 = arith.constant 72 : index
    %529 = memref.load %arg4[%c72] : memref<160xf32, #tpu.memory_space<smem>>
    %530 = vector.broadcast %529 : f32 to vector<8x128xf32>
    %531 = arith.mulf %73, %530 : vector<8x128xf32>
    %532 = arith.addf %528, %531 : vector<8x128xf32>
    %c73 = arith.constant 73 : index
    %533 = memref.load %arg4[%c73] : memref<160xf32, #tpu.memory_space<smem>>
    %534 = vector.broadcast %533 : f32 to vector<8x128xf32>
    %535 = arith.mulf %93, %534 : vector<8x128xf32>
    %536 = arith.addf %532, %535 : vector<8x128xf32>
    %c74 = arith.constant 74 : index
    %537 = memref.load %arg4[%c74] : memref<160xf32, #tpu.memory_space<smem>>
    %538 = vector.broadcast %537 : f32 to vector<8x128xf32>
    %539 = arith.mulf %113, %538 : vector<8x128xf32>
    %540 = arith.addf %536, %539 : vector<8x128xf32>
    %c75 = arith.constant 75 : index
    %541 = memref.load %arg4[%c75] : memref<160xf32, #tpu.memory_space<smem>>
    %542 = vector.broadcast %541 : f32 to vector<8x128xf32>
    %543 = arith.mulf %133, %542 : vector<8x128xf32>
    %544 = arith.addf %540, %543 : vector<8x128xf32>
    %c76 = arith.constant 76 : index
    %545 = memref.load %arg4[%c76] : memref<160xf32, #tpu.memory_space<smem>>
    %546 = vector.broadcast %545 : f32 to vector<8x128xf32>
    %547 = arith.mulf %153, %546 : vector<8x128xf32>
    %548 = arith.addf %544, %547 : vector<8x128xf32>
    %c77 = arith.constant 77 : index
    %549 = memref.load %arg4[%c77] : memref<160xf32, #tpu.memory_space<smem>>
    %550 = vector.broadcast %549 : f32 to vector<8x128xf32>
    %551 = arith.mulf %173, %550 : vector<8x128xf32>
    %552 = arith.addf %548, %551 : vector<8x128xf32>
    %c78 = arith.constant 78 : index
    %553 = memref.load %arg4[%c78] : memref<160xf32, #tpu.memory_space<smem>>
    %554 = vector.broadcast %553 : f32 to vector<8x128xf32>
    %555 = arith.mulf %193, %554 : vector<8x128xf32>
    %556 = arith.addf %552, %555 : vector<8x128xf32>
    %c79 = arith.constant 79 : index
    %557 = memref.load %arg4[%c79] : memref<160xf32, #tpu.memory_space<smem>>
    %558 = vector.broadcast %557 : f32 to vector<8x128xf32>
    %559 = arith.mulf %213, %558 : vector<8x128xf32>
    %560 = arith.addf %556, %559 : vector<8x128xf32>
    %c7_81 = arith.constant 7 : index
    %561 = memref.load %arg5[%c7_81] : memref<16xf32, #tpu.memory_space<smem>>
    %562 = vector.broadcast %561 : f32 to vector<8x128xf32>
    %563 = arith.addf %560, %562 : vector<8x128xf32>
    %cst_82 = arith.constant 0.000000e+00 : f32
    %564 = vector.broadcast %cst_82 : f32 to vector<8x128xf32>
    %565 = arith.maximumf %563, %564 : vector<8x128xf32>
    %c80 = arith.constant 80 : index
    %566 = memref.load %arg4[%c80] : memref<160xf32, #tpu.memory_space<smem>>
    %567 = vector.broadcast %566 : f32 to vector<8x128xf32>
    %568 = arith.mulf %33, %567 : vector<8x128xf32>
    %c81 = arith.constant 81 : index
    %569 = memref.load %arg4[%c81] : memref<160xf32, #tpu.memory_space<smem>>
    %570 = vector.broadcast %569 : f32 to vector<8x128xf32>
    %571 = arith.mulf %53, %570 : vector<8x128xf32>
    %572 = arith.addf %568, %571 : vector<8x128xf32>
    %c82 = arith.constant 82 : index
    %573 = memref.load %arg4[%c82] : memref<160xf32, #tpu.memory_space<smem>>
    %574 = vector.broadcast %573 : f32 to vector<8x128xf32>
    %575 = arith.mulf %73, %574 : vector<8x128xf32>
    %576 = arith.addf %572, %575 : vector<8x128xf32>
    %c83 = arith.constant 83 : index
    %577 = memref.load %arg4[%c83] : memref<160xf32, #tpu.memory_space<smem>>
    %578 = vector.broadcast %577 : f32 to vector<8x128xf32>
    %579 = arith.mulf %93, %578 : vector<8x128xf32>
    %580 = arith.addf %576, %579 : vector<8x128xf32>
    %c84 = arith.constant 84 : index
    %581 = memref.load %arg4[%c84] : memref<160xf32, #tpu.memory_space<smem>>
    %582 = vector.broadcast %581 : f32 to vector<8x128xf32>
    %583 = arith.mulf %113, %582 : vector<8x128xf32>
    %584 = arith.addf %580, %583 : vector<8x128xf32>
    %c85 = arith.constant 85 : index
    %585 = memref.load %arg4[%c85] : memref<160xf32, #tpu.memory_space<smem>>
    %586 = vector.broadcast %585 : f32 to vector<8x128xf32>
    %587 = arith.mulf %133, %586 : vector<8x128xf32>
    %588 = arith.addf %584, %587 : vector<8x128xf32>
    %c86 = arith.constant 86 : index
    %589 = memref.load %arg4[%c86] : memref<160xf32, #tpu.memory_space<smem>>
    %590 = vector.broadcast %589 : f32 to vector<8x128xf32>
    %591 = arith.mulf %153, %590 : vector<8x128xf32>
    %592 = arith.addf %588, %591 : vector<8x128xf32>
    %c87 = arith.constant 87 : index
    %593 = memref.load %arg4[%c87] : memref<160xf32, #tpu.memory_space<smem>>
    %594 = vector.broadcast %593 : f32 to vector<8x128xf32>
    %595 = arith.mulf %173, %594 : vector<8x128xf32>
    %596 = arith.addf %592, %595 : vector<8x128xf32>
    %c88 = arith.constant 88 : index
    %597 = memref.load %arg4[%c88] : memref<160xf32, #tpu.memory_space<smem>>
    %598 = vector.broadcast %597 : f32 to vector<8x128xf32>
    %599 = arith.mulf %193, %598 : vector<8x128xf32>
    %600 = arith.addf %596, %599 : vector<8x128xf32>
    %c89 = arith.constant 89 : index
    %601 = memref.load %arg4[%c89] : memref<160xf32, #tpu.memory_space<smem>>
    %602 = vector.broadcast %601 : f32 to vector<8x128xf32>
    %603 = arith.mulf %213, %602 : vector<8x128xf32>
    %604 = arith.addf %600, %603 : vector<8x128xf32>
    %c8_83 = arith.constant 8 : index
    %605 = memref.load %arg5[%c8_83] : memref<16xf32, #tpu.memory_space<smem>>
    %606 = vector.broadcast %605 : f32 to vector<8x128xf32>
    %607 = arith.addf %604, %606 : vector<8x128xf32>
    %cst_84 = arith.constant 0.000000e+00 : f32
    %608 = vector.broadcast %cst_84 : f32 to vector<8x128xf32>
    %609 = arith.maximumf %607, %608 : vector<8x128xf32>
    %c90 = arith.constant 90 : index
    %610 = memref.load %arg4[%c90] : memref<160xf32, #tpu.memory_space<smem>>
    %611 = vector.broadcast %610 : f32 to vector<8x128xf32>
    %612 = arith.mulf %33, %611 : vector<8x128xf32>
    %c91 = arith.constant 91 : index
    %613 = memref.load %arg4[%c91] : memref<160xf32, #tpu.memory_space<smem>>
    %614 = vector.broadcast %613 : f32 to vector<8x128xf32>
    %615 = arith.mulf %53, %614 : vector<8x128xf32>
    %616 = arith.addf %612, %615 : vector<8x128xf32>
    %c92 = arith.constant 92 : index
    %617 = memref.load %arg4[%c92] : memref<160xf32, #tpu.memory_space<smem>>
    %618 = vector.broadcast %617 : f32 to vector<8x128xf32>
    %619 = arith.mulf %73, %618 : vector<8x128xf32>
    %620 = arith.addf %616, %619 : vector<8x128xf32>
    %c93 = arith.constant 93 : index
    %621 = memref.load %arg4[%c93] : memref<160xf32, #tpu.memory_space<smem>>
    %622 = vector.broadcast %621 : f32 to vector<8x128xf32>
    %623 = arith.mulf %93, %622 : vector<8x128xf32>
    %624 = arith.addf %620, %623 : vector<8x128xf32>
    %c94 = arith.constant 94 : index
    %625 = memref.load %arg4[%c94] : memref<160xf32, #tpu.memory_space<smem>>
    %626 = vector.broadcast %625 : f32 to vector<8x128xf32>
    %627 = arith.mulf %113, %626 : vector<8x128xf32>
    %628 = arith.addf %624, %627 : vector<8x128xf32>
    %c95 = arith.constant 95 : index
    %629 = memref.load %arg4[%c95] : memref<160xf32, #tpu.memory_space<smem>>
    %630 = vector.broadcast %629 : f32 to vector<8x128xf32>
    %631 = arith.mulf %133, %630 : vector<8x128xf32>
    %632 = arith.addf %628, %631 : vector<8x128xf32>
    %c96 = arith.constant 96 : index
    %633 = memref.load %arg4[%c96] : memref<160xf32, #tpu.memory_space<smem>>
    %634 = vector.broadcast %633 : f32 to vector<8x128xf32>
    %635 = arith.mulf %153, %634 : vector<8x128xf32>
    %636 = arith.addf %632, %635 : vector<8x128xf32>
    %c97 = arith.constant 97 : index
    %637 = memref.load %arg4[%c97] : memref<160xf32, #tpu.memory_space<smem>>
    %638 = vector.broadcast %637 : f32 to vector<8x128xf32>
    %639 = arith.mulf %173, %638 : vector<8x128xf32>
    %640 = arith.addf %636, %639 : vector<8x128xf32>
    %c98 = arith.constant 98 : index
    %641 = memref.load %arg4[%c98] : memref<160xf32, #tpu.memory_space<smem>>
    %642 = vector.broadcast %641 : f32 to vector<8x128xf32>
    %643 = arith.mulf %193, %642 : vector<8x128xf32>
    %644 = arith.addf %640, %643 : vector<8x128xf32>
    %c99 = arith.constant 99 : index
    %645 = memref.load %arg4[%c99] : memref<160xf32, #tpu.memory_space<smem>>
    %646 = vector.broadcast %645 : f32 to vector<8x128xf32>
    %647 = arith.mulf %213, %646 : vector<8x128xf32>
    %648 = arith.addf %644, %647 : vector<8x128xf32>
    %c9_85 = arith.constant 9 : index
    %649 = memref.load %arg5[%c9_85] : memref<16xf32, #tpu.memory_space<smem>>
    %650 = vector.broadcast %649 : f32 to vector<8x128xf32>
    %651 = arith.addf %648, %650 : vector<8x128xf32>
    %cst_86 = arith.constant 0.000000e+00 : f32
    %652 = vector.broadcast %cst_86 : f32 to vector<8x128xf32>
    %653 = arith.maximumf %651, %652 : vector<8x128xf32>
    %c100 = arith.constant 100 : index
    %654 = memref.load %arg4[%c100] : memref<160xf32, #tpu.memory_space<smem>>
    %655 = vector.broadcast %654 : f32 to vector<8x128xf32>
    %656 = arith.mulf %33, %655 : vector<8x128xf32>
    %c101 = arith.constant 101 : index
    %657 = memref.load %arg4[%c101] : memref<160xf32, #tpu.memory_space<smem>>
    %658 = vector.broadcast %657 : f32 to vector<8x128xf32>
    %659 = arith.mulf %53, %658 : vector<8x128xf32>
    %660 = arith.addf %656, %659 : vector<8x128xf32>
    %c102 = arith.constant 102 : index
    %661 = memref.load %arg4[%c102] : memref<160xf32, #tpu.memory_space<smem>>
    %662 = vector.broadcast %661 : f32 to vector<8x128xf32>
    %663 = arith.mulf %73, %662 : vector<8x128xf32>
    %664 = arith.addf %660, %663 : vector<8x128xf32>
    %c103 = arith.constant 103 : index
    %665 = memref.load %arg4[%c103] : memref<160xf32, #tpu.memory_space<smem>>
    %666 = vector.broadcast %665 : f32 to vector<8x128xf32>
    %667 = arith.mulf %93, %666 : vector<8x128xf32>
    %668 = arith.addf %664, %667 : vector<8x128xf32>
    %c104 = arith.constant 104 : index
    %669 = memref.load %arg4[%c104] : memref<160xf32, #tpu.memory_space<smem>>
    %670 = vector.broadcast %669 : f32 to vector<8x128xf32>
    %671 = arith.mulf %113, %670 : vector<8x128xf32>
    %672 = arith.addf %668, %671 : vector<8x128xf32>
    %c105 = arith.constant 105 : index
    %673 = memref.load %arg4[%c105] : memref<160xf32, #tpu.memory_space<smem>>
    %674 = vector.broadcast %673 : f32 to vector<8x128xf32>
    %675 = arith.mulf %133, %674 : vector<8x128xf32>
    %676 = arith.addf %672, %675 : vector<8x128xf32>
    %c106 = arith.constant 106 : index
    %677 = memref.load %arg4[%c106] : memref<160xf32, #tpu.memory_space<smem>>
    %678 = vector.broadcast %677 : f32 to vector<8x128xf32>
    %679 = arith.mulf %153, %678 : vector<8x128xf32>
    %680 = arith.addf %676, %679 : vector<8x128xf32>
    %c107 = arith.constant 107 : index
    %681 = memref.load %arg4[%c107] : memref<160xf32, #tpu.memory_space<smem>>
    %682 = vector.broadcast %681 : f32 to vector<8x128xf32>
    %683 = arith.mulf %173, %682 : vector<8x128xf32>
    %684 = arith.addf %680, %683 : vector<8x128xf32>
    %c108 = arith.constant 108 : index
    %685 = memref.load %arg4[%c108] : memref<160xf32, #tpu.memory_space<smem>>
    %686 = vector.broadcast %685 : f32 to vector<8x128xf32>
    %687 = arith.mulf %193, %686 : vector<8x128xf32>
    %688 = arith.addf %684, %687 : vector<8x128xf32>
    %c109 = arith.constant 109 : index
    %689 = memref.load %arg4[%c109] : memref<160xf32, #tpu.memory_space<smem>>
    %690 = vector.broadcast %689 : f32 to vector<8x128xf32>
    %691 = arith.mulf %213, %690 : vector<8x128xf32>
    %692 = arith.addf %688, %691 : vector<8x128xf32>
    %c10_87 = arith.constant 10 : index
    %693 = memref.load %arg5[%c10_87] : memref<16xf32, #tpu.memory_space<smem>>
    %694 = vector.broadcast %693 : f32 to vector<8x128xf32>
    %695 = arith.addf %692, %694 : vector<8x128xf32>
    %cst_88 = arith.constant 0.000000e+00 : f32
    %696 = vector.broadcast %cst_88 : f32 to vector<8x128xf32>
    %697 = arith.maximumf %695, %696 : vector<8x128xf32>
    %c110 = arith.constant 110 : index
    %698 = memref.load %arg4[%c110] : memref<160xf32, #tpu.memory_space<smem>>
    %699 = vector.broadcast %698 : f32 to vector<8x128xf32>
    %700 = arith.mulf %33, %699 : vector<8x128xf32>
    %c111 = arith.constant 111 : index
    %701 = memref.load %arg4[%c111] : memref<160xf32, #tpu.memory_space<smem>>
    %702 = vector.broadcast %701 : f32 to vector<8x128xf32>
    %703 = arith.mulf %53, %702 : vector<8x128xf32>
    %704 = arith.addf %700, %703 : vector<8x128xf32>
    %c112 = arith.constant 112 : index
    %705 = memref.load %arg4[%c112] : memref<160xf32, #tpu.memory_space<smem>>
    %706 = vector.broadcast %705 : f32 to vector<8x128xf32>
    %707 = arith.mulf %73, %706 : vector<8x128xf32>
    %708 = arith.addf %704, %707 : vector<8x128xf32>
    %c113 = arith.constant 113 : index
    %709 = memref.load %arg4[%c113] : memref<160xf32, #tpu.memory_space<smem>>
    %710 = vector.broadcast %709 : f32 to vector<8x128xf32>
    %711 = arith.mulf %93, %710 : vector<8x128xf32>
    %712 = arith.addf %708, %711 : vector<8x128xf32>
    %c114 = arith.constant 114 : index
    %713 = memref.load %arg4[%c114] : memref<160xf32, #tpu.memory_space<smem>>
    %714 = vector.broadcast %713 : f32 to vector<8x128xf32>
    %715 = arith.mulf %113, %714 : vector<8x128xf32>
    %716 = arith.addf %712, %715 : vector<8x128xf32>
    %c115 = arith.constant 115 : index
    %717 = memref.load %arg4[%c115] : memref<160xf32, #tpu.memory_space<smem>>
    %718 = vector.broadcast %717 : f32 to vector<8x128xf32>
    %719 = arith.mulf %133, %718 : vector<8x128xf32>
    %720 = arith.addf %716, %719 : vector<8x128xf32>
    %c116 = arith.constant 116 : index
    %721 = memref.load %arg4[%c116] : memref<160xf32, #tpu.memory_space<smem>>
    %722 = vector.broadcast %721 : f32 to vector<8x128xf32>
    %723 = arith.mulf %153, %722 : vector<8x128xf32>
    %724 = arith.addf %720, %723 : vector<8x128xf32>
    %c117 = arith.constant 117 : index
    %725 = memref.load %arg4[%c117] : memref<160xf32, #tpu.memory_space<smem>>
    %726 = vector.broadcast %725 : f32 to vector<8x128xf32>
    %727 = arith.mulf %173, %726 : vector<8x128xf32>
    %728 = arith.addf %724, %727 : vector<8x128xf32>
    %c118 = arith.constant 118 : index
    %729 = memref.load %arg4[%c118] : memref<160xf32, #tpu.memory_space<smem>>
    %730 = vector.broadcast %729 : f32 to vector<8x128xf32>
    %731 = arith.mulf %193, %730 : vector<8x128xf32>
    %732 = arith.addf %728, %731 : vector<8x128xf32>
    %c119 = arith.constant 119 : index
    %733 = memref.load %arg4[%c119] : memref<160xf32, #tpu.memory_space<smem>>
    %734 = vector.broadcast %733 : f32 to vector<8x128xf32>
    %735 = arith.mulf %213, %734 : vector<8x128xf32>
    %736 = arith.addf %732, %735 : vector<8x128xf32>
    %c11_89 = arith.constant 11 : index
    %737 = memref.load %arg5[%c11_89] : memref<16xf32, #tpu.memory_space<smem>>
    %738 = vector.broadcast %737 : f32 to vector<8x128xf32>
    %739 = arith.addf %736, %738 : vector<8x128xf32>
    %cst_90 = arith.constant 0.000000e+00 : f32
    %740 = vector.broadcast %cst_90 : f32 to vector<8x128xf32>
    %741 = arith.maximumf %739, %740 : vector<8x128xf32>
    %c120 = arith.constant 120 : index
    %742 = memref.load %arg4[%c120] : memref<160xf32, #tpu.memory_space<smem>>
    %743 = vector.broadcast %742 : f32 to vector<8x128xf32>
    %744 = arith.mulf %33, %743 : vector<8x128xf32>
    %c121 = arith.constant 121 : index
    %745 = memref.load %arg4[%c121] : memref<160xf32, #tpu.memory_space<smem>>
    %746 = vector.broadcast %745 : f32 to vector<8x128xf32>
    %747 = arith.mulf %53, %746 : vector<8x128xf32>
    %748 = arith.addf %744, %747 : vector<8x128xf32>
    %c122 = arith.constant 122 : index
    %749 = memref.load %arg4[%c122] : memref<160xf32, #tpu.memory_space<smem>>
    %750 = vector.broadcast %749 : f32 to vector<8x128xf32>
    %751 = arith.mulf %73, %750 : vector<8x128xf32>
    %752 = arith.addf %748, %751 : vector<8x128xf32>
    %c123 = arith.constant 123 : index
    %753 = memref.load %arg4[%c123] : memref<160xf32, #tpu.memory_space<smem>>
    %754 = vector.broadcast %753 : f32 to vector<8x128xf32>
    %755 = arith.mulf %93, %754 : vector<8x128xf32>
    %756 = arith.addf %752, %755 : vector<8x128xf32>
    %c124 = arith.constant 124 : index
    %757 = memref.load %arg4[%c124] : memref<160xf32, #tpu.memory_space<smem>>
    %758 = vector.broadcast %757 : f32 to vector<8x128xf32>
    %759 = arith.mulf %113, %758 : vector<8x128xf32>
    %760 = arith.addf %756, %759 : vector<8x128xf32>
    %c125 = arith.constant 125 : index
    %761 = memref.load %arg4[%c125] : memref<160xf32, #tpu.memory_space<smem>>
    %762 = vector.broadcast %761 : f32 to vector<8x128xf32>
    %763 = arith.mulf %133, %762 : vector<8x128xf32>
    %764 = arith.addf %760, %763 : vector<8x128xf32>
    %c126 = arith.constant 126 : index
    %765 = memref.load %arg4[%c126] : memref<160xf32, #tpu.memory_space<smem>>
    %766 = vector.broadcast %765 : f32 to vector<8x128xf32>
    %767 = arith.mulf %153, %766 : vector<8x128xf32>
    %768 = arith.addf %764, %767 : vector<8x128xf32>
    %c127 = arith.constant 127 : index
    %769 = memref.load %arg4[%c127] : memref<160xf32, #tpu.memory_space<smem>>
    %770 = vector.broadcast %769 : f32 to vector<8x128xf32>
    %771 = arith.mulf %173, %770 : vector<8x128xf32>
    %772 = arith.addf %768, %771 : vector<8x128xf32>
    %c128 = arith.constant 128 : index
    %773 = memref.load %arg4[%c128] : memref<160xf32, #tpu.memory_space<smem>>
    %774 = vector.broadcast %773 : f32 to vector<8x128xf32>
    %775 = arith.mulf %193, %774 : vector<8x128xf32>
    %776 = arith.addf %772, %775 : vector<8x128xf32>
    %c129 = arith.constant 129 : index
    %777 = memref.load %arg4[%c129] : memref<160xf32, #tpu.memory_space<smem>>
    %778 = vector.broadcast %777 : f32 to vector<8x128xf32>
    %779 = arith.mulf %213, %778 : vector<8x128xf32>
    %780 = arith.addf %776, %779 : vector<8x128xf32>
    %c12_91 = arith.constant 12 : index
    %781 = memref.load %arg5[%c12_91] : memref<16xf32, #tpu.memory_space<smem>>
    %782 = vector.broadcast %781 : f32 to vector<8x128xf32>
    %783 = arith.addf %780, %782 : vector<8x128xf32>
    %cst_92 = arith.constant 0.000000e+00 : f32
    %784 = vector.broadcast %cst_92 : f32 to vector<8x128xf32>
    %785 = arith.maximumf %783, %784 : vector<8x128xf32>
    %c130 = arith.constant 130 : index
    %786 = memref.load %arg4[%c130] : memref<160xf32, #tpu.memory_space<smem>>
    %787 = vector.broadcast %786 : f32 to vector<8x128xf32>
    %788 = arith.mulf %33, %787 : vector<8x128xf32>
    %c131 = arith.constant 131 : index
    %789 = memref.load %arg4[%c131] : memref<160xf32, #tpu.memory_space<smem>>
    %790 = vector.broadcast %789 : f32 to vector<8x128xf32>
    %791 = arith.mulf %53, %790 : vector<8x128xf32>
    %792 = arith.addf %788, %791 : vector<8x128xf32>
    %c132 = arith.constant 132 : index
    %793 = memref.load %arg4[%c132] : memref<160xf32, #tpu.memory_space<smem>>
    %794 = vector.broadcast %793 : f32 to vector<8x128xf32>
    %795 = arith.mulf %73, %794 : vector<8x128xf32>
    %796 = arith.addf %792, %795 : vector<8x128xf32>
    %c133 = arith.constant 133 : index
    %797 = memref.load %arg4[%c133] : memref<160xf32, #tpu.memory_space<smem>>
    %798 = vector.broadcast %797 : f32 to vector<8x128xf32>
    %799 = arith.mulf %93, %798 : vector<8x128xf32>
    %800 = arith.addf %796, %799 : vector<8x128xf32>
    %c134 = arith.constant 134 : index
    %801 = memref.load %arg4[%c134] : memref<160xf32, #tpu.memory_space<smem>>
    %802 = vector.broadcast %801 : f32 to vector<8x128xf32>
    %803 = arith.mulf %113, %802 : vector<8x128xf32>
    %804 = arith.addf %800, %803 : vector<8x128xf32>
    %c135 = arith.constant 135 : index
    %805 = memref.load %arg4[%c135] : memref<160xf32, #tpu.memory_space<smem>>
    %806 = vector.broadcast %805 : f32 to vector<8x128xf32>
    %807 = arith.mulf %133, %806 : vector<8x128xf32>
    %808 = arith.addf %804, %807 : vector<8x128xf32>
    %c136 = arith.constant 136 : index
    %809 = memref.load %arg4[%c136] : memref<160xf32, #tpu.memory_space<smem>>
    %810 = vector.broadcast %809 : f32 to vector<8x128xf32>
    %811 = arith.mulf %153, %810 : vector<8x128xf32>
    %812 = arith.addf %808, %811 : vector<8x128xf32>
    %c137 = arith.constant 137 : index
    %813 = memref.load %arg4[%c137] : memref<160xf32, #tpu.memory_space<smem>>
    %814 = vector.broadcast %813 : f32 to vector<8x128xf32>
    %815 = arith.mulf %173, %814 : vector<8x128xf32>
    %816 = arith.addf %812, %815 : vector<8x128xf32>
    %c138 = arith.constant 138 : index
    %817 = memref.load %arg4[%c138] : memref<160xf32, #tpu.memory_space<smem>>
    %818 = vector.broadcast %817 : f32 to vector<8x128xf32>
    %819 = arith.mulf %193, %818 : vector<8x128xf32>
    %820 = arith.addf %816, %819 : vector<8x128xf32>
    %c139 = arith.constant 139 : index
    %821 = memref.load %arg4[%c139] : memref<160xf32, #tpu.memory_space<smem>>
    %822 = vector.broadcast %821 : f32 to vector<8x128xf32>
    %823 = arith.mulf %213, %822 : vector<8x128xf32>
    %824 = arith.addf %820, %823 : vector<8x128xf32>
    %c13_93 = arith.constant 13 : index
    %825 = memref.load %arg5[%c13_93] : memref<16xf32, #tpu.memory_space<smem>>
    %826 = vector.broadcast %825 : f32 to vector<8x128xf32>
    %827 = arith.addf %824, %826 : vector<8x128xf32>
    %cst_94 = arith.constant 0.000000e+00 : f32
    %828 = vector.broadcast %cst_94 : f32 to vector<8x128xf32>
    %829 = arith.maximumf %827, %828 : vector<8x128xf32>
    %c140 = arith.constant 140 : index
    %830 = memref.load %arg4[%c140] : memref<160xf32, #tpu.memory_space<smem>>
    %831 = vector.broadcast %830 : f32 to vector<8x128xf32>
    %832 = arith.mulf %33, %831 : vector<8x128xf32>
    %c141 = arith.constant 141 : index
    %833 = memref.load %arg4[%c141] : memref<160xf32, #tpu.memory_space<smem>>
    %834 = vector.broadcast %833 : f32 to vector<8x128xf32>
    %835 = arith.mulf %53, %834 : vector<8x128xf32>
    %836 = arith.addf %832, %835 : vector<8x128xf32>
    %c142 = arith.constant 142 : index
    %837 = memref.load %arg4[%c142] : memref<160xf32, #tpu.memory_space<smem>>
    %838 = vector.broadcast %837 : f32 to vector<8x128xf32>
    %839 = arith.mulf %73, %838 : vector<8x128xf32>
    %840 = arith.addf %836, %839 : vector<8x128xf32>
    %c143 = arith.constant 143 : index
    %841 = memref.load %arg4[%c143] : memref<160xf32, #tpu.memory_space<smem>>
    %842 = vector.broadcast %841 : f32 to vector<8x128xf32>
    %843 = arith.mulf %93, %842 : vector<8x128xf32>
    %844 = arith.addf %840, %843 : vector<8x128xf32>
    %c144 = arith.constant 144 : index
    %845 = memref.load %arg4[%c144] : memref<160xf32, #tpu.memory_space<smem>>
    %846 = vector.broadcast %845 : f32 to vector<8x128xf32>
    %847 = arith.mulf %113, %846 : vector<8x128xf32>
    %848 = arith.addf %844, %847 : vector<8x128xf32>
    %c145 = arith.constant 145 : index
    %849 = memref.load %arg4[%c145] : memref<160xf32, #tpu.memory_space<smem>>
    %850 = vector.broadcast %849 : f32 to vector<8x128xf32>
    %851 = arith.mulf %133, %850 : vector<8x128xf32>
    %852 = arith.addf %848, %851 : vector<8x128xf32>
    %c146 = arith.constant 146 : index
    %853 = memref.load %arg4[%c146] : memref<160xf32, #tpu.memory_space<smem>>
    %854 = vector.broadcast %853 : f32 to vector<8x128xf32>
    %855 = arith.mulf %153, %854 : vector<8x128xf32>
    %856 = arith.addf %852, %855 : vector<8x128xf32>
    %c147 = arith.constant 147 : index
    %857 = memref.load %arg4[%c147] : memref<160xf32, #tpu.memory_space<smem>>
    %858 = vector.broadcast %857 : f32 to vector<8x128xf32>
    %859 = arith.mulf %173, %858 : vector<8x128xf32>
    %860 = arith.addf %856, %859 : vector<8x128xf32>
    %c148 = arith.constant 148 : index
    %861 = memref.load %arg4[%c148] : memref<160xf32, #tpu.memory_space<smem>>
    %862 = vector.broadcast %861 : f32 to vector<8x128xf32>
    %863 = arith.mulf %193, %862 : vector<8x128xf32>
    %864 = arith.addf %860, %863 : vector<8x128xf32>
    %c149 = arith.constant 149 : index
    %865 = memref.load %arg4[%c149] : memref<160xf32, #tpu.memory_space<smem>>
    %866 = vector.broadcast %865 : f32 to vector<8x128xf32>
    %867 = arith.mulf %213, %866 : vector<8x128xf32>
    %868 = arith.addf %864, %867 : vector<8x128xf32>
    %c14_95 = arith.constant 14 : index
    %869 = memref.load %arg5[%c14_95] : memref<16xf32, #tpu.memory_space<smem>>
    %870 = vector.broadcast %869 : f32 to vector<8x128xf32>
    %871 = arith.addf %868, %870 : vector<8x128xf32>
    %cst_96 = arith.constant 0.000000e+00 : f32
    %872 = vector.broadcast %cst_96 : f32 to vector<8x128xf32>
    %873 = arith.maximumf %871, %872 : vector<8x128xf32>
    %c150 = arith.constant 150 : index
    %874 = memref.load %arg4[%c150] : memref<160xf32, #tpu.memory_space<smem>>
    %875 = vector.broadcast %874 : f32 to vector<8x128xf32>
    %876 = arith.mulf %33, %875 : vector<8x128xf32>
    %c151 = arith.constant 151 : index
    %877 = memref.load %arg4[%c151] : memref<160xf32, #tpu.memory_space<smem>>
    %878 = vector.broadcast %877 : f32 to vector<8x128xf32>
    %879 = arith.mulf %53, %878 : vector<8x128xf32>
    %880 = arith.addf %876, %879 : vector<8x128xf32>
    %c152 = arith.constant 152 : index
    %881 = memref.load %arg4[%c152] : memref<160xf32, #tpu.memory_space<smem>>
    %882 = vector.broadcast %881 : f32 to vector<8x128xf32>
    %883 = arith.mulf %73, %882 : vector<8x128xf32>
    %884 = arith.addf %880, %883 : vector<8x128xf32>
    %c153 = arith.constant 153 : index
    %885 = memref.load %arg4[%c153] : memref<160xf32, #tpu.memory_space<smem>>
    %886 = vector.broadcast %885 : f32 to vector<8x128xf32>
    %887 = arith.mulf %93, %886 : vector<8x128xf32>
    %888 = arith.addf %884, %887 : vector<8x128xf32>
    %c154 = arith.constant 154 : index
    %889 = memref.load %arg4[%c154] : memref<160xf32, #tpu.memory_space<smem>>
    %890 = vector.broadcast %889 : f32 to vector<8x128xf32>
    %891 = arith.mulf %113, %890 : vector<8x128xf32>
    %892 = arith.addf %888, %891 : vector<8x128xf32>
    %c155 = arith.constant 155 : index
    %893 = memref.load %arg4[%c155] : memref<160xf32, #tpu.memory_space<smem>>
    %894 = vector.broadcast %893 : f32 to vector<8x128xf32>
    %895 = arith.mulf %133, %894 : vector<8x128xf32>
    %896 = arith.addf %892, %895 : vector<8x128xf32>
    %c156 = arith.constant 156 : index
    %897 = memref.load %arg4[%c156] : memref<160xf32, #tpu.memory_space<smem>>
    %898 = vector.broadcast %897 : f32 to vector<8x128xf32>
    %899 = arith.mulf %153, %898 : vector<8x128xf32>
    %900 = arith.addf %896, %899 : vector<8x128xf32>
    %c157 = arith.constant 157 : index
    %901 = memref.load %arg4[%c157] : memref<160xf32, #tpu.memory_space<smem>>
    %902 = vector.broadcast %901 : f32 to vector<8x128xf32>
    %903 = arith.mulf %173, %902 : vector<8x128xf32>
    %904 = arith.addf %900, %903 : vector<8x128xf32>
    %c158 = arith.constant 158 : index
    %905 = memref.load %arg4[%c158] : memref<160xf32, #tpu.memory_space<smem>>
    %906 = vector.broadcast %905 : f32 to vector<8x128xf32>
    %907 = arith.mulf %193, %906 : vector<8x128xf32>
    %908 = arith.addf %904, %907 : vector<8x128xf32>
    %c159 = arith.constant 159 : index
    %909 = memref.load %arg4[%c159] : memref<160xf32, #tpu.memory_space<smem>>
    %910 = vector.broadcast %909 : f32 to vector<8x128xf32>
    %911 = arith.mulf %213, %910 : vector<8x128xf32>
    %912 = arith.addf %908, %911 : vector<8x128xf32>
    %c15_97 = arith.constant 15 : index
    %913 = memref.load %arg5[%c15_97] : memref<16xf32, #tpu.memory_space<smem>>
    %914 = vector.broadcast %913 : f32 to vector<8x128xf32>
    %915 = arith.addf %912, %914 : vector<8x128xf32>
    %cst_98 = arith.constant 0.000000e+00 : f32
    %916 = vector.broadcast %cst_98 : f32 to vector<8x128xf32>
    %917 = arith.maximumf %915, %916 : vector<8x128xf32>
    %c0_99 = arith.constant 0 : index
    %918 = memref.load %arg6[%c0_99] : memref<128xf32, #tpu.memory_space<smem>>
    %919 = vector.broadcast %918 : f32 to vector<8x128xf32>
    %920 = arith.mulf %257, %919 : vector<8x128xf32>
    %c1_100 = arith.constant 1 : index
    %921 = memref.load %arg6[%c1_100] : memref<128xf32, #tpu.memory_space<smem>>
    %922 = vector.broadcast %921 : f32 to vector<8x128xf32>
    %923 = arith.mulf %301, %922 : vector<8x128xf32>
    %924 = arith.addf %920, %923 : vector<8x128xf32>
    %c2_101 = arith.constant 2 : index
    %925 = memref.load %arg6[%c2_101] : memref<128xf32, #tpu.memory_space<smem>>
    %926 = vector.broadcast %925 : f32 to vector<8x128xf32>
    %927 = arith.mulf %345, %926 : vector<8x128xf32>
    %928 = arith.addf %924, %927 : vector<8x128xf32>
    %c3_102 = arith.constant 3 : index
    %929 = memref.load %arg6[%c3_102] : memref<128xf32, #tpu.memory_space<smem>>
    %930 = vector.broadcast %929 : f32 to vector<8x128xf32>
    %931 = arith.mulf %389, %930 : vector<8x128xf32>
    %932 = arith.addf %928, %931 : vector<8x128xf32>
    %c4_103 = arith.constant 4 : index
    %933 = memref.load %arg6[%c4_103] : memref<128xf32, #tpu.memory_space<smem>>
    %934 = vector.broadcast %933 : f32 to vector<8x128xf32>
    %935 = arith.mulf %433, %934 : vector<8x128xf32>
    %936 = arith.addf %932, %935 : vector<8x128xf32>
    %c5_104 = arith.constant 5 : index
    %937 = memref.load %arg6[%c5_104] : memref<128xf32, #tpu.memory_space<smem>>
    %938 = vector.broadcast %937 : f32 to vector<8x128xf32>
    %939 = arith.mulf %477, %938 : vector<8x128xf32>
    %940 = arith.addf %936, %939 : vector<8x128xf32>
    %c6_105 = arith.constant 6 : index
    %941 = memref.load %arg6[%c6_105] : memref<128xf32, #tpu.memory_space<smem>>
    %942 = vector.broadcast %941 : f32 to vector<8x128xf32>
    %943 = arith.mulf %521, %942 : vector<8x128xf32>
    %944 = arith.addf %940, %943 : vector<8x128xf32>
    %c7_106 = arith.constant 7 : index
    %945 = memref.load %arg6[%c7_106] : memref<128xf32, #tpu.memory_space<smem>>
    %946 = vector.broadcast %945 : f32 to vector<8x128xf32>
    %947 = arith.mulf %565, %946 : vector<8x128xf32>
    %948 = arith.addf %944, %947 : vector<8x128xf32>
    %c8_107 = arith.constant 8 : index
    %949 = memref.load %arg6[%c8_107] : memref<128xf32, #tpu.memory_space<smem>>
    %950 = vector.broadcast %949 : f32 to vector<8x128xf32>
    %951 = arith.mulf %609, %950 : vector<8x128xf32>
    %952 = arith.addf %948, %951 : vector<8x128xf32>
    %c9_108 = arith.constant 9 : index
    %953 = memref.load %arg6[%c9_108] : memref<128xf32, #tpu.memory_space<smem>>
    %954 = vector.broadcast %953 : f32 to vector<8x128xf32>
    %955 = arith.mulf %653, %954 : vector<8x128xf32>
    %956 = arith.addf %952, %955 : vector<8x128xf32>
    %c10_109 = arith.constant 10 : index
    %957 = memref.load %arg6[%c10_109] : memref<128xf32, #tpu.memory_space<smem>>
    %958 = vector.broadcast %957 : f32 to vector<8x128xf32>
    %959 = arith.mulf %697, %958 : vector<8x128xf32>
    %960 = arith.addf %956, %959 : vector<8x128xf32>
    %c11_110 = arith.constant 11 : index
    %961 = memref.load %arg6[%c11_110] : memref<128xf32, #tpu.memory_space<smem>>
    %962 = vector.broadcast %961 : f32 to vector<8x128xf32>
    %963 = arith.mulf %741, %962 : vector<8x128xf32>
    %964 = arith.addf %960, %963 : vector<8x128xf32>
    %c12_111 = arith.constant 12 : index
    %965 = memref.load %arg6[%c12_111] : memref<128xf32, #tpu.memory_space<smem>>
    %966 = vector.broadcast %965 : f32 to vector<8x128xf32>
    %967 = arith.mulf %785, %966 : vector<8x128xf32>
    %968 = arith.addf %964, %967 : vector<8x128xf32>
    %c13_112 = arith.constant 13 : index
    %969 = memref.load %arg6[%c13_112] : memref<128xf32, #tpu.memory_space<smem>>
    %970 = vector.broadcast %969 : f32 to vector<8x128xf32>
    %971 = arith.mulf %829, %970 : vector<8x128xf32>
    %972 = arith.addf %968, %971 : vector<8x128xf32>
    %c14_113 = arith.constant 14 : index
    %973 = memref.load %arg6[%c14_113] : memref<128xf32, #tpu.memory_space<smem>>
    %974 = vector.broadcast %973 : f32 to vector<8x128xf32>
    %975 = arith.mulf %873, %974 : vector<8x128xf32>
    %976 = arith.addf %972, %975 : vector<8x128xf32>
    %c15_114 = arith.constant 15 : index
    %977 = memref.load %arg6[%c15_114] : memref<128xf32, #tpu.memory_space<smem>>
    %978 = vector.broadcast %977 : f32 to vector<8x128xf32>
    %979 = arith.mulf %917, %978 : vector<8x128xf32>
    %980 = arith.addf %976, %979 : vector<8x128xf32>
    %c0_115 = arith.constant 0 : index
    %981 = memref.load %arg7[%c0_115] : memref<8xf32, #tpu.memory_space<smem>>
    %982 = vector.broadcast %981 : f32 to vector<8x128xf32>
    %983 = arith.addf %980, %982 : vector<8x128xf32>
    %c0_116 = arith.constant 0 : index
    %984 = arith.index_cast %1 : i32 to index
    %c0_117 = arith.constant 0 : index
    %985 = vector.load %arg8[%c0_116, %984, %c0_117] : memref<8x8x128xf32, #tpu.memory_space<vmem>>, vector<1x8x128xf32>
    %986 = vector.shape_cast %985 : vector<1x8x128xf32> to vector<8x128xf32>
    %987 = vector.shape_cast %983 : vector<8x128xf32> to vector<1x8x128xf32>
    tpu.vector_store %arg8[%c0_116, %984, %c0_117], %987 {strides = array<i32>} : memref<8x8x128xf32, #tpu.memory_space<vmem>>, vector<1x8x128xf32>,
    %c16_118 = arith.constant 16 : index
    %988 = memref.load %arg6[%c16_118] : memref<128xf32, #tpu.memory_space<smem>>
    %989 = vector.broadcast %988 : f32 to vector<8x128xf32>
    %990 = arith.mulf %257, %989 : vector<8x128xf32>
    %c17_119 = arith.constant 17 : index
    %991 = memref.load %arg6[%c17_119] : memref<128xf32, #tpu.memory_space<smem>>
    %992 = vector.broadcast %991 : f32 to vector<8x128xf32>
    %993 = arith.mulf %301, %992 : vector<8x128xf32>
    %994 = arith.addf %990, %993 : vector<8x128xf32>
    %c18_120 = arith.constant 18 : index
    %995 = memref.load %arg6[%c18_120] : memref<128xf32, #tpu.memory_space<smem>>
    %996 = vector.broadcast %995 : f32 to vector<8x128xf32>
    %997 = arith.mulf %345, %996 : vector<8x128xf32>
    %998 = arith.addf %994, %997 : vector<8x128xf32>
    %c19_121 = arith.constant 19 : index
    %999 = memref.load %arg6[%c19_121] : memref<128xf32, #tpu.memory_space<smem>>
    %1000 = vector.broadcast %999 : f32 to vector<8x128xf32>
    %1001 = arith.mulf %389, %1000 : vector<8x128xf32>
    %1002 = arith.addf %998, %1001 : vector<8x128xf32>
    %c20_122 = arith.constant 20 : index
    %1003 = memref.load %arg6[%c20_122] : memref<128xf32, #tpu.memory_space<smem>>
    %1004 = vector.broadcast %1003 : f32 to vector<8x128xf32>
    %1005 = arith.mulf %433, %1004 : vector<8x128xf32>
    %1006 = arith.addf %1002, %1005 : vector<8x128xf32>
    %c21_123 = arith.constant 21 : index
    %1007 = memref.load %arg6[%c21_123] : memref<128xf32, #tpu.memory_space<smem>>
    %1008 = vector.broadcast %1007 : f32 to vector<8x128xf32>
    %1009 = arith.mulf %477, %1008 : vector<8x128xf32>
    %1010 = arith.addf %1006, %1009 : vector<8x128xf32>
    %c22_124 = arith.constant 22 : index
    %1011 = memref.load %arg6[%c22_124] : memref<128xf32, #tpu.memory_space<smem>>
    %1012 = vector.broadcast %1011 : f32 to vector<8x128xf32>
    %1013 = arith.mulf %521, %1012 : vector<8x128xf32>
    %1014 = arith.addf %1010, %1013 : vector<8x128xf32>
    %c23_125 = arith.constant 23 : index
    %1015 = memref.load %arg6[%c23_125] : memref<128xf32, #tpu.memory_space<smem>>
    %1016 = vector.broadcast %1015 : f32 to vector<8x128xf32>
    %1017 = arith.mulf %565, %1016 : vector<8x128xf32>
    %1018 = arith.addf %1014, %1017 : vector<8x128xf32>
    %c24_126 = arith.constant 24 : index
    %1019 = memref.load %arg6[%c24_126] : memref<128xf32, #tpu.memory_space<smem>>
    %1020 = vector.broadcast %1019 : f32 to vector<8x128xf32>
    %1021 = arith.mulf %609, %1020 : vector<8x128xf32>
    %1022 = arith.addf %1018, %1021 : vector<8x128xf32>
    %c25_127 = arith.constant 25 : index
    %1023 = memref.load %arg6[%c25_127] : memref<128xf32, #tpu.memory_space<smem>>
    %1024 = vector.broadcast %1023 : f32 to vector<8x128xf32>
    %1025 = arith.mulf %653, %1024 : vector<8x128xf32>
    %1026 = arith.addf %1022, %1025 : vector<8x128xf32>
    %c26_128 = arith.constant 26 : index
    %1027 = memref.load %arg6[%c26_128] : memref<128xf32, #tpu.memory_space<smem>>
    %1028 = vector.broadcast %1027 : f32 to vector<8x128xf32>
    %1029 = arith.mulf %697, %1028 : vector<8x128xf32>
    %1030 = arith.addf %1026, %1029 : vector<8x128xf32>
    %c27_129 = arith.constant 27 : index
    %1031 = memref.load %arg6[%c27_129] : memref<128xf32, #tpu.memory_space<smem>>
    %1032 = vector.broadcast %1031 : f32 to vector<8x128xf32>
    %1033 = arith.mulf %741, %1032 : vector<8x128xf32>
    %1034 = arith.addf %1030, %1033 : vector<8x128xf32>
    %c28_130 = arith.constant 28 : index
    %1035 = memref.load %arg6[%c28_130] : memref<128xf32, #tpu.memory_space<smem>>
    %1036 = vector.broadcast %1035 : f32 to vector<8x128xf32>
    %1037 = arith.mulf %785, %1036 : vector<8x128xf32>
    %1038 = arith.addf %1034, %1037 : vector<8x128xf32>
    %c29_131 = arith.constant 29 : index
    %1039 = memref.load %arg6[%c29_131] : memref<128xf32, #tpu.memory_space<smem>>
    %1040 = vector.broadcast %1039 : f32 to vector<8x128xf32>
    %1041 = arith.mulf %829, %1040 : vector<8x128xf32>
    %1042 = arith.addf %1038, %1041 : vector<8x128xf32>
    %c30_132 = arith.constant 30 : index
    %1043 = memref.load %arg6[%c30_132] : memref<128xf32, #tpu.memory_space<smem>>
    %1044 = vector.broadcast %1043 : f32 to vector<8x128xf32>
    %1045 = arith.mulf %873, %1044 : vector<8x128xf32>
    %1046 = arith.addf %1042, %1045 : vector<8x128xf32>
    %c31_133 = arith.constant 31 : index
    %1047 = memref.load %arg6[%c31_133] : memref<128xf32, #tpu.memory_space<smem>>
    %1048 = vector.broadcast %1047 : f32 to vector<8x128xf32>
    %1049 = arith.mulf %917, %1048 : vector<8x128xf32>
    %1050 = arith.addf %1046, %1049 : vector<8x128xf32>
    %c1_134 = arith.constant 1 : index
    %1051 = memref.load %arg7[%c1_134] : memref<8xf32, #tpu.memory_space<smem>>
    %1052 = vector.broadcast %1051 : f32 to vector<8x128xf32>
    %1053 = arith.addf %1050, %1052 : vector<8x128xf32>
    %c1_135 = arith.constant 1 : index
    %1054 = arith.index_cast %1 : i32 to index
    %c0_136 = arith.constant 0 : index
    %1055 = vector.load %arg8[%c1_135, %1054, %c0_136] : memref<8x8x128xf32, #tpu.memory_space<vmem>>, vector<1x8x128xf32>
    %1056 = vector.shape_cast %1055 : vector<1x8x128xf32> to vector<8x128xf32>
    %1057 = vector.shape_cast %1053 : vector<8x128xf32> to vector<1x8x128xf32>
    tpu.vector_store %arg8[%c1_135, %1054, %c0_136], %1057 {strides = array<i32>} : memref<8x8x128xf32, #tpu.memory_space<vmem>>, vector<1x8x128xf32>,
    %c32_137 = arith.constant 32 : index
    %1058 = memref.load %arg6[%c32_137] : memref<128xf32, #tpu.memory_space<smem>>
    %1059 = vector.broadcast %1058 : f32 to vector<8x128xf32>
    %1060 = arith.mulf %257, %1059 : vector<8x128xf32>
    %c33_138 = arith.constant 33 : index
    %1061 = memref.load %arg6[%c33_138] : memref<128xf32, #tpu.memory_space<smem>>
    %1062 = vector.broadcast %1061 : f32 to vector<8x128xf32>
    %1063 = arith.mulf %301, %1062 : vector<8x128xf32>
    %1064 = arith.addf %1060, %1063 : vector<8x128xf32>
    %c34_139 = arith.constant 34 : index
    %1065 = memref.load %arg6[%c34_139] : memref<128xf32, #tpu.memory_space<smem>>
    %1066 = vector.broadcast %1065 : f32 to vector<8x128xf32>
    %1067 = arith.mulf %345, %1066 : vector<8x128xf32>
    %1068 = arith.addf %1064, %1067 : vector<8x128xf32>
    %c35_140 = arith.constant 35 : index
    %1069 = memref.load %arg6[%c35_140] : memref<128xf32, #tpu.memory_space<smem>>
    %1070 = vector.broadcast %1069 : f32 to vector<8x128xf32>
    %1071 = arith.mulf %389, %1070 : vector<8x128xf32>
    %1072 = arith.addf %1068, %1071 : vector<8x128xf32>
    %c36_141 = arith.constant 36 : index
    %1073 = memref.load %arg6[%c36_141] : memref<128xf32, #tpu.memory_space<smem>>
    %1074 = vector.broadcast %1073 : f32 to vector<8x128xf32>
    %1075 = arith.mulf %433, %1074 : vector<8x128xf32>
    %1076 = arith.addf %1072, %1075 : vector<8x128xf32>
    %c37_142 = arith.constant 37 : index
    %1077 = memref.load %arg6[%c37_142] : memref<128xf32, #tpu.memory_space<smem>>
    %1078 = vector.broadcast %1077 : f32 to vector<8x128xf32>
    %1079 = arith.mulf %477, %1078 : vector<8x128xf32>
    %1080 = arith.addf %1076, %1079 : vector<8x128xf32>
    %c38_143 = arith.constant 38 : index
    %1081 = memref.load %arg6[%c38_143] : memref<128xf32, #tpu.memory_space<smem>>
    %1082 = vector.broadcast %1081 : f32 to vector<8x128xf32>
    %1083 = arith.mulf %521, %1082 : vector<8x128xf32>
    %1084 = arith.addf %1080, %1083 : vector<8x128xf32>
    %c39_144 = arith.constant 39 : index
    %1085 = memref.load %arg6[%c39_144] : memref<128xf32, #tpu.memory_space<smem>>
    %1086 = vector.broadcast %1085 : f32 to vector<8x128xf32>
    %1087 = arith.mulf %565, %1086 : vector<8x128xf32>
    %1088 = arith.addf %1084, %1087 : vector<8x128xf32>
    %c40_145 = arith.constant 40 : index
    %1089 = memref.load %arg6[%c40_145] : memref<128xf32, #tpu.memory_space<smem>>
    %1090 = vector.broadcast %1089 : f32 to vector<8x128xf32>
    %1091 = arith.mulf %609, %1090 : vector<8x128xf32>
    %1092 = arith.addf %1088, %1091 : vector<8x128xf32>
    %c41_146 = arith.constant 41 : index
    %1093 = memref.load %arg6[%c41_146] : memref<128xf32, #tpu.memory_space<smem>>
    %1094 = vector.broadcast %1093 : f32 to vector<8x128xf32>
    %1095 = arith.mulf %653, %1094 : vector<8x128xf32>
    %1096 = arith.addf %1092, %1095 : vector<8x128xf32>
    %c42_147 = arith.constant 42 : index
    %1097 = memref.load %arg6[%c42_147] : memref<128xf32, #tpu.memory_space<smem>>
    %1098 = vector.broadcast %1097 : f32 to vector<8x128xf32>
    %1099 = arith.mulf %697, %1098 : vector<8x128xf32>
    %1100 = arith.addf %1096, %1099 : vector<8x128xf32>
    %c43_148 = arith.constant 43 : index
    %1101 = memref.load %arg6[%c43_148] : memref<128xf32, #tpu.memory_space<smem>>
    %1102 = vector.broadcast %1101 : f32 to vector<8x128xf32>
    %1103 = arith.mulf %741, %1102 : vector<8x128xf32>
    %1104 = arith.addf %1100, %1103 : vector<8x128xf32>
    %c44_149 = arith.constant 44 : index
    %1105 = memref.load %arg6[%c44_149] : memref<128xf32, #tpu.memory_space<smem>>
    %1106 = vector.broadcast %1105 : f32 to vector<8x128xf32>
    %1107 = arith.mulf %785, %1106 : vector<8x128xf32>
    %1108 = arith.addf %1104, %1107 : vector<8x128xf32>
    %c45_150 = arith.constant 45 : index
    %1109 = memref.load %arg6[%c45_150] : memref<128xf32, #tpu.memory_space<smem>>
    %1110 = vector.broadcast %1109 : f32 to vector<8x128xf32>
    %1111 = arith.mulf %829, %1110 : vector<8x128xf32>
    %1112 = arith.addf %1108, %1111 : vector<8x128xf32>
    %c46_151 = arith.constant 46 : index
    %1113 = memref.load %arg6[%c46_151] : memref<128xf32, #tpu.memory_space<smem>>
    %1114 = vector.broadcast %1113 : f32 to vector<8x128xf32>
    %1115 = arith.mulf %873, %1114 : vector<8x128xf32>
    %1116 = arith.addf %1112, %1115 : vector<8x128xf32>
    %c47_152 = arith.constant 47 : index
    %1117 = memref.load %arg6[%c47_152] : memref<128xf32, #tpu.memory_space<smem>>
    %1118 = vector.broadcast %1117 : f32 to vector<8x128xf32>
    %1119 = arith.mulf %917, %1118 : vector<8x128xf32>
    %1120 = arith.addf %1116, %1119 : vector<8x128xf32>
    %c2_153 = arith.constant 2 : index
    %1121 = memref.load %arg7[%c2_153] : memref<8xf32, #tpu.memory_space<smem>>
    %1122 = vector.broadcast %1121 : f32 to vector<8x128xf32>
    %1123 = arith.addf %1120, %1122 : vector<8x128xf32>
    %c2_154 = arith.constant 2 : index
    %1124 = arith.index_cast %1 : i32 to index
    %c0_155 = arith.constant 0 : index
    %1125 = vector.load %arg8[%c2_154, %1124, %c0_155] : memref<8x8x128xf32, #tpu.memory_space<vmem>>, vector<1x8x128xf32>
    %1126 = vector.shape_cast %1125 : vector<1x8x128xf32> to vector<8x128xf32>
    %1127 = vector.shape_cast %1123 : vector<8x128xf32> to vector<1x8x128xf32>
    tpu.vector_store %arg8[%c2_154, %1124, %c0_155], %1127 {strides = array<i32>} : memref<8x8x128xf32, #tpu.memory_space<vmem>>, vector<1x8x128xf32>,
    %c48_156 = arith.constant 48 : index
    %1128 = memref.load %arg6[%c48_156] : memref<128xf32, #tpu.memory_space<smem>>
    %1129 = vector.broadcast %1128 : f32 to vector<8x128xf32>
    %1130 = arith.mulf %257, %1129 : vector<8x128xf32>
    %c49_157 = arith.constant 49 : index
    %1131 = memref.load %arg6[%c49_157] : memref<128xf32, #tpu.memory_space<smem>>
    %1132 = vector.broadcast %1131 : f32 to vector<8x128xf32>
    %1133 = arith.mulf %301, %1132 : vector<8x128xf32>
    %1134 = arith.addf %1130, %1133 : vector<8x128xf32>
    %c50_158 = arith.constant 50 : index
    %1135 = memref.load %arg6[%c50_158] : memref<128xf32, #tpu.memory_space<smem>>
    %1136 = vector.broadcast %1135 : f32 to vector<8x128xf32>
    %1137 = arith.mulf %345, %1136 : vector<8x128xf32>
    %1138 = arith.addf %1134, %1137 : vector<8x128xf32>
    %c51_159 = arith.constant 51 : index
    %1139 = memref.load %arg6[%c51_159] : memref<128xf32, #tpu.memory_space<smem>>
    %1140 = vector.broadcast %1139 : f32 to vector<8x128xf32>
    %1141 = arith.mulf %389, %1140 : vector<8x128xf32>
    %1142 = arith.addf %1138, %1141 : vector<8x128xf32>
    %c52_160 = arith.constant 52 : index
    %1143 = memref.load %arg6[%c52_160] : memref<128xf32, #tpu.memory_space<smem>>
    %1144 = vector.broadcast %1143 : f32 to vector<8x128xf32>
    %1145 = arith.mulf %433, %1144 : vector<8x128xf32>
    %1146 = arith.addf %1142, %1145 : vector<8x128xf32>
    %c53_161 = arith.constant 53 : index
    %1147 = memref.load %arg6[%c53_161] : memref<128xf32, #tpu.memory_space<smem>>
    %1148 = vector.broadcast %1147 : f32 to vector<8x128xf32>
    %1149 = arith.mulf %477, %1148 : vector<8x128xf32>
    %1150 = arith.addf %1146, %1149 : vector<8x128xf32>
    %c54_162 = arith.constant 54 : index
    %1151 = memref.load %arg6[%c54_162] : memref<128xf32, #tpu.memory_space<smem>>
    %1152 = vector.broadcast %1151 : f32 to vector<8x128xf32>
    %1153 = arith.mulf %521, %1152 : vector<8x128xf32>
    %1154 = arith.addf %1150, %1153 : vector<8x128xf32>
    %c55_163 = arith.constant 55 : index
    %1155 = memref.load %arg6[%c55_163] : memref<128xf32, #tpu.memory_space<smem>>
    %1156 = vector.broadcast %1155 : f32 to vector<8x128xf32>
    %1157 = arith.mulf %565, %1156 : vector<8x128xf32>
    %1158 = arith.addf %1154, %1157 : vector<8x128xf32>
    %c56_164 = arith.constant 56 : index
    %1159 = memref.load %arg6[%c56_164] : memref<128xf32, #tpu.memory_space<smem>>
    %1160 = vector.broadcast %1159 : f32 to vector<8x128xf32>
    %1161 = arith.mulf %609, %1160 : vector<8x128xf32>
    %1162 = arith.addf %1158, %1161 : vector<8x128xf32>
    %c57_165 = arith.constant 57 : index
    %1163 = memref.load %arg6[%c57_165] : memref<128xf32, #tpu.memory_space<smem>>
    %1164 = vector.broadcast %1163 : f32 to vector<8x128xf32>
    %1165 = arith.mulf %653, %1164 : vector<8x128xf32>
    %1166 = arith.addf %1162, %1165 : vector<8x128xf32>
    %c58_166 = arith.constant 58 : index
    %1167 = memref.load %arg6[%c58_166] : memref<128xf32, #tpu.memory_space<smem>>
    %1168 = vector.broadcast %1167 : f32 to vector<8x128xf32>
    %1169 = arith.mulf %697, %1168 : vector<8x128xf32>
    %1170 = arith.addf %1166, %1169 : vector<8x128xf32>
    %c59_167 = arith.constant 59 : index
    %1171 = memref.load %arg6[%c59_167] : memref<128xf32, #tpu.memory_space<smem>>
    %1172 = vector.broadcast %1171 : f32 to vector<8x128xf32>
    %1173 = arith.mulf %741, %1172 : vector<8x128xf32>
    %1174 = arith.addf %1170, %1173 : vector<8x128xf32>
    %c60_168 = arith.constant 60 : index
    %1175 = memref.load %arg6[%c60_168] : memref<128xf32, #tpu.memory_space<smem>>
    %1176 = vector.broadcast %1175 : f32 to vector<8x128xf32>
    %1177 = arith.mulf %785, %1176 : vector<8x128xf32>
    %1178 = arith.addf %1174, %1177 : vector<8x128xf32>
    %c61_169 = arith.constant 61 : index
    %1179 = memref.load %arg6[%c61_169] : memref<128xf32, #tpu.memory_space<smem>>
    %1180 = vector.broadcast %1179 : f32 to vector<8x128xf32>
    %1181 = arith.mulf %829, %1180 : vector<8x128xf32>
    %1182 = arith.addf %1178, %1181 : vector<8x128xf32>
    %c62_170 = arith.constant 62 : index
    %1183 = memref.load %arg6[%c62_170] : memref<128xf32, #tpu.memory_space<smem>>
    %1184 = vector.broadcast %1183 : f32 to vector<8x128xf32>
    %1185 = arith.mulf %873, %1184 : vector<8x128xf32>
    %1186 = arith.addf %1182, %1185 : vector<8x128xf32>
    %c63_171 = arith.constant 63 : index
    %1187 = memref.load %arg6[%c63_171] : memref<128xf32, #tpu.memory_space<smem>>
    %1188 = vector.broadcast %1187 : f32 to vector<8x128xf32>
    %1189 = arith.mulf %917, %1188 : vector<8x128xf32>
    %1190 = arith.addf %1186, %1189 : vector<8x128xf32>
    %c3_172 = arith.constant 3 : index
    %1191 = memref.load %arg7[%c3_172] : memref<8xf32, #tpu.memory_space<smem>>
    %1192 = vector.broadcast %1191 : f32 to vector<8x128xf32>
    %1193 = arith.addf %1190, %1192 : vector<8x128xf32>
    %c3_173 = arith.constant 3 : index
    %1194 = arith.index_cast %1 : i32 to index
    %c0_174 = arith.constant 0 : index
    %1195 = vector.load %arg8[%c3_173, %1194, %c0_174] : memref<8x8x128xf32, #tpu.memory_space<vmem>>, vector<1x8x128xf32>
    %1196 = vector.shape_cast %1195 : vector<1x8x128xf32> to vector<8x128xf32>
    %1197 = vector.shape_cast %1193 : vector<8x128xf32> to vector<1x8x128xf32>
    tpu.vector_store %arg8[%c3_173, %1194, %c0_174], %1197 {strides = array<i32>} : memref<8x8x128xf32, #tpu.memory_space<vmem>>, vector<1x8x128xf32>,
    %c64_175 = arith.constant 64 : index
    %1198 = memref.load %arg6[%c64_175] : memref<128xf32, #tpu.memory_space<smem>>
    %1199 = vector.broadcast %1198 : f32 to vector<8x128xf32>
    %1200 = arith.mulf %257, %1199 : vector<8x128xf32>
    %c65_176 = arith.constant 65 : index
    %1201 = memref.load %arg6[%c65_176] : memref<128xf32, #tpu.memory_space<smem>>
    %1202 = vector.broadcast %1201 : f32 to vector<8x128xf32>
    %1203 = arith.mulf %301, %1202 : vector<8x128xf32>
    %1204 = arith.addf %1200, %1203 : vector<8x128xf32>
    %c66_177 = arith.constant 66 : index
    %1205 = memref.load %arg6[%c66_177] : memref<128xf32, #tpu.memory_space<smem>>
    %1206 = vector.broadcast %1205 : f32 to vector<8x128xf32>
    %1207 = arith.mulf %345, %1206 : vector<8x128xf32>
    %1208 = arith.addf %1204, %1207 : vector<8x128xf32>
    %c67_178 = arith.constant 67 : index
    %1209 = memref.load %arg6[%c67_178] : memref<128xf32, #tpu.memory_space<smem>>
    %1210 = vector.broadcast %1209 : f32 to vector<8x128xf32>
    %1211 = arith.mulf %389, %1210 : vector<8x128xf32>
    %1212 = arith.addf %1208, %1211 : vector<8x128xf32>
    %c68_179 = arith.constant 68 : index
    %1213 = memref.load %arg6[%c68_179] : memref<128xf32, #tpu.memory_space<smem>>
    %1214 = vector.broadcast %1213 : f32 to vector<8x128xf32>
    %1215 = arith.mulf %433, %1214 : vector<8x128xf32>
    %1216 = arith.addf %1212, %1215 : vector<8x128xf32>
    %c69_180 = arith.constant 69 : index
    %1217 = memref.load %arg6[%c69_180] : memref<128xf32, #tpu.memory_space<smem>>
    %1218 = vector.broadcast %1217 : f32 to vector<8x128xf32>
    %1219 = arith.mulf %477, %1218 : vector<8x128xf32>
    %1220 = arith.addf %1216, %1219 : vector<8x128xf32>
    %c70_181 = arith.constant 70 : index
    %1221 = memref.load %arg6[%c70_181] : memref<128xf32, #tpu.memory_space<smem>>
    %1222 = vector.broadcast %1221 : f32 to vector<8x128xf32>
    %1223 = arith.mulf %521, %1222 : vector<8x128xf32>
    %1224 = arith.addf %1220, %1223 : vector<8x128xf32>
    %c71_182 = arith.constant 71 : index
    %1225 = memref.load %arg6[%c71_182] : memref<128xf32, #tpu.memory_space<smem>>
    %1226 = vector.broadcast %1225 : f32 to vector<8x128xf32>
    %1227 = arith.mulf %565, %1226 : vector<8x128xf32>
    %1228 = arith.addf %1224, %1227 : vector<8x128xf32>
    %c72_183 = arith.constant 72 : index
    %1229 = memref.load %arg6[%c72_183] : memref<128xf32, #tpu.memory_space<smem>>
    %1230 = vector.broadcast %1229 : f32 to vector<8x128xf32>
    %1231 = arith.mulf %609, %1230 : vector<8x128xf32>
    %1232 = arith.addf %1228, %1231 : vector<8x128xf32>
    %c73_184 = arith.constant 73 : index
    %1233 = memref.load %arg6[%c73_184] : memref<128xf32, #tpu.memory_space<smem>>
    %1234 = vector.broadcast %1233 : f32 to vector<8x128xf32>
    %1235 = arith.mulf %653, %1234 : vector<8x128xf32>
    %1236 = arith.addf %1232, %1235 : vector<8x128xf32>
    %c74_185 = arith.constant 74 : index
    %1237 = memref.load %arg6[%c74_185] : memref<128xf32, #tpu.memory_space<smem>>
    %1238 = vector.broadcast %1237 : f32 to vector<8x128xf32>
    %1239 = arith.mulf %697, %1238 : vector<8x128xf32>
    %1240 = arith.addf %1236, %1239 : vector<8x128xf32>
    %c75_186 = arith.constant 75 : index
    %1241 = memref.load %arg6[%c75_186] : memref<128xf32, #tpu.memory_space<smem>>
    %1242 = vector.broadcast %1241 : f32 to vector<8x128xf32>
    %1243 = arith.mulf %741, %1242 : vector<8x128xf32>
    %1244 = arith.addf %1240, %1243 : vector<8x128xf32>
    %c76_187 = arith.constant 76 : index
    %1245 = memref.load %arg6[%c76_187] : memref<128xf32, #tpu.memory_space<smem>>
    %1246 = vector.broadcast %1245 : f32 to vector<8x128xf32>
    %1247 = arith.mulf %785, %1246 : vector<8x128xf32>
    %1248 = arith.addf %1244, %1247 : vector<8x128xf32>
    %c77_188 = arith.constant 77 : index
    %1249 = memref.load %arg6[%c77_188] : memref<128xf32, #tpu.memory_space<smem>>
    %1250 = vector.broadcast %1249 : f32 to vector<8x128xf32>
    %1251 = arith.mulf %829, %1250 : vector<8x128xf32>
    %1252 = arith.addf %1248, %1251 : vector<8x128xf32>
    %c78_189 = arith.constant 78 : index
    %1253 = memref.load %arg6[%c78_189] : memref<128xf32, #tpu.memory_space<smem>>
    %1254 = vector.broadcast %1253 : f32 to vector<8x128xf32>
    %1255 = arith.mulf %873, %1254 : vector<8x128xf32>
    %1256 = arith.addf %1252, %1255 : vector<8x128xf32>
    %c79_190 = arith.constant 79 : index
    %1257 = memref.load %arg6[%c79_190] : memref<128xf32, #tpu.memory_space<smem>>
    %1258 = vector.broadcast %1257 : f32 to vector<8x128xf32>
    %1259 = arith.mulf %917, %1258 : vector<8x128xf32>
    %1260 = arith.addf %1256, %1259 : vector<8x128xf32>
    %c4_191 = arith.constant 4 : index
    %1261 = memref.load %arg7[%c4_191] : memref<8xf32, #tpu.memory_space<smem>>
    %1262 = vector.broadcast %1261 : f32 to vector<8x128xf32>
    %1263 = arith.addf %1260, %1262 : vector<8x128xf32>
    %c4_192 = arith.constant 4 : index
    %1264 = arith.index_cast %1 : i32 to index
    %c0_193 = arith.constant 0 : index
    %1265 = vector.load %arg8[%c4_192, %1264, %c0_193] : memref<8x8x128xf32, #tpu.memory_space<vmem>>, vector<1x8x128xf32>
    %1266 = vector.shape_cast %1265 : vector<1x8x128xf32> to vector<8x128xf32>
    %1267 = vector.shape_cast %1263 : vector<8x128xf32> to vector<1x8x128xf32>
    tpu.vector_store %arg8[%c4_192, %1264, %c0_193], %1267 {strides = array<i32>} : memref<8x8x128xf32, #tpu.memory_space<vmem>>, vector<1x8x128xf32>,
    %c80_194 = arith.constant 80 : index
    %1268 = memref.load %arg6[%c80_194] : memref<128xf32, #tpu.memory_space<smem>>
    %1269 = vector.broadcast %1268 : f32 to vector<8x128xf32>
    %1270 = arith.mulf %257, %1269 : vector<8x128xf32>
    %c81_195 = arith.constant 81 : index
    %1271 = memref.load %arg6[%c81_195] : memref<128xf32, #tpu.memory_space<smem>>
    %1272 = vector.broadcast %1271 : f32 to vector<8x128xf32>
    %1273 = arith.mulf %301, %1272 : vector<8x128xf32>
    %1274 = arith.addf %1270, %1273 : vector<8x128xf32>
    %c82_196 = arith.constant 82 : index
    %1275 = memref.load %arg6[%c82_196] : memref<128xf32, #tpu.memory_space<smem>>
    %1276 = vector.broadcast %1275 : f32 to vector<8x128xf32>
    %1277 = arith.mulf %345, %1276 : vector<8x128xf32>
    %1278 = arith.addf %1274, %1277 : vector<8x128xf32>
    %c83_197 = arith.constant 83 : index
    %1279 = memref.load %arg6[%c83_197] : memref<128xf32, #tpu.memory_space<smem>>
    %1280 = vector.broadcast %1279 : f32 to vector<8x128xf32>
    %1281 = arith.mulf %389, %1280 : vector<8x128xf32>
    %1282 = arith.addf %1278, %1281 : vector<8x128xf32>
    %c84_198 = arith.constant 84 : index
    %1283 = memref.load %arg6[%c84_198] : memref<128xf32, #tpu.memory_space<smem>>
    %1284 = vector.broadcast %1283 : f32 to vector<8x128xf32>
    %1285 = arith.mulf %433, %1284 : vector<8x128xf32>
    %1286 = arith.addf %1282, %1285 : vector<8x128xf32>
    %c85_199 = arith.constant 85 : index
    %1287 = memref.load %arg6[%c85_199] : memref<128xf32, #tpu.memory_space<smem>>
    %1288 = vector.broadcast %1287 : f32 to vector<8x128xf32>
    %1289 = arith.mulf %477, %1288 : vector<8x128xf32>
    %1290 = arith.addf %1286, %1289 : vector<8x128xf32>
    %c86_200 = arith.constant 86 : index
    %1291 = memref.load %arg6[%c86_200] : memref<128xf32, #tpu.memory_space<smem>>
    %1292 = vector.broadcast %1291 : f32 to vector<8x128xf32>
    %1293 = arith.mulf %521, %1292 : vector<8x128xf32>
    %1294 = arith.addf %1290, %1293 : vector<8x128xf32>
    %c87_201 = arith.constant 87 : index
    %1295 = memref.load %arg6[%c87_201] : memref<128xf32, #tpu.memory_space<smem>>
    %1296 = vector.broadcast %1295 : f32 to vector<8x128xf32>
    %1297 = arith.mulf %565, %1296 : vector<8x128xf32>
    %1298 = arith.addf %1294, %1297 : vector<8x128xf32>
    %c88_202 = arith.constant 88 : index
    %1299 = memref.load %arg6[%c88_202] : memref<128xf32, #tpu.memory_space<smem>>
    %1300 = vector.broadcast %1299 : f32 to vector<8x128xf32>
    %1301 = arith.mulf %609, %1300 : vector<8x128xf32>
    %1302 = arith.addf %1298, %1301 : vector<8x128xf32>
    %c89_203 = arith.constant 89 : index
    %1303 = memref.load %arg6[%c89_203] : memref<128xf32, #tpu.memory_space<smem>>
    %1304 = vector.broadcast %1303 : f32 to vector<8x128xf32>
    %1305 = arith.mulf %653, %1304 : vector<8x128xf32>
    %1306 = arith.addf %1302, %1305 : vector<8x128xf32>
    %c90_204 = arith.constant 90 : index
    %1307 = memref.load %arg6[%c90_204] : memref<128xf32, #tpu.memory_space<smem>>
    %1308 = vector.broadcast %1307 : f32 to vector<8x128xf32>
    %1309 = arith.mulf %697, %1308 : vector<8x128xf32>
    %1310 = arith.addf %1306, %1309 : vector<8x128xf32>
    %c91_205 = arith.constant 91 : index
    %1311 = memref.load %arg6[%c91_205] : memref<128xf32, #tpu.memory_space<smem>>
    %1312 = vector.broadcast %1311 : f32 to vector<8x128xf32>
    %1313 = arith.mulf %741, %1312 : vector<8x128xf32>
    %1314 = arith.addf %1310, %1313 : vector<8x128xf32>
    %c92_206 = arith.constant 92 : index
    %1315 = memref.load %arg6[%c92_206] : memref<128xf32, #tpu.memory_space<smem>>
    %1316 = vector.broadcast %1315 : f32 to vector<8x128xf32>
    %1317 = arith.mulf %785, %1316 : vector<8x128xf32>
    %1318 = arith.addf %1314, %1317 : vector<8x128xf32>
    %c93_207 = arith.constant 93 : index
    %1319 = memref.load %arg6[%c93_207] : memref<128xf32, #tpu.memory_space<smem>>
    %1320 = vector.broadcast %1319 : f32 to vector<8x128xf32>
    %1321 = arith.mulf %829, %1320 : vector<8x128xf32>
    %1322 = arith.addf %1318, %1321 : vector<8x128xf32>
    %c94_208 = arith.constant 94 : index
    %1323 = memref.load %arg6[%c94_208] : memref<128xf32, #tpu.memory_space<smem>>
    %1324 = vector.broadcast %1323 : f32 to vector<8x128xf32>
    %1325 = arith.mulf %873, %1324 : vector<8x128xf32>
    %1326 = arith.addf %1322, %1325 : vector<8x128xf32>
    %c95_209 = arith.constant 95 : index
    %1327 = memref.load %arg6[%c95_209] : memref<128xf32, #tpu.memory_space<smem>>
    %1328 = vector.broadcast %1327 : f32 to vector<8x128xf32>
    %1329 = arith.mulf %917, %1328 : vector<8x128xf32>
    %1330 = arith.addf %1326, %1329 : vector<8x128xf32>
    %c5_210 = arith.constant 5 : index
    %1331 = memref.load %arg7[%c5_210] : memref<8xf32, #tpu.memory_space<smem>>
    %1332 = vector.broadcast %1331 : f32 to vector<8x128xf32>
    %1333 = arith.addf %1330, %1332 : vector<8x128xf32>
    %c5_211 = arith.constant 5 : index
    %1334 = arith.index_cast %1 : i32 to index
    %c0_212 = arith.constant 0 : index
    %1335 = vector.load %arg8[%c5_211, %1334, %c0_212] : memref<8x8x128xf32, #tpu.memory_space<vmem>>, vector<1x8x128xf32>
    %1336 = vector.shape_cast %1335 : vector<1x8x128xf32> to vector<8x128xf32>
    %1337 = vector.shape_cast %1333 : vector<8x128xf32> to vector<1x8x128xf32>
    tpu.vector_store %arg8[%c5_211, %1334, %c0_212], %1337 {strides = array<i32>} : memref<8x8x128xf32, #tpu.memory_space<vmem>>, vector<1x8x128xf32>,
    %c96_213 = arith.constant 96 : index
    %1338 = memref.load %arg6[%c96_213] : memref<128xf32, #tpu.memory_space<smem>>
    %1339 = vector.broadcast %1338 : f32 to vector<8x128xf32>
    %1340 = arith.mulf %257, %1339 : vector<8x128xf32>
    %c97_214 = arith.constant 97 : index
    %1341 = memref.load %arg6[%c97_214] : memref<128xf32, #tpu.memory_space<smem>>
    %1342 = vector.broadcast %1341 : f32 to vector<8x128xf32>
    %1343 = arith.mulf %301, %1342 : vector<8x128xf32>
    %1344 = arith.addf %1340, %1343 : vector<8x128xf32>
    %c98_215 = arith.constant 98 : index
    %1345 = memref.load %arg6[%c98_215] : memref<128xf32, #tpu.memory_space<smem>>
    %1346 = vector.broadcast %1345 : f32 to vector<8x128xf32>
    %1347 = arith.mulf %345, %1346 : vector<8x128xf32>
    %1348 = arith.addf %1344, %1347 : vector<8x128xf32>
    %c99_216 = arith.constant 99 : index
    %1349 = memref.load %arg6[%c99_216] : memref<128xf32, #tpu.memory_space<smem>>
    %1350 = vector.broadcast %1349 : f32 to vector<8x128xf32>
    %1351 = arith.mulf %389, %1350 : vector<8x128xf32>
    %1352 = arith.addf %1348, %1351 : vector<8x128xf32>
    %c100_217 = arith.constant 100 : index
    %1353 = memref.load %arg6[%c100_217] : memref<128xf32, #tpu.memory_space<smem>>
    %1354 = vector.broadcast %1353 : f32 to vector<8x128xf32>
    %1355 = arith.mulf %433, %1354 : vector<8x128xf32>
    %1356 = arith.addf %1352, %1355 : vector<8x128xf32>
    %c101_218 = arith.constant 101 : index
    %1357 = memref.load %arg6[%c101_218] : memref<128xf32, #tpu.memory_space<smem>>
    %1358 = vector.broadcast %1357 : f32 to vector<8x128xf32>
    %1359 = arith.mulf %477, %1358 : vector<8x128xf32>
    %1360 = arith.addf %1356, %1359 : vector<8x128xf32>
    %c102_219 = arith.constant 102 : index
    %1361 = memref.load %arg6[%c102_219] : memref<128xf32, #tpu.memory_space<smem>>
    %1362 = vector.broadcast %1361 : f32 to vector<8x128xf32>
    %1363 = arith.mulf %521, %1362 : vector<8x128xf32>
    %1364 = arith.addf %1360, %1363 : vector<8x128xf32>
    %c103_220 = arith.constant 103 : index
    %1365 = memref.load %arg6[%c103_220] : memref<128xf32, #tpu.memory_space<smem>>
    %1366 = vector.broadcast %1365 : f32 to vector<8x128xf32>
    %1367 = arith.mulf %565, %1366 : vector<8x128xf32>
    %1368 = arith.addf %1364, %1367 : vector<8x128xf32>
    %c104_221 = arith.constant 104 : index
    %1369 = memref.load %arg6[%c104_221] : memref<128xf32, #tpu.memory_space<smem>>
    %1370 = vector.broadcast %1369 : f32 to vector<8x128xf32>
    %1371 = arith.mulf %609, %1370 : vector<8x128xf32>
    %1372 = arith.addf %1368, %1371 : vector<8x128xf32>
    %c105_222 = arith.constant 105 : index
    %1373 = memref.load %arg6[%c105_222] : memref<128xf32, #tpu.memory_space<smem>>
    %1374 = vector.broadcast %1373 : f32 to vector<8x128xf32>
    %1375 = arith.mulf %653, %1374 : vector<8x128xf32>
    %1376 = arith.addf %1372, %1375 : vector<8x128xf32>
    %c106_223 = arith.constant 106 : index
    %1377 = memref.load %arg6[%c106_223] : memref<128xf32, #tpu.memory_space<smem>>
    %1378 = vector.broadcast %1377 : f32 to vector<8x128xf32>
    %1379 = arith.mulf %697, %1378 : vector<8x128xf32>
    %1380 = arith.addf %1376, %1379 : vector<8x128xf32>
    %c107_224 = arith.constant 107 : index
    %1381 = memref.load %arg6[%c107_224] : memref<128xf32, #tpu.memory_space<smem>>
    %1382 = vector.broadcast %1381 : f32 to vector<8x128xf32>
    %1383 = arith.mulf %741, %1382 : vector<8x128xf32>
    %1384 = arith.addf %1380, %1383 : vector<8x128xf32>
    %c108_225 = arith.constant 108 : index
    %1385 = memref.load %arg6[%c108_225] : memref<128xf32, #tpu.memory_space<smem>>
    %1386 = vector.broadcast %1385 : f32 to vector<8x128xf32>
    %1387 = arith.mulf %785, %1386 : vector<8x128xf32>
    %1388 = arith.addf %1384, %1387 : vector<8x128xf32>
    %c109_226 = arith.constant 109 : index
    %1389 = memref.load %arg6[%c109_226] : memref<128xf32, #tpu.memory_space<smem>>
    %1390 = vector.broadcast %1389 : f32 to vector<8x128xf32>
    %1391 = arith.mulf %829, %1390 : vector<8x128xf32>
    %1392 = arith.addf %1388, %1391 : vector<8x128xf32>
    %c110_227 = arith.constant 110 : index
    %1393 = memref.load %arg6[%c110_227] : memref<128xf32, #tpu.memory_space<smem>>
    %1394 = vector.broadcast %1393 : f32 to vector<8x128xf32>
    %1395 = arith.mulf %873, %1394 : vector<8x128xf32>
    %1396 = arith.addf %1392, %1395 : vector<8x128xf32>
    %c111_228 = arith.constant 111 : index
    %1397 = memref.load %arg6[%c111_228] : memref<128xf32, #tpu.memory_space<smem>>
    %1398 = vector.broadcast %1397 : f32 to vector<8x128xf32>
    %1399 = arith.mulf %917, %1398 : vector<8x128xf32>
    %1400 = arith.addf %1396, %1399 : vector<8x128xf32>
    %c6_229 = arith.constant 6 : index
    %1401 = memref.load %arg7[%c6_229] : memref<8xf32, #tpu.memory_space<smem>>
    %1402 = vector.broadcast %1401 : f32 to vector<8x128xf32>
    %1403 = arith.addf %1400, %1402 : vector<8x128xf32>
    %c6_230 = arith.constant 6 : index
    %1404 = arith.index_cast %1 : i32 to index
    %c0_231 = arith.constant 0 : index
    %1405 = vector.load %arg8[%c6_230, %1404, %c0_231] : memref<8x8x128xf32, #tpu.memory_space<vmem>>, vector<1x8x128xf32>
    %1406 = vector.shape_cast %1405 : vector<1x8x128xf32> to vector<8x128xf32>
    %1407 = vector.shape_cast %1403 : vector<8x128xf32> to vector<1x8x128xf32>
    tpu.vector_store %arg8[%c6_230, %1404, %c0_231], %1407 {strides = array<i32>} : memref<8x8x128xf32, #tpu.memory_space<vmem>>, vector<1x8x128xf32>,
    %c112_232 = arith.constant 112 : index
    %1408 = memref.load %arg6[%c112_232] : memref<128xf32, #tpu.memory_space<smem>>
    %1409 = vector.broadcast %1408 : f32 to vector<8x128xf32>
    %1410 = arith.mulf %257, %1409 : vector<8x128xf32>
    %c113_233 = arith.constant 113 : index
    %1411 = memref.load %arg6[%c113_233] : memref<128xf32, #tpu.memory_space<smem>>
    %1412 = vector.broadcast %1411 : f32 to vector<8x128xf32>
    %1413 = arith.mulf %301, %1412 : vector<8x128xf32>
    %1414 = arith.addf %1410, %1413 : vector<8x128xf32>
    %c114_234 = arith.constant 114 : index
    %1415 = memref.load %arg6[%c114_234] : memref<128xf32, #tpu.memory_space<smem>>
    %1416 = vector.broadcast %1415 : f32 to vector<8x128xf32>
    %1417 = arith.mulf %345, %1416 : vector<8x128xf32>
    %1418 = arith.addf %1414, %1417 : vector<8x128xf32>
    %c115_235 = arith.constant 115 : index
    %1419 = memref.load %arg6[%c115_235] : memref<128xf32, #tpu.memory_space<smem>>
    %1420 = vector.broadcast %1419 : f32 to vector<8x128xf32>
    %1421 = arith.mulf %389, %1420 : vector<8x128xf32>
    %1422 = arith.addf %1418, %1421 : vector<8x128xf32>
    %c116_236 = arith.constant 116 : index
    %1423 = memref.load %arg6[%c116_236] : memref<128xf32, #tpu.memory_space<smem>>
    %1424 = vector.broadcast %1423 : f32 to vector<8x128xf32>
    %1425 = arith.mulf %433, %1424 : vector<8x128xf32>
    %1426 = arith.addf %1422, %1425 : vector<8x128xf32>
    %c117_237 = arith.constant 117 : index
    %1427 = memref.load %arg6[%c117_237] : memref<128xf32, #tpu.memory_space<smem>>
    %1428 = vector.broadcast %1427 : f32 to vector<8x128xf32>
    %1429 = arith.mulf %477, %1428 : vector<8x128xf32>
    %1430 = arith.addf %1426, %1429 : vector<8x128xf32>
    %c118_238 = arith.constant 118 : index
    %1431 = memref.load %arg6[%c118_238] : memref<128xf32, #tpu.memory_space<smem>>
    %1432 = vector.broadcast %1431 : f32 to vector<8x128xf32>
    %1433 = arith.mulf %521, %1432 : vector<8x128xf32>
    %1434 = arith.addf %1430, %1433 : vector<8x128xf32>
    %c119_239 = arith.constant 119 : index
    %1435 = memref.load %arg6[%c119_239] : memref<128xf32, #tpu.memory_space<smem>>
    %1436 = vector.broadcast %1435 : f32 to vector<8x128xf32>
    %1437 = arith.mulf %565, %1436 : vector<8x128xf32>
    %1438 = arith.addf %1434, %1437 : vector<8x128xf32>
    %c120_240 = arith.constant 120 : index
    %1439 = memref.load %arg6[%c120_240] : memref<128xf32, #tpu.memory_space<smem>>
    %1440 = vector.broadcast %1439 : f32 to vector<8x128xf32>
    %1441 = arith.mulf %609, %1440 : vector<8x128xf32>
    %1442 = arith.addf %1438, %1441 : vector<8x128xf32>
    %c121_241 = arith.constant 121 : index
    %1443 = memref.load %arg6[%c121_241] : memref<128xf32, #tpu.memory_space<smem>>
    %1444 = vector.broadcast %1443 : f32 to vector<8x128xf32>
    %1445 = arith.mulf %653, %1444 : vector<8x128xf32>
    %1446 = arith.addf %1442, %1445 : vector<8x128xf32>
    %c122_242 = arith.constant 122 : index
    %1447 = memref.load %arg6[%c122_242] : memref<128xf32, #tpu.memory_space<smem>>
    %1448 = vector.broadcast %1447 : f32 to vector<8x128xf32>
    %1449 = arith.mulf %697, %1448 : vector<8x128xf32>
    %1450 = arith.addf %1446, %1449 : vector<8x128xf32>
    %c123_243 = arith.constant 123 : index
    %1451 = memref.load %arg6[%c123_243] : memref<128xf32, #tpu.memory_space<smem>>
    %1452 = vector.broadcast %1451 : f32 to vector<8x128xf32>
    %1453 = arith.mulf %741, %1452 : vector<8x128xf32>
    %1454 = arith.addf %1450, %1453 : vector<8x128xf32>
    %c124_244 = arith.constant 124 : index
    %1455 = memref.load %arg6[%c124_244] : memref<128xf32, #tpu.memory_space<smem>>
    %1456 = vector.broadcast %1455 : f32 to vector<8x128xf32>
    %1457 = arith.mulf %785, %1456 : vector<8x128xf32>
    %1458 = arith.addf %1454, %1457 : vector<8x128xf32>
    %c125_245 = arith.constant 125 : index
    %1459 = memref.load %arg6[%c125_245] : memref<128xf32, #tpu.memory_space<smem>>
    %1460 = vector.broadcast %1459 : f32 to vector<8x128xf32>
    %1461 = arith.mulf %829, %1460 : vector<8x128xf32>
    %1462 = arith.addf %1458, %1461 : vector<8x128xf32>
    %c126_246 = arith.constant 126 : index
    %1463 = memref.load %arg6[%c126_246] : memref<128xf32, #tpu.memory_space<smem>>
    %1464 = vector.broadcast %1463 : f32 to vector<8x128xf32>
    %1465 = arith.mulf %873, %1464 : vector<8x128xf32>
    %1466 = arith.addf %1462, %1465 : vector<8x128xf32>
    %c127_247 = arith.constant 127 : index
    %1467 = memref.load %arg6[%c127_247] : memref<128xf32, #tpu.memory_space<smem>>
    %1468 = vector.broadcast %1467 : f32 to vector<8x128xf32>
    %1469 = arith.mulf %917, %1468 : vector<8x128xf32>
    %1470 = arith.addf %1466, %1469 : vector<8x128xf32>
    %c7_248 = arith.constant 7 : index
    %1471 = memref.load %arg7[%c7_248] : memref<8xf32, #tpu.memory_space<smem>>
    %1472 = vector.broadcast %1471 : f32 to vector<8x128xf32>
    %1473 = arith.addf %1470, %1472 : vector<8x128xf32>
    %c7_249 = arith.constant 7 : index
    %1474 = arith.index_cast %1 : i32 to index
    %c0_250 = arith.constant 0 : index
    %1475 = vector.load %arg8[%c7_249, %1474, %c0_250] : memref<8x8x128xf32, #tpu.memory_space<vmem>>, vector<1x8x128xf32>
    %1476 = vector.shape_cast %1475 : vector<1x8x128xf32> to vector<8x128xf32>
    %1477 = vector.shape_cast %1473 : vector<8x128xf32> to vector<1x8x128xf32>
    tpu.vector_store %arg8[%c7_249, %1474, %c0_250], %1477 {strides = array<i32>} : memref<8x8x128xf32, #tpu.memory_space<vmem>>, vector<1x8x128xf32>,
    %c1_i32 = arith.constant 1 : i32
    return
  }
  func.func @transform_0(%arg0: i32) -> (i32, i32, i32) {
    %c0_i32 = arith.constant 0 : i32
    %c0_i32_0 = arith.constant 0 : i32
    %c0_i32_1 = arith.constant 0 : i32
    return %c0_i32, %arg0, %c0_i32_0 : i32, i32, i32
  }
  func.func @transform_1(%arg0: i32) -> i32 {
    %c0_i32 = arith.constant 0 : i32
    %c0_i32_0 = arith.constant 0 : i32
    return %c0_i32 : i32
  }
  func.func @transform_2(%arg0: i32) -> i32 {
    %c0_i32 = arith.constant 0 : i32
    %c0_i32_0 = arith.constant 0 : i32
    return %c0_i32 : i32
  }
  func.func @transform_3(%arg0: i32) -> i32 {
    %c0_i32 = arith.constant 0 : i32
    %c0_i32_0 = arith.constant 0 : i32
    return %c0_i32 : i32
  }
  func.func @transform_4(%arg0: i32) -> i32 {
    %c0_i32 = arith.constant 0 : i32
    %c0_i32_0 = arith.constant 0 : i32
    return %c0_i32 : i32
  }
  func.func @transform_5(%arg0: i32) -> i32 {
    %c0_i32 = arith.constant 0 : i32
    %c0_i32_0 = arith.constant 0 : i32
    return %c0_i32 : i32
  }
  func.func @transform_6(%arg0: i32) -> i32 {
    %c0_i32 = arith.constant 0 : i32
    %c0_i32_0 = arith.constant 0 : i32
    return %c0_i32 : i32
  }
  func.func @transform_7(%arg0: i32) -> (i32, i32, i32) {
    %c0_i32 = arith.constant 0 : i32
    %c0_i32_0 = arith.constant 0 : i32
    %c0_i32_1 = arith.constant 0 : i32
    return %c0_i32, %arg0, %c0_i32_0 : i32, i32, i32
  }
}

</mosaic_0001>

<llo_original>
// kernel: tpu_custom_call.1
$region0: #{tpu_custom_call.1}
  #allocation0 [shape = 'u32[]', space=smem, size = 0x4, offset = 0x4, fixed_abs, tag = 'smem constant byte address 0x4 - core index']
  #allocation1 [shape = 'u32[144,128]{1,0:T(1,128)}', space=vmem, size = 0x12000, scoped, tag = 'internal scratch']
  %s0 = inlined_call_operand.hbm [shape: f32[4,8,128], index: 0, kind: input, shape index: {}]
  %s1 = inlined_call_operand.vmem [shape: f32[40], index: 1, kind: input, shape index: {}]
  %s2 = inlined_call_operand.hbm [shape: f32[10], index: 2, kind: input, shape index: {}]
  %s3 = inlined_call_operand.vmem [shape: f32[160], index: 3, kind: input, shape index: {}]
  %s4 = inlined_call_operand.vmem [shape: f32[16], index: 4, kind: input, shape index: {}]
  %s5 = inlined_call_operand.vmem [shape: f32[128], index: 5, kind: input, shape index: {}]
  %s6 = inlined_call_operand.vmem [shape: f32[8], index: 6, kind: input, shape index: {}]
  %s7 = inlined_call_operand.hbm [shape: f32[8,8,128], index: 7, kind: output, shape index: {}]
  %s8 = sld [smem:[#allocation0]]
  $region66: #{tpu_custom_call.1} parent=0
    _
  %s10 = ssub.s32 1, %s8
  %s11 = scalar_select 0, %s10, %s8
  $region1: #{tpu_custom_call.1} parent=0
    #allocation2 [shape = 'u8[16384]{0}', space=vmem, size = 0x4000, scoped, tag = 'input window, operand 0, single buffered']
    #allocation3 [shape = 's32[1]{0}', space=sflag, size = 0x4, scoped, tag = 'scoped memory for tpu_custom_call.1']
    #allocation4 [shape = 's32[1]{0}', space=sflag, size = 0x4, scoped, tag = 'scoped memory for tpu_custom_call.1']
    #allocation5 [shape = 's32[1]{0}', space=sflag, size = 0x4, scoped, tag = 'scoped memory for tpu_custom_call.1']
    #allocation6 [shape = 's32[1]{0}', space=sflag, size = 0x4, scoped, tag = 'scoped memory for tpu_custom_call.1']
    #allocation7 [shape = 'u8[512]{0}', space=smem, size = 0x200, scoped, tag = 'input window, operand 1, single buffered']
    #allocation8 [shape = 'u8[512]{0}', space=smem, size = 0x200, scoped, tag = 'input window, operand 2, single buffered']
    #allocation9 [shape = 'u8[1024]{0}', space=smem, size = 0x400, scoped, tag = 'input window, operand 3, single buffered']
    #allocation10 [shape = 's32[1]{0}', space=sflag, size = 0x4, scoped, tag = 'scoped memory for tpu_custom_call.1']
    #allocation11 [shape = 'u8[512]{0}', space=smem, size = 0x200, scoped, tag = 'input window, operand 4, single buffered']
    #allocation12 [shape = 'u8[512]{0}', space=smem, size = 0x200, scoped, tag = 'input window, operand 5, single buffered']
    #allocation13 [shape = 's32[1]{0}', space=sflag, size = 0x4, scoped, tag = 'scoped memory for tpu_custom_call.1']
    #allocation14 [shape = 'u8[512]{0}', space=smem, size = 0x200, scoped, tag = 'input window, operand 6, single buffered']
    #allocation15 [shape = 'u8[32768]{0}', space=vmem, size = 0x8000, scoped, tag = 'output window, operand 0, single buffered']
    %12 = vsyncpa [#allocation3], 0
    %13 = vsyncpa [#allocation6], 0
    %14 = vsyncpa [#allocation5], 0
    %15 = vsyncpa [#allocation10], 0
    %16 = vsyncpa [#allocation13], 0
    %17 = vsyncpa [#allocation4], 0
    // Predicated region
    $region2: #{tpu_custom_call.1} parent=1 // pred_check
      _
    $region3: #{tpu_custom_call.1} parent=1 // pred_check_branch
      %19 = sbr.rel (0) target = $region5
    $region4: #{tpu_custom_call.1} parent=1 // pred_region
      %s21 = ssub.s32 512, 512
      %22 = vsyncadd [#allocation3], %s21
      %s23 = sshll.u32 [#allocation2], 4
      %s24 = int_to_ptr.vmem [resolvable:$true] %s23
      %29 = dma.hbm_to_vmem [thread:$0]  %s0, 512, %s24, [#allocation3], 128, 128, 8
    $region5: #{tpu_custom_call.1} parent=1 // pred_fallthru
      _
    // Predicated region
    $region6: #{tpu_custom_call.1} parent=1 // pred_check
      _
    $region7: #{tpu_custom_call.1} parent=1 // pred_check_branch
      %31 = sbr.rel (0) target = $region9
    $region8: #{tpu_custom_call.1} parent=1 // pred_region
      %s33 = ssub.s32 16, 16
      %34 = vsyncadd [#allocation6], %s33
      %s36 = sshll.u32 %s1, 4
      %s37 = int_to_ptr.vmem [resolvable:$true] %s36
      %39 = dma.vmem_to_smem %s37, 16, [#allocation7], [#allocation6]
    $region9: #{tpu_custom_call.1} parent=1 // pred_fallthru
      _
    // Predicated region
    $region10: #{tpu_custom_call.1} parent=1 // pred_check
      _
    $region11: #{tpu_custom_call.1} parent=1 // pred_check_branch
      %41 = sbr.rel (0) target = $region13
    $region12: #{tpu_custom_call.1} parent=1 // pred_region
      %s43 = ssub.s32 16, 16
      %44 = vsyncadd [#allocation5], %s43
      %47 = dma.hbm_to_smem %s2, 16, [#allocation8], [#allocation5]
    $region13: #{tpu_custom_call.1} parent=1 // pred_fallthru
      _
    // Predicated region
    $region14: #{tpu_custom_call.1} parent=1 // pred_check
      _
    $region15: #{tpu_custom_call.1} parent=1 // pred_check_branch
      %49 = sbr.rel (0) target = $region17
    $region16: #{tpu_custom_call.1} parent=1 // pred_region
      %s51 = ssub.s32 32, 32
      %52 = vsyncadd [#allocation10], %s51
      %s54 = sshll.u32 %s3, 4
      %s55 = int_to_ptr.vmem [resolvable:$true] %s54
      %57 = dma.vmem_to_smem %s55, 32, [#allocation9], [#allocation10]
    $region17: #{tpu_custom_call.1} parent=1 // pred_fallthru
      _
    // Predicated region
    $region18: #{tpu_custom_call.1} parent=1 // pred_check
      _
    $region19: #{tpu_custom_call.1} parent=1 // pred_check_branch
      %59 = sbr.rel (0) target = $region21
    $region20: #{tpu_custom_call.1} parent=1 // pred_region
      %s61 = ssub.s32 16, 16
      %62 = vsyncadd [#allocation10], %s61
      %s64 = sshll.u32 %s4, 4
      %s65 = int_to_ptr.vmem [resolvable:$true] %s64
      %67 = dma.vmem_to_smem %s65, 16, [#allocation11], [#allocation10]
    $region21: #{tpu_custom_call.1} parent=1 // pred_fallthru
      _
    // Predicated region
    $region22: #{tpu_custom_call.1} parent=1 // pred_check
      _
    $region23: #{tpu_custom_call.1} parent=1 // pred_check_branch
      %69 = sbr.rel (0) target = $region25
    $region24: #{tpu_custom_call.1} parent=1 // pred_region
      %s71 = ssub.s32 16, 16
      %72 = vsyncadd [#allocation13], %s71
      %s74 = sshll.u32 %s5, 4
      %s75 = int_to_ptr.vmem [resolvable:$true] %s74
      %77 = dma.vmem_to_smem %s75, 16, [#allocation12], [#allocation13]
    $region25: #{tpu_custom_call.1} parent=1 // pred_fallthru
      _
    // Predicated region
    $region26: #{tpu_custom_call.1} parent=1 // pred_check
      _
    $region27: #{tpu_custom_call.1} parent=1 // pred_check_branch
      %79 = sbr.rel (0) target = $region29
    $region28: #{tpu_custom_call.1} parent=1 // pred_region
      %s81 = ssub.s32 16, 16
      %82 = vsyncadd [#allocation13], %s81
      %s84 = sshll.u32 %s6, 4
      %s85 = int_to_ptr.vmem [resolvable:$true] %s84
      %87 = dma.vmem_to_smem %s85, 16, [#allocation14], [#allocation13]
    $region29: #{tpu_custom_call.1} parent=1 // pred_fallthru
      _
    // Predicated region
    $region30: #{tpu_custom_call.1} parent=1 // pred_check
      _
    $region31: #{tpu_custom_call.1} parent=1 // pred_check_branch
      %89 = sbr.rel (0) target = $region33
    $region32: #{tpu_custom_call.1} parent=1 // pred_region
      %90 = dma.done [#allocation3], 512
    $region33: #{tpu_custom_call.1} parent=1 // pred_fallthru
      _
    // Predicated region
    $region34: #{tpu_custom_call.1} parent=1 // pred_check
      _
    $region35: #{tpu_custom_call.1} parent=1 // pred_check_branch
      %92 = sbr.rel (0) target = $region37
    $region36: #{tpu_custom_call.1} parent=1 // pred_region
      %93 = dma.done [#allocation6], 16
    $region37: #{tpu_custom_call.1} parent=1 // pred_fallthru
      _
    // Predicated region
    $region38: #{tpu_custom_call.1} parent=1 // pred_check
      _
    $region39: #{tpu_custom_call.1} parent=1 // pred_check_branch
      %95 = sbr.rel (0) target = $region41
    $region40: #{tpu_custom_call.1} parent=1 // pred_region
      %96 = dma.done [#allocation5], 16
    $region41: #{tpu_custom_call.1} parent=1 // pred_fallthru
      _
    // Predicated region
    $region42: #{tpu_custom_call.1} parent=1 // pred_check
      _
    $region43: #{tpu_custom_call.1} parent=1 // pred_check_branch
      %98 = sbr.rel (0) target = $region45
    $region44: #{tpu_custom_call.1} parent=1 // pred_region
      %99 = dma.done [#allocation10], 32
    $region45: #{tpu_custom_call.1} parent=1 // pred_fallthru
      _
    // Predicated region
    $region46: #{tpu_custom_call.1} parent=1 // pred_check
      _
    $region47: #{tpu_custom_call.1} parent=1 // pred_check_branch
      %101 = sbr.rel (0) target = $region49
    $region48: #{tpu_custom_call.1} parent=1 // pred_region
      %102 = dma.done [#allocation10], 16
    $region49: #{tpu_custom_call.1} parent=1 // pred_fallthru
      _
    // Predicated region
    $region50: #{tpu_custom_call.1} parent=1 // pred_check
      _
    $region51: #{tpu_custom_call.1} parent=1 // pred_check_branch
      %104 = sbr.rel (0) target = $region53
    $region52: #{tpu_custom_call.1} parent=1 // pred_region
      %105 = dma.done [#allocation13], 16
    $region53: #{tpu_custom_call.1} parent=1 // pred_fallthru
      _
    // Predicated region
    $region54: #{tpu_custom_call.1} parent=1 // pred_check
      _
    $region55: #{tpu_custom_call.1} parent=1 // pred_check_branch
      %107 = sbr.rel (0) target = $region57
    $region56: #{tpu_custom_call.1} parent=1 // pred_region
      %108 = dma.done [#allocation13], 16
    $region57: #{tpu_custom_call.1} parent=1 // pred_fallthru
      _
    %109 = sfence
    %v110 = vld [vmem:[#allocation2] sm:$0xff]
    %s111 = sadd.s32 0, 8
    %s112 = scalar_lea.vmem [#allocation2], %s111
    %v113 = vld [vmem:[%s112] sm:$0xff]
    %s114 = sadd.s32 0, 16
    %s115 = scalar_lea.vmem [#allocation2], %s114
    %v116 = vld [vmem:[%s115] sm:$0xff]
    %s117 = sadd.s32 0, 24
    %s118 = scalar_lea.vmem [#allocation2], %s117
    %v119 = vld [vmem:[%s118] sm:$0xff]
    %s120 = sld [smem:[#allocation7]]
    %v121 = vstv %s120
    %v122 = vmul.f32 %v110, %v121
    %s123 = sld [smem:[#allocation7 + $0x1]]
    %v124 = vstv %s123
    %v125 = vmul.f32 %v113, %v124
    %v126 = vadd.f32 %v122, %v125
    %s127 = sld [smem:[#allocation7 + $0x2]]
    %v128 = vstv %s127
    %v129 = vmul.f32 %v116, %v128
    %v130 = vadd.f32 %v126, %v129
    %s131 = sld [smem:[#allocation7 + $0x3]]
    %v132 = vstv %s131
    %v133 = vmul.f32 %v119, %v132
    %v134 = vadd.f32 %v130, %v133
    %s135 = sld [smem:[#allocation8]]
    %v136 = vstv %s135
    %v137 = vadd.f32 %v134, %v136
    %v138 = vmax.f32 %v137, 0.0
    %s139 = sld [smem:[#allocation7 + $0x4]]
    %v140 = vstv %s139
    %v141 = vmul.f32 %v110, %v140
    %s142 = sld [smem:[#allocation7 + $0x5]]
    %v143 = vstv %s142
    %v144 = vmul.f32 %v113, %v143
    %v145 = vadd.f32 %v141, %v144
    %s146 = sld [smem:[#allocation7 + $0x6]]
    %v147 = vstv %s146
    %v148 = vmul.f32 %v116, %v147
    %v149 = vadd.f32 %v145, %v148
    %s150 = sld [smem:[#allocation7 + $0x7]]
    %v151 = vstv %s150
    %v152 = vmul.f32 %v119, %v151
    %v153 = vadd.f32 %v149, %v152
    %s154 = sld [smem:[#allocation8 + $0x1]]
    %v155 = vstv %s154
    %v156 = vadd.f32 %v153, %v155
    %v157 = vmax.f32 %v156, 0.0
    %s158 = sld [smem:[#allocation7 + $0x8]]
    %v159 = vstv %s158
    %v160 = vmul.f32 %v110, %v159
    %s161 = sld [smem:[#allocation7 + $0x9]]
    %v162 = vstv %s161
    %v163 = vmul.f32 %v113, %v162
    %v164 = vadd.f32 %v160, %v163
    %s165 = sld [smem:[#allocation7 + $0xa]]
    %v166 = vstv %s165
    %v167 = vmul.f32 %v116, %v166
    %v168 = vadd.f32 %v164, %v167
    %s169 = sld [smem:[#allocation7 + $0xb]]
    %v170 = vstv %s169
    %v171 = vmul.f32 %v119, %v170
    %v172 = vadd.f32 %v168, %v171
    %s173 = sld [smem:[#allocation8 + $0x2]]
    %v174 = vstv %s173
    %v175 = vadd.f32 %v172, %v174
    %v176 = vmax.f32 %v175, 0.0
    %s177 = sld [smem:[#allocation7 + $0xc]]
    %v178 = vstv %s177
    %v179 = vmul.f32 %v110, %v178
    %s180 = sld [smem:[#allocation7 + $0xd]]
    %v181 = vstv %s180
    %v182 = vmul.f32 %v113, %v181
    %v183 = vadd.f32 %v179, %v182
    %s184 = sld [smem:[#allocation7 + $0xe]]
    %v185 = vstv %s184
    %v186 = vmul.f32 %v116, %v185
    %v187 = vadd.f32 %v183, %v186
    %s188 = sld [smem:[#allocation7 + $0xf]]
    %v189 = vstv %s188
    %v190 = vmul.f32 %v119, %v189
    %v191 = vadd.f32 %v187, %v190
    %s192 = sld [smem:[#allocation8 + $0x3]]
    %v193 = vstv %s192
    %v194 = vadd.f32 %v191, %v193
    %v195 = vmax.f32 %v194, 0.0
    %s196 = sld [smem:[#allocation7 + $0x10]]
    %v197 = vstv %s196
    %v198 = vmul.f32 %v110, %v197
    %s199 = sld [smem:[#allocation7 + $0x11]]
    %v200 = vstv %s199
    %v201 = vmul.f32 %v113, %v200
    %v202 = vadd.f32 %v198, %v201
    %s203 = sld [smem:[#allocation7 + $0x12]]
    %v204 = vstv %s203
    %v205 = vmul.f32 %v116, %v204
    %v206 = vadd.f32 %v202, %v205
    %s207 = sld [smem:[#allocation7 + $0x13]]
    %v208 = vstv %s207
    %v209 = vmul.f32 %v119, %v208
    %v210 = vadd.f32 %v206, %v209
    %s211 = sld [smem:[#allocation8 + $0x4]]
    %v212 = vstv %s211
    %v213 = vadd.f32 %v210, %v212
    %v214 = vmax.f32 %v213, 0.0
    %s215 = sld [smem:[#allocation7 + $0x14]]
    %v216 = vstv %s215
    %v217 = vmul.f32 %v110, %v216
    %s218 = sld [smem:[#allocation7 + $0x15]]
    %v219 = vstv %s218
    %v220 = vmul.f32 %v113, %v219
    %v221 = vadd.f32 %v217, %v220
    %s222 = sld [smem:[#allocation7 + $0x16]]
    %v223 = vstv %s222
    %v224 = vmul.f32 %v116, %v223
    %v225 = vadd.f32 %v221, %v224
    %s226 = sld [smem:[#allocation7 + $0x17]]
    %v227 = vstv %s226
    %v228 = vmul.f32 %v119, %v227
    %v229 = vadd.f32 %v225, %v228
    %s230 = sld [smem:[#allocation8 + $0x5]]
    %v231 = vstv %s230
    %v232 = vadd.f32 %v229, %v231
    %v233 = vmax.f32 %v232, 0.0
    %s234 = sld [smem:[#allocation7 + $0x18]]
    %v235 = vstv %s234
    %v236 = vmul.f32 %v110, %v235
    %s237 = sld [smem:[#allocation7 + $0x19]]
    %v238 = vstv %s237
    %v239 = vmul.f32 %v113, %v238
    %v240 = vadd.f32 %v236, %v239
    %s241 = sld [smem:[#allocation7 + $0x1a]]
    %v242 = vstv %s241
    %v243 = vmul.f32 %v116, %v242
    %v244 = vadd.f32 %v240, %v243
    %s245 = sld [smem:[#allocation7 + $0x1b]]
    %v246 = vstv %s245
    %v247 = vmul.f32 %v119, %v246
    %v248 = vadd.f32 %v244, %v247
    %s249 = sld [smem:[#allocation8 + $0x6]]
    %v250 = vstv %s249
    %v251 = vadd.f32 %v248, %v250
    %v252 = vmax.f32 %v251, 0.0
    %s253 = sld [smem:[#allocation7 + $0x1c]]
    %v254 = vstv %s253
    %v255 = vmul.f32 %v110, %v254
    %s256 = sld [smem:[#allocation7 + $0x1d]]
    %v257 = vstv %s256
    %v258 = vmul.f32 %v113, %v257
    %v259 = vadd.f32 %v255, %v258
    %s260 = sld [smem:[#allocation7 + $0x1e]]
    %v261 = vstv %s260
    %v262 = vmul.f32 %v116, %v261
    %v263 = vadd.f32 %v259, %v262
    %s264 = sld [smem:[#allocation7 + $0x1f]]
    %v265 = vstv %s264
    %v266 = vmul.f32 %v119, %v265
    %v267 = vadd.f32 %v263, %v266
    %s268 = sld [smem:[#allocation8 + $0x7]]
    %v269 = vstv %s268
    %v270 = vadd.f32 %v267, %v269
    %v271 = vmax.f32 %v270, 0.0
    %s272 = sld [smem:[#allocation7 + $0x20]]
    %v273 = vstv %s272
    %v274 = vmul.f32 %v110, %v273
    %s275 = sld [smem:[#allocation7 + $0x21]]
    %v276 = vstv %s275
    %v277 = vmul.f32 %v113, %v276
    %v278 = vadd.f32 %v274, %v277
    %s279 = sld [smem:[#allocation7 + $0x22]]
    %v280 = vstv %s279
    %v281 = vmul.f32 %v116, %v280
    %v282 = vadd.f32 %v278, %v281
    %s283 = sld [smem:[#allocation7 + $0x23]]
    %v284 = vstv %s283
    %v285 = vmul.f32 %v119, %v284
    %v286 = vadd.f32 %v282, %v285
    %s287 = sld [smem:[#allocation8 + $0x8]]
    %v288 = vstv %s287
    %v289 = vadd.f32 %v286, %v288
    %v290 = vmax.f32 %v289, 0.0
    %s291 = sld [smem:[#allocation7 + $0x24]]
    %v292 = vstv %s291
    %v293 = vmul.f32 %v110, %v292
    %s294 = sld [smem:[#allocation7 + $0x25]]
    %v295 = vstv %s294
    %v296 = vmul.f32 %v113, %v295
    %v297 = vadd.f32 %v293, %v296
    %s298 = sld [smem:[#allocation7 + $0x26]]
    %v299 = vstv %s298
    %v300 = vmul.f32 %v116, %v299
    %v301 = vadd.f32 %v297, %v300
    %s302 = sld [smem:[#allocation7 + $0x27]]
    %v303 = vstv %s302
    %v304 = vmul.f32 %v119, %v303
    %v305 = vadd.f32 %v301, %v304
    %s306 = sld [smem:[#allocation8 + $0x9]]
    %v307 = vstv %s306
    %v308 = vadd.f32 %v305, %v307
    %v309 = vmax.f32 %v308, 0.0
    %s310 = sld [smem:[#allocation9]]
    %v311 = vstv %s310
    %v312 = vmul.f32 %v138, %v311
    %s313 = sld [smem:[#allocation9 + $0x1]]
    %v314 = vstv %s313
    %v315 = vmul.f32 %v157, %v314
    %v316 = vadd.f32 %v312, %v315
    %s317 = sld [smem:[#allocation9 + $0x2]]
    %v318 = vstv %s317
    %v319 = vmul.f32 %v176, %v318
    %v320 = vadd.f32 %v316, %v319
    %s321 = sld [smem:[#allocation9 + $0x3]]
    %v322 = vstv %s321
    %v323 = vmul.f32 %v195, %v322
    %v324 = vadd.f32 %v320, %v323
    %s325 = sld [smem:[#allocation9 + $0x4]]
    %v326 = vstv %s325
    %v327 = vmul.f32 %v214, %v326
    %v328 = vadd.f32 %v324, %v327
    %s329 = sld [smem:[#allocation9 + $0x5]]
    %v330 = vstv %s329
    %v331 = vmul.f32 %v233, %v330
    %v332 = vadd.f32 %v328, %v331
    %s333 = sld [smem:[#allocation9 + $0x6]]
    %v334 = vstv %s333
    %v335 = vmul.f32 %v252, %v334
    %v336 = vadd.f32 %v332, %v335
    %s337 = sld [smem:[#allocation9 + $0x7]]
    %v338 = vstv %s337
    %v339 = vmul.f32 %v271, %v338
    %v340 = vadd.f32 %v336, %v339
    %s341 = sld [smem:[#allocation9 + $0x8]]
    %v342 = vstv %s341
    %v343 = vmul.f32 %v290, %v342
    %v344 = vadd.f32 %v340, %v343
    %s345 = sld [smem:[#allocation9 + $0x9]]
    %v346 = vstv %s345
    %v347 = vmul.f32 %v309, %v346
    %v348 = vadd.f32 %v344, %v347
    %s349 = sld [smem:[#allocation11]]
    %v350 = vstv %s349
    %v351 = vadd.f32 %v348, %v350
    %v352 = vmax.f32 %v351, 0.0
    %s353 = sld [smem:[#allocation9 + $0xa]]
    %v354 = vstv %s353
    %v355 = vmul.f32 %v138, %v354
    %s356 = sld [smem:[#allocation9 + $0xb]]
    %v357 = vstv %s356
    %v358 = vmul.f32 %v157, %v357
    %v359 = vadd.f32 %v355, %v358
    %s360 = sld [smem:[#allocation9 + $0xc]]
    %v361 = vstv %s360
    %v362 = vmul.f32 %v176, %v361
    %v363 = vadd.f32 %v359, %v362
    %s364 = sld [smem:[#allocation9 + $0xd]]
    %v365 = vstv %s364
    %v366 = vmul.f32 %v195, %v365
    %v367 = vadd.f32 %v363, %v366
    %s368 = sld [smem:[#allocation9 + $0xe]]
    %v369 = vstv %s368
    %v370 = vmul.f32 %v214, %v369
    %v371 = vadd.f32 %v367, %v370
    %s372 = sld [smem:[#allocation9 + $0xf]]
    %v373 = vstv %s372
    %v374 = vmul.f32 %v233, %v373
    %v375 = vadd.f32 %v371, %v374
    %s376 = sld [smem:[#allocation9 + $0x10]]
    %v377 = vstv %s376
    %v378 = vmul.f32 %v252, %v377
    %v379 = vadd.f32 %v375, %v378
    %s380 = sld [smem:[#allocation9 + $0x11]]
    %v381 = vstv %s380
    %v382 = vmul.f32 %v271, %v381
    %v383 = vadd.f32 %v379, %v382
    %s384 = sld [smem:[#allocation9 + $0x12]]
    %v385 = vstv %s384
    %v386 = vmul.f32 %v290, %v385
    %v387 = vadd.f32 %v383, %v386
    %s388 = sld [smem:[#allocation9 + $0x13]]
    %v389 = vstv %s388
    %v390 = vmul.f32 %v309, %v389
    %v391 = vadd.f32 %v387, %v390
    %s392 = sld [smem:[#allocation11 + $0x1]]
    %v393 = vstv %s392
    %v394 = vadd.f32 %v391, %v393
    %v395 = vmax.f32 %v394, 0.0
    %s396 = sld [smem:[#allocation9 + $0x14]]
    %v397 = vstv %s396
    %v398 = vmul.f32 %v138, %v397
    %s399 = sld [smem:[#allocation9 + $0x15]]
    %v400 = vstv %s399
    %v401 = vmul.f32 %v157, %v400
    %v402 = vadd.f32 %v398, %v401
    %s403 = sld [smem:[#allocation9 + $0x16]]
    %v404 = vstv %s403
    %v405 = vmul.f32 %v176, %v404
    %v406 = vadd.f32 %v402, %v405
    %s407 = sld [smem:[#allocation9 + $0x17]]
    %v408 = vstv %s407
    %v409 = vmul.f32 %v195, %v408
    %v410 = vadd.f32 %v406, %v409
    %s411 = sld [smem:[#allocation9 + $0x18]]
    %v412 = vstv %s411
    %v413 = vmul.f32 %v214, %v412
    %v414 = vadd.f32 %v410, %v413
    %s415 = sld [smem:[#allocation9 + $0x19]]
    %v416 = vstv %s415
    %v417 = vmul.f32 %v233, %v416
    %v418 = vadd.f32 %v414, %v417
    %s419 = sld [smem:[#allocation9 + $0x1a]]
    %v420 = vstv %s419
    %v421 = vmul.f32 %v252, %v420
    %v422 = vadd.f32 %v418, %v421
    %s423 = sld [smem:[#allocation9 + $0x1b]]
    %v424 = vstv %s423
    %v425 = vmul.f32 %v271, %v424
    %v426 = vadd.f32 %v422, %v425
    %s427 = sld [smem:[#allocation9 + $0x1c]]
    %v428 = vstv %s427
    %v429 = vmul.f32 %v290, %v428
    %v430 = vadd.f32 %v426, %v429
    %s431 = sld [smem:[#allocation9 + $0x1d]]
    %v432 = vstv %s431
    %v433 = vmul.f32 %v309, %v432
    %v434 = vadd.f32 %v430, %v433
    %s435 = sld [smem:[#allocation11 + $0x2]]
    %v436 = vstv %s435
    %v437 = vadd.f32 %v434, %v436
    %v438 = vmax.f32 %v437, 0.0
    %s439 = sld [smem:[#allocation9 + $0x1e]]
    %v440 = vstv %s439
    %v441 = vmul.f32 %v138, %v440
    %s442 = sld [smem:[#allocation9 + $0x1f]]
    %v443 = vstv %s442
    %v444 = vmul.f32 %v157, %v443
    %v445 = vadd.f32 %v441, %v444
    %s446 = sld [smem:[#allocation9 + $0x20]]
    %v447 = vstv %s446
    %v448 = vmul.f32 %v176, %v447
    %v449 = vadd.f32 %v445, %v448
    %s450 = sld [smem:[#allocation9 + $0x21]]
    %v451 = vstv %s450
    %v452 = vmul.f32 %v195, %v451
    %v453 = vadd.f32 %v449, %v452
    %s454 = sld [smem:[#allocation9 + $0x22]]
    %v455 = vstv %s454
    %v456 = vmul.f32 %v214, %v455
    %v457 = vadd.f32 %v453, %v456
    %s458 = sld [smem:[#allocation9 + $0x23]]
    %v459 = vstv %s458
    %v460 = vmul.f32 %v233, %v459
    %v461 = vadd.f32 %v457, %v460
    %s462 = sld [smem:[#allocation9 + $0x24]]
    %v463 = vstv %s462
    %v464 = vmul.f32 %v252, %v463
    %v465 = vadd.f32 %v461, %v464
    %s466 = sld [smem:[#allocation9 + $0x25]]
    %v467 = vstv %s466
    %v468 = vmul.f32 %v271, %v467
    %v469 = vadd.f32 %v465, %v468
    %s470 = sld [smem:[#allocation9 + $0x26]]
    %v471 = vstv %s470
    %v472 = vmul.f32 %v290, %v471
    %v473 = vadd.f32 %v469, %v472
    %s474 = sld [smem:[#allocation9 + $0x27]]
    %v475 = vstv %s474
    %v476 = vmul.f32 %v309, %v475
    %v477 = vadd.f32 %v473, %v476
    %s478 = sld [smem:[#allocation11 + $0x3]]
    %v479 = vstv %s478
    %v480 = vadd.f32 %v477, %v479
    %v481 = vmax.f32 %v480, 0.0
    %s482 = sld [smem:[#allocation9 + $0x28]]
    %v483 = vstv %s482
    %v484 = vmul.f32 %v138, %v483
    %s485 = sld [smem:[#allocation9 + $0x29]]
    %v486 = vstv %s485
    %v487 = vmul.f32 %v157, %v486
    %v488 = vadd.f32 %v484, %v487
    %s489 = sld [smem:[#allocation9 + $0x2a]]
    %v490 = vstv %s489
    %v491 = vmul.f32 %v176, %v490
    %v492 = vadd.f32 %v488, %v491
    %s493 = sld [smem:[#allocation9 + $0x2b]]
    %v494 = vstv %s493
    %v495 = vmul.f32 %v195, %v494
    %v496 = vadd.f32 %v492, %v495
    %s497 = sld [smem:[#allocation9 + $0x2c]]
    %v498 = vstv %s497
    %v499 = vmul.f32 %v214, %v498
    %v500 = vadd.f32 %v496, %v499
    %s501 = sld [smem:[#allocation9 + $0x2d]]
    %v502 = vstv %s501
    %v503 = vmul.f32 %v233, %v502
    %v504 = vadd.f32 %v500, %v503
    %s505 = sld [smem:[#allocation9 + $0x2e]]
    %v506 = vstv %s505
    %v507 = vmul.f32 %v252, %v506
    %v508 = vadd.f32 %v504, %v507
    %s509 = sld [smem:[#allocation9 + $0x2f]]
    %v510 = vstv %s509
    %v511 = vmul.f32 %v271, %v510
    %v512 = vadd.f32 %v508, %v511
    %s513 = sld [smem:[#allocation9 + $0x30]]
    %v514 = vstv %s513
    %v515 = vmul.f32 %v290, %v514
    %v516 = vadd.f32 %v512, %v515
    %s517 = sld [smem:[#allocation9 + $0x31]]
    %v518 = vstv %s517
    %v519 = vmul.f32 %v309, %v518
    %v520 = vadd.f32 %v516, %v519
    %s521 = sld [smem:[#allocation11 + $0x4]]
    %v522 = vstv %s521
    %v523 = vadd.f32 %v520, %v522
    %v524 = vmax.f32 %v523, 0.0
    %s525 = sld [smem:[#allocation9 + $0x32]]
    %v526 = vstv %s525
    %v527 = vmul.f32 %v138, %v526
    %s528 = sld [smem:[#allocation9 + $0x33]]
    %v529 = vstv %s528
    %v530 = vmul.f32 %v157, %v529
    %v531 = vadd.f32 %v527, %v530
    %s532 = sld [smem:[#allocation9 + $0x34]]
    %v533 = vstv %s532
    %v534 = vmul.f32 %v176, %v533
    %v535 = vadd.f32 %v531, %v534
    %s536 = sld [smem:[#allocation9 + $0x35]]
    %v537 = vstv %s536
    %v538 = vmul.f32 %v195, %v537
    %v539 = vadd.f32 %v535, %v538
    %s540 = sld [smem:[#allocation9 + $0x36]]
    %v541 = vstv %s540
    %v542 = vmul.f32 %v214, %v541
    %v543 = vadd.f32 %v539, %v542
    %s544 = sld [smem:[#allocation9 + $0x37]]
    %v545 = vstv %s544
    %v546 = vmul.f32 %v233, %v545
    %v547 = vadd.f32 %v543, %v546
    %s548 = sld [smem:[#allocation9 + $0x38]]
    %v549 = vstv %s548
    %v550 = vmul.f32 %v252, %v549
    %v551 = vadd.f32 %v547, %v550
    %s552 = sld [smem:[#allocation9 + $0x39]]
    %v553 = vstv %s552
    %v554 = vmul.f32 %v271, %v553
    %v555 = vadd.f32 %v551, %v554
    %s556 = sld [smem:[#allocation9 + $0x3a]]
    %v557 = vstv %s556
    %v558 = vmul.f32 %v290, %v557
    %v559 = vadd.f32 %v555, %v558
    %s560 = sld [smem:[#allocation9 + $0x3b]]
    %v561 = vstv %s560
    %v562 = vmul.f32 %v309, %v561
    %v563 = vadd.f32 %v559, %v562
    %s564 = sld [smem:[#allocation11 + $0x5]]
    %v565 = vstv %s564
    %v566 = vadd.f32 %v563, %v565
    %v567 = vmax.f32 %v566, 0.0
    %s568 = sld [smem:[#allocation9 + $0x3c]]
    %v569 = vstv %s568
    %v570 = vmul.f32 %v138, %v569
    %s571 = sld [smem:[#allocation9 + $0x3d]]
    %v572 = vstv %s571
    %v573 = vmul.f32 %v157, %v572
    %v574 = vadd.f32 %v570, %v573
    %s575 = sld [smem:[#allocation9 + $0x3e]]
    %v576 = vstv %s575
    %v577 = vmul.f32 %v176, %v576
    %v578 = vadd.f32 %v574, %v577
    %s579 = sld [smem:[#allocation9 + $0x3f]]
    %v580 = vstv %s579
    %v581 = vmul.f32 %v195, %v580
    %v582 = vadd.f32 %v578, %v581
    %s583 = sld [smem:[#allocation9 + $0x40]]
    %v584 = vstv %s583
    %v585 = vmul.f32 %v214, %v584
    %v586 = vadd.f32 %v582, %v585
    %s587 = sld [smem:[#allocation9 + $0x41]]
    %v588 = vstv %s587
    %v589 = vmul.f32 %v233, %v588
    %v590 = vadd.f32 %v586, %v589
    %s591 = sld [smem:[#allocation9 + $0x42]]
    %v592 = vstv %s591
    %v593 = vmul.f32 %v252, %v592
    %v594 = vadd.f32 %v590, %v593
    %s595 = sld [smem:[#allocation9 + $0x43]]
    %v596 = vstv %s595
    %v597 = vmul.f32 %v271, %v596
    %v598 = vadd.f32 %v594, %v597
    %s599 = sld [smem:[#allocation9 + $0x44]]
    %v600 = vstv %s599
    %v601 = vmul.f32 %v290, %v600
    %v602 = vadd.f32 %v598, %v601
    %s603 = sld [smem:[#allocation9 + $0x45]]
    %v604 = vstv %s603
    %v605 = vmul.f32 %v309, %v604
    %v606 = vadd.f32 %v602, %v605
    %s607 = sld [smem:[#allocation11 + $0x6]]
    %v608 = vstv %s607
    %v609 = vadd.f32 %v606, %v608
    %v610 = vmax.f32 %v609, 0.0
    %s611 = sld [smem:[#allocation9 + $0x46]]
    %v612 = vstv %s611
    %v613 = vmul.f32 %v138, %v612
    %s614 = sld [smem:[#allocation9 + $0x47]]
    %v615 = vstv %s614
    %v616 = vmul.f32 %v157, %v615
    %v617 = vadd.f32 %v613, %v616
    %s618 = sld [smem:[#allocation9 + $0x48]]
    %v619 = vstv %s618
    %v620 = vmul.f32 %v176, %v619
    %v621 = vadd.f32 %v617, %v620
    %s622 = sld [smem:[#allocation9 + $0x49]]
    %v623 = vstv %s622
    %v624 = vmul.f32 %v195, %v623
    %v625 = vadd.f32 %v621, %v624
    %s626 = sld [smem:[#allocation9 + $0x4a]]
    %v627 = vstv %s626
    %v628 = vmul.f32 %v214, %v627
    %v629 = vadd.f32 %v625, %v628
    %s630 = sld [smem:[#allocation9 + $0x4b]]
    %v631 = vstv %s630
    %v632 = vmul.f32 %v233, %v631
    %v633 = vadd.f32 %v629, %v632
    %s634 = sld [smem:[#allocation9 + $0x4c]]
    %v635 = vstv %s634
    %v636 = vmul.f32 %v252, %v635
    %v637 = vadd.f32 %v633, %v636
    %s638 = sld [smem:[#allocation9 + $0x4d]]
    %v639 = vstv %s638
    %v640 = vmul.f32 %v271, %v639
    %v641 = vadd.f32 %v637, %v640
    %s642 = sld [smem:[#allocation9 + $0x4e]]
    %v643 = vstv %s642
    %v644 = vmul.f32 %v290, %v643
    %v645 = vadd.f32 %v641, %v644
    %s646 = sld [smem:[#allocation9 + $0x4f]]
    %v647 = vstv %s646
    %v648 = vmul.f32 %v309, %v647
    %v649 = vadd.f32 %v645, %v648
    %s650 = sld [smem:[#allocation11 + $0x7]]
    %v651 = vstv %s650
    %v652 = vadd.f32 %v649, %v651
    %v653 = vmax.f32 %v652, 0.0
    %s654 = sld [smem:[#allocation9 + $0x50]]
    %v655 = vstv %s654
    %v656 = vmul.f32 %v138, %v655
    %s657 = sld [smem:[#allocation9 + $0x51]]
    %v658 = vstv %s657
    %v659 = vmul.f32 %v157, %v658
    %v660 = vadd.f32 %v656, %v659
    %s661 = sld [smem:[#allocation9 + $0x52]]
    %v662 = vstv %s661
    %v663 = vmul.f32 %v176, %v662
    %v664 = vadd.f32 %v660, %v663
    %s665 = sld [smem:[#allocation9 + $0x53]]
    %v666 = vstv %s665
    %v667 = vmul.f32 %v195, %v666
    %v668 = vadd.f32 %v664, %v667
    %s669 = sld [smem:[#allocation9 + $0x54]]
    %v670 = vstv %s669
    %v671 = vmul.f32 %v214, %v670
    %v672 = vadd.f32 %v668, %v671
    %s673 = sld [smem:[#allocation9 + $0x55]]
    %v674 = vstv %s673
    %v675 = vmul.f32 %v233, %v674
    %v676 = vadd.f32 %v672, %v675
    %s677 = sld [smem:[#allocation9 + $0x56]]
    %v678 = vstv %s677
    %v679 = vmul.f32 %v252, %v678
    %v680 = vadd.f32 %v676, %v679
    %s681 = sld [smem:[#allocation9 + $0x57]]
    %v682 = vstv %s681
    %v683 = vmul.f32 %v271, %v682
    %v684 = vadd.f32 %v680, %v683
    %s685 = sld [smem:[#allocation9 + $0x58]]
    %v686 = vstv %s685
    %v687 = vmul.f32 %v290, %v686
    %v688 = vadd.f32 %v684, %v687
    %s689 = sld [smem:[#allocation9 + $0x59]]
    %v690 = vstv %s689
    %v691 = vmul.f32 %v309, %v690
    %v692 = vadd.f32 %v688, %v691
    %s693 = sld [smem:[#allocation11 + $0x8]]
    %v694 = vstv %s693
    %v695 = vadd.f32 %v692, %v694
    %v696 = vmax.f32 %v695, 0.0
    %s697 = sld [smem:[#allocation9 + $0x5a]]
    %v698 = vstv %s697
    %v699 = vmul.f32 %v138, %v698
    %s700 = sld [smem:[#allocation9 + $0x5b]]
    %v701 = vstv %s700
    %v702 = vmul.f32 %v157, %v701
    %v703 = vadd.f32 %v699, %v702
    %s704 = sld [smem:[#allocation9 + $0x5c]]
    %v705 = vstv %s704
    %v706 = vmul.f32 %v176, %v705
    %v707 = vadd.f32 %v703, %v706
    %s708 = sld [smem:[#allocation9 + $0x5d]]
    %v709 = vstv %s708
    %v710 = vmul.f32 %v195, %v709
    %v711 = vadd.f32 %v707, %v710
    %s712 = sld [smem:[#allocation9 + $0x5e]]
    %v713 = vstv %s712
    %v714 = vmul.f32 %v214, %v713
    %v715 = vadd.f32 %v711, %v714
    %s716 = sld [smem:[#allocation9 + $0x5f]]
    %v717 = vstv %s716
    %v718 = vmul.f32 %v233, %v717
    %v719 = vadd.f32 %v715, %v718
    %s720 = sld [smem:[#allocation9 + $0x60]]
    %v721 = vstv %s720
    %v722 = vmul.f32 %v252, %v721
    %v723 = vadd.f32 %v719, %v722
    %s724 = sld [smem:[#allocation9 + $0x61]]
    %v725 = vstv %s724
    %v726 = vmul.f32 %v271, %v725
    %v727 = vadd.f32 %v723, %v726
    %s728 = sld [smem:[#allocation9 + $0x62]]
    %v729 = vstv %s728
    %v730 = vmul.f32 %v290, %v729
    %v731 = vadd.f32 %v727, %v730
    %s732 = sld [smem:[#allocation9 + $0x63]]
    %v733 = vstv %s732
    %v734 = vmul.f32 %v309, %v733
    %v735 = vadd.f32 %v731, %v734
    %s736 = sld [smem:[#allocation11 + $0x9]]
    %v737 = vstv %s736
    %v738 = vadd.f32 %v735, %v737
    %v739 = vmax.f32 %v738, 0.0
    %s740 = sld [smem:[#allocation9 + $0x64]]
    %v741 = vstv %s740
    %v742 = vmul.f32 %v138, %v741
    %s743 = sld [smem:[#allocation9 + $0x65]]
    %v744 = vstv %s743
    %v745 = vmul.f32 %v157, %v744
    %v746 = vadd.f32 %v742, %v745
    %s747 = sld [smem:[#allocation9 + $0x66]]
    %v748 = vstv %s747
    %v749 = vmul.f32 %v176, %v748
    %v750 = vadd.f32 %v746, %v749
    %s751 = sld [smem:[#allocation9 + $0x67]]
    %v752 = vstv %s751
    %v753 = vmul.f32 %v195, %v752
    %v754 = vadd.f32 %v750, %v753
    %s755 = sld [smem:[#allocation9 + $0x68]]
    %v756 = vstv %s755
    %v757 = vmul.f32 %v214, %v756
    %v758 = vadd.f32 %v754, %v757
    %s759 = sld [smem:[#allocation9 + $0x69]]
    %v760 = vstv %s759
    %v761 = vmul.f32 %v233, %v760
    %v762 = vadd.f32 %v758, %v761
    %s763 = sld [smem:[#allocation9 + $0x6a]]
    %v764 = vstv %s763
    %v765 = vmul.f32 %v252, %v764
    %v766 = vadd.f32 %v762, %v765
    %s767 = sld [smem:[#allocation9 + $0x6b]]
    %v768 = vstv %s767
    %v769 = vmul.f32 %v271, %v768
    %v770 = vadd.f32 %v766, %v769
    %s771 = sld [smem:[#allocation9 + $0x6c]]
    %v772 = vstv %s771
    %v773 = vmul.f32 %v290, %v772
    %v774 = vadd.f32 %v770, %v773
    %s775 = sld [smem:[#allocation9 + $0x6d]]
    %v776 = vstv %s775
    %v777 = vmul.f32 %v309, %v776
    %v778 = vadd.f32 %v774, %v777
    %s779 = sld [smem:[#allocation11 + $0xa]]
    %v780 = vstv %s779
    %v781 = vadd.f32 %v778, %v780
    %v782 = vmax.f32 %v781, 0.0
    %s783 = sld [smem:[#allocation9 + $0x6e]]
    %v784 = vstv %s783
    %v785 = vmul.f32 %v138, %v784
    %s786 = sld [smem:[#allocation9 + $0x6f]]
    %v787 = vstv %s786
    %v788 = vmul.f32 %v157, %v787
    %v789 = vadd.f32 %v785, %v788
    %s790 = sld [smem:[#allocation9 + $0x70]]
    %v791 = vstv %s790
    %v792 = vmul.f32 %v176, %v791
    %v793 = vadd.f32 %v789, %v792
    %s794 = sld [smem:[#allocation9 + $0x71]]
    %v795 = vstv %s794
    %v796 = vmul.f32 %v195, %v795
    %v797 = vadd.f32 %v793, %v796
    %s798 = sld [smem:[#allocation9 + $0x72]]
    %v799 = vstv %s798
    %v800 = vmul.f32 %v214, %v799
    %v801 = vadd.f32 %v797, %v800
    %s802 = sld [smem:[#allocation9 + $0x73]]
    %v803 = vstv %s802
    %v804 = vmul.f32 %v233, %v803
    %v805 = vadd.f32 %v801, %v804
    %s806 = sld [smem:[#allocation9 + $0x74]]
    %v807 = vstv %s806
    %v808 = vmul.f32 %v252, %v807
    %v809 = vadd.f32 %v805, %v808
    %s810 = sld [smem:[#allocation9 + $0x75]]
    %v811 = vstv %s810
    %v812 = vmul.f32 %v271, %v811
    %v813 = vadd.f32 %v809, %v812
    %s814 = sld [smem:[#allocation9 + $0x76]]
    %v815 = vstv %s814
    %v816 = vmul.f32 %v290, %v815
    %v817 = vadd.f32 %v813, %v816
    %s818 = sld [smem:[#allocation9 + $0x77]]
    %v819 = vstv %s818
    %v820 = vmul.f32 %v309, %v819
    %v821 = vadd.f32 %v817, %v820
    %s822 = sld [smem:[#allocation11 + $0xb]]
    %v823 = vstv %s822
    %v824 = vadd.f32 %v821, %v823
    %v825 = vmax.f32 %v824, 0.0
    %s826 = sld [smem:[#allocation9 + $0x78]]
    %v827 = vstv %s826
    %v828 = vmul.f32 %v138, %v827
    %s829 = sld [smem:[#allocation9 + $0x79]]
    %v830 = vstv %s829
    %v831 = vmul.f32 %v157, %v830
    %v832 = vadd.f32 %v828, %v831
    %s833 = sld [smem:[#allocation9 + $0x7a]]
    %v834 = vstv %s833
    %v835 = vmul.f32 %v176, %v834
    %v836 = vadd.f32 %v832, %v835
    %s837 = sld [smem:[#allocation9 + $0x7b]]
    %v838 = vstv %s837
    %v839 = vmul.f32 %v195, %v838
    %v840 = vadd.f32 %v836, %v839
    %s841 = sld [smem:[#allocation9 + $0x7c]]
    %v842 = vstv %s841
    %v843 = vmul.f32 %v214, %v842
    %v844 = vadd.f32 %v840, %v843
    %s845 = sld [smem:[#allocation9 + $0x7d]]
    %v846 = vstv %s845
    %v847 = vmul.f32 %v233, %v846
    %v848 = vadd.f32 %v844, %v847
    %s849 = sld [smem:[#allocation9 + $0x7e]]
    %v850 = vstv %s849
    %v851 = vmul.f32 %v252, %v850
    %v852 = vadd.f32 %v848, %v851
    %s853 = sld [smem:[#allocation9 + $0x7f]]
    %v854 = vstv %s853
    %v855 = vmul.f32 %v271, %v854
    %v856 = vadd.f32 %v852, %v855
    %s857 = sld [smem:[#allocation9 + $0x80]]
    %v858 = vstv %s857
    %v859 = vmul.f32 %v290, %v858
    %v860 = vadd.f32 %v856, %v859
    %s861 = sld [smem:[#allocation9 + $0x81]]
    %v862 = vstv %s861
    %v863 = vmul.f32 %v309, %v862
    %v864 = vadd.f32 %v860, %v863
    %s865 = sld [smem:[#allocation11 + $0xc]]
    %v866 = vstv %s865
    %v867 = vadd.f32 %v864, %v866
    %v868 = vmax.f32 %v867, 0.0
    %s869 = sld [smem:[#allocation9 + $0x82]]
    %v870 = vstv %s869
    %v871 = vmul.f32 %v138, %v870
    %s872 = sld [smem:[#allocation9 + $0x83]]
    %v873 = vstv %s872
    %v874 = vmul.f32 %v157, %v873
    %v875 = vadd.f32 %v871, %v874
    %s876 = sld [smem:[#allocation9 + $0x84]]
    %v877 = vstv %s876
    %v878 = vmul.f32 %v176, %v877
    %v879 = vadd.f32 %v875, %v878
    %s880 = sld [smem:[#allocation9 + $0x85]]
    %v881 = vstv %s880
    %v882 = vmul.f32 %v195, %v881
    %v883 = vadd.f32 %v879, %v882
    %s884 = sld [smem:[#allocation9 + $0x86]]
    %v885 = vstv %s884
    %v886 = vmul.f32 %v214, %v885
    %v887 = vadd.f32 %v883, %v886
    %s888 = sld [smem:[#allocation9 + $0x87]]
    %v889 = vstv %s888
    %v890 = vmul.f32 %v233, %v889
    %v891 = vadd.f32 %v887, %v890
    %s892 = sld [smem:[#allocation9 + $0x88]]
    %v893 = vstv %s892
    %v894 = vmul.f32 %v252, %v893
    %v895 = vadd.f32 %v891, %v894
    %s896 = sld [smem:[#allocation9 + $0x89]]
    %v897 = vstv %s896
    %v898 = vmul.f32 %v271, %v897
    %v899 = vadd.f32 %v895, %v898
    %s900 = sld [smem:[#allocation9 + $0x8a]]
    %v901 = vstv %s900
    %v902 = vmul.f32 %v290, %v901
    %v903 = vadd.f32 %v899, %v902
    %s904 = sld [smem:[#allocation9 + $0x8b]]
    %v905 = vstv %s904
    %v906 = vmul.f32 %v309, %v905
    %v907 = vadd.f32 %v903, %v906
    %s908 = sld [smem:[#allocation11 + $0xd]]
    %v909 = vstv %s908
    %v910 = vadd.f32 %v907, %v909
    %v911 = vmax.f32 %v910, 0.0
    %s912 = sld [smem:[#allocation9 + $0x8c]]
    %v913 = vstv %s912
    %v914 = vmul.f32 %v138, %v913
    %s915 = sld [smem:[#allocation9 + $0x8d]]
    %v916 = vstv %s915
    %v917 = vmul.f32 %v157, %v916
    %v918 = vadd.f32 %v914, %v917
    %s919 = sld [smem:[#allocation9 + $0x8e]]
    %v920 = vstv %s919
    %v921 = vmul.f32 %v176, %v920
    %v922 = vadd.f32 %v918, %v921
    %s923 = sld [smem:[#allocation9 + $0x8f]]
    %v924 = vstv %s923
    %v925 = vmul.f32 %v195, %v924
    %v926 = vadd.f32 %v922, %v925
    %s927 = sld [smem:[#allocation9 + $0x90]]
    %v928 = vstv %s927
    %v929 = vmul.f32 %v214, %v928
    %v930 = vadd.f32 %v926, %v929
    %s931 = sld [smem:[#allocation9 + $0x91]]
    %v932 = vstv %s931
    %v933 = vmul.f32 %v233, %v932
    %v934 = vadd.f32 %v930, %v933
    %s935 = sld [smem:[#allocation9 + $0x92]]
    %v936 = vstv %s935
    %v937 = vmul.f32 %v252, %v936
    %v938 = vadd.f32 %v934, %v937
    %s939 = sld [smem:[#allocation9 + $0x93]]
    %v940 = vstv %s939
    %v941 = vmul.f32 %v271, %v940
    %v942 = vadd.f32 %v938, %v941
    %s943 = sld [smem:[#allocation9 + $0x94]]
    %v944 = vstv %s943
    %v945 = vmul.f32 %v290, %v944
    %v946 = vadd.f32 %v942, %v945
    %s947 = sld [smem:[#allocation9 + $0x95]]
    %v948 = vstv %s947
    %v949 = vmul.f32 %v309, %v948
    %v950 = vadd.f32 %v946, %v949
    %s951 = sld [smem:[#allocation11 + $0xe]]
    %v952 = vstv %s951
    %v953 = vadd.f32 %v950, %v952
    %v954 = vmax.f32 %v953, 0.0
    %s955 = sld [smem:[#allocation9 + $0x96]]
    %v956 = vstv %s955
    %v957 = vmul.f32 %v138, %v956
    %s958 = sld [smem:[#allocation9 + $0x97]]
    %v959 = vstv %s958
    %v960 = vmul.f32 %v157, %v959
    %v961 = vadd.f32 %v957, %v960
    %s962 = sld [smem:[#allocation9 + $0x98]]
    %v963 = vstv %s962
    %v964 = vmul.f32 %v176, %v963
    %v965 = vadd.f32 %v961, %v964
    %s966 = sld [smem:[#allocation9 + $0x99]]
    %v967 = vstv %s966
    %v968 = vmul.f32 %v195, %v967
    %v969 = vadd.f32 %v965, %v968
    %s970 = sld [smem:[#allocation9 + $0x9a]]
    %v971 = vstv %s970
    %v972 = vmul.f32 %v214, %v971
    %v973 = vadd.f32 %v969, %v972
    %s974 = sld [smem:[#allocation9 + $0x9b]]
    %v975 = vstv %s974
    %v976 = vmul.f32 %v233, %v975
    %v977 = vadd.f32 %v973, %v976
    %s978 = sld [smem:[#allocation9 + $0x9c]]
    %v979 = vstv %s978
    %v980 = vmul.f32 %v252, %v979
    %v981 = vadd.f32 %v977, %v980
    %s982 = sld [smem:[#allocation9 + $0x9d]]
    %v983 = vstv %s982
    %v984 = vmul.f32 %v271, %v983
    %v985 = vadd.f32 %v981, %v984
    %s986 = sld [smem:[#allocation9 + $0x9e]]
    %v987 = vstv %s986
    %v988 = vmul.f32 %v290, %v987
    %v989 = vadd.f32 %v985, %v988
    %s990 = sld [smem:[#allocation9 + $0x9f]]
    %v991 = vstv %s990
    %v992 = vmul.f32 %v309, %v991
    %v993 = vadd.f32 %v989, %v992
    %s994 = sld [smem:[#allocation11 + $0xf]]
    %v995 = vstv %s994
    %v996 = vadd.f32 %v993, %v995
    %v997 = vmax.f32 %v996, 0.0
    %s998 = sld [smem:[#allocation12]]
    %v999 = vstv %s998
    %v1000 = vmul.f32 %v352, %v999
    %s1001 = sld [smem:[#allocation12 + $0x1]]
    %v1002 = vstv %s1001
    %v1003 = vmul.f32 %v395, %v1002
    %v1004 = vadd.f32 %v1000, %v1003
    %s1005 = sld [smem:[#allocation12 + $0x2]]
    %v1006 = vstv %s1005
    %v1007 = vmul.f32 %v438, %v1006
    %v1008 = vadd.f32 %v1004, %v1007
    %s1009 = sld [smem:[#allocation12 + $0x3]]
    %v1010 = vstv %s1009
    %v1011 = vmul.f32 %v481, %v1010
    %v1012 = vadd.f32 %v1008, %v1011
    %s1013 = sld [smem:[#allocation12 + $0x4]]
    %v1014 = vstv %s1013
    %v1015 = vmul.f32 %v524, %v1014
    %v1016 = vadd.f32 %v1012, %v1015
    %s1017 = sld [smem:[#allocation12 + $0x5]]
    %v1018 = vstv %s1017
    %v1019 = vmul.f32 %v567, %v1018
    %v1020 = vadd.f32 %v1016, %v1019
    %s1021 = sld [smem:[#allocation12 + $0x6]]
    %v1022 = vstv %s1021
    %v1023 = vmul.f32 %v610, %v1022
    %v1024 = vadd.f32 %v1020, %v1023
    %s1025 = sld [smem:[#allocation12 + $0x7]]
    %v1026 = vstv %s1025
    %v1027 = vmul.f32 %v653, %v1026
    %v1028 = vadd.f32 %v1024, %v1027
    %s1029 = sld [smem:[#allocation12 + $0x8]]
    %v1030 = vstv %s1029
    %v1031 = vmul.f32 %v696, %v1030
    %v1032 = vadd.f32 %v1028, %v1031
    %s1033 = sld [smem:[#allocation12 + $0x9]]
    %v1034 = vstv %s1033
    %v1035 = vmul.f32 %v739, %v1034
    %v1036 = vadd.f32 %v1032, %v1035
    %s1037 = sld [smem:[#allocation12 + $0xa]]
    %v1038 = vstv %s1037
    %v1039 = vmul.f32 %v782, %v1038
    %v1040 = vadd.f32 %v1036, %v1039
    %s1041 = sld [smem:[#allocation12 + $0xb]]
    %v1042 = vstv %s1041
    %v1043 = vmul.f32 %v825, %v1042
    %v1044 = vadd.f32 %v1040, %v1043
    %s1045 = sld [smem:[#allocation12 + $0xc]]
    %v1046 = vstv %s1045
    %v1047 = vmul.f32 %v868, %v1046
    %v1048 = vadd.f32 %v1044, %v1047
    %s1049 = sld [smem:[#allocation12 + $0xd]]
    %v1050 = vstv %s1049
    %v1051 = vmul.f32 %v911, %v1050
    %v1052 = vadd.f32 %v1048, %v1051
    %s1053 = sld [smem:[#allocation12 + $0xe]]
    %v1054 = vstv %s1053
    %v1055 = vmul.f32 %v954, %v1054
    %v1056 = vadd.f32 %v1052, %v1055
    %s1057 = sld [smem:[#allocation12 + $0xf]]
    %v1058 = vstv %s1057
    %v1059 = vmul.f32 %v997, %v1058
    %v1060 = vadd.f32 %v1056, %v1059
    %s1061 = sld [smem:[#allocation14]]
    %v1062 = vstv %s1061
    %v1063 = vadd.f32 %v1060, %v1062
    %1064 = vst [vmem:[#allocation15] sm:$0xff] %v1063
    %s1065 = sld [smem:[#allocation12 + $0x10]]
    %v1066 = vstv %s1065
    %v1067 = vmul.f32 %v352, %v1066
    %s1068 = sld [smem:[#allocation12 + $0x11]]
    %v1069 = vstv %s1068
    %v1070 = vmul.f32 %v395, %v1069
    %v1071 = vadd.f32 %v1067, %v1070
    %s1072 = sld [smem:[#allocation12 + $0x12]]
    %v1073 = vstv %s1072
    %v1074 = vmul.f32 %v438, %v1073
    %v1075 = vadd.f32 %v1071, %v1074
    %s1076 = sld [smem:[#allocation12 + $0x13]]
    %v1077 = vstv %s1076
    %v1078 = vmul.f32 %v481, %v1077
    %v1079 = vadd.f32 %v1075, %v1078
    %s1080 = sld [smem:[#allocation12 + $0x14]]
    %v1081 = vstv %s1080
    %v1082 = vmul.f32 %v524, %v1081
    %v1083 = vadd.f32 %v1079, %v1082
    %s1084 = sld [smem:[#allocation12 + $0x15]]
    %v1085 = vstv %s1084
    %v1086 = vmul.f32 %v567, %v1085
    %v1087 = vadd.f32 %v1083, %v1086
    %s1088 = sld [smem:[#allocation12 + $0x16]]
    %v1089 = vstv %s1088
    %v1090 = vmul.f32 %v610, %v1089
    %v1091 = vadd.f32 %v1087, %v1090
    %s1092 = sld [smem:[#allocation12 + $0x17]]
    %v1093 = vstv %s1092
    %v1094 = vmul.f32 %v653, %v1093
    %v1095 = vadd.f32 %v1091, %v1094
    %s1096 = sld [smem:[#allocation12 + $0x18]]
    %v1097 = vstv %s1096
    %v1098 = vmul.f32 %v696, %v1097
    %v1099 = vadd.f32 %v1095, %v1098
    %s1100 = sld [smem:[#allocation12 + $0x19]]
    %v1101 = vstv %s1100
    %v1102 = vmul.f32 %v739, %v1101
    %v1103 = vadd.f32 %v1099, %v1102
    %s1104 = sld [smem:[#allocation12 + $0x1a]]
    %v1105 = vstv %s1104
    %v1106 = vmul.f32 %v782, %v1105
    %v1107 = vadd.f32 %v1103, %v1106
    %s1108 = sld [smem:[#allocation12 + $0x1b]]
    %v1109 = vstv %s1108
    %v1110 = vmul.f32 %v825, %v1109
    %v1111 = vadd.f32 %v1107, %v1110
    %s1112 = sld [smem:[#allocation12 + $0x1c]]
    %v1113 = vstv %s1112
    %v1114 = vmul.f32 %v868, %v1113
    %v1115 = vadd.f32 %v1111, %v1114
    %s1116 = sld [smem:[#allocation12 + $0x1d]]
    %v1117 = vstv %s1116
    %v1118 = vmul.f32 %v911, %v1117
    %v1119 = vadd.f32 %v1115, %v1118
    %s1120 = sld [smem:[#allocation12 + $0x1e]]
    %v1121 = vstv %s1120
    %v1122 = vmul.f32 %v954, %v1121
    %v1123 = vadd.f32 %v1119, %v1122
    %s1124 = sld [smem:[#allocation12 + $0x1f]]
    %v1125 = vstv %s1124
    %v1126 = vmul.f32 %v997, %v1125
    %v1127 = vadd.f32 %v1123, %v1126
    %s1128 = sld [smem:[#allocation14 + $0x1]]
    %v1129 = vstv %s1128
    %v1130 = vadd.f32 %v1127, %v1129
    %s1131 = scalar_lea.vmem [#allocation15], %s111
    %1132 = vst [vmem:[%s1131] sm:$0xff] %v1130
    %s1133 = sld [smem:[#allocation12 + $0x20]]
    %v1134 = vstv %s1133
    %v1135 = vmul.f32 %v352, %v1134
    %s1136 = sld [smem:[#allocation12 + $0x21]]
    %v1137 = vstv %s1136
    %v1138 = vmul.f32 %v395, %v1137
    %v1139 = vadd.f32 %v1135, %v1138
    %s1140 = sld [smem:[#allocation12 + $0x22]]
    %v1141 = vstv %s1140
    %v1142 = vmul.f32 %v438, %v1141
    %v1143 = vadd.f32 %v1139, %v1142
    %s1144 = sld [smem:[#allocation12 + $0x23]]
    %v1145 = vstv %s1144
    %v1146 = vmul.f32 %v481, %v1145
    %v1147 = vadd.f32 %v1143, %v1146
    %s1148 = sld [smem:[#allocation12 + $0x24]]
    %v1149 = vstv %s1148
    %v1150 = vmul.f32 %v524, %v1149
    %v1151 = vadd.f32 %v1147, %v1150
    %s1152 = sld [smem:[#allocation12 + $0x25]]
    %v1153 = vstv %s1152
    %v1154 = vmul.f32 %v567, %v1153
    %v1155 = vadd.f32 %v1151, %v1154
    %s1156 = sld [smem:[#allocation12 + $0x26]]
    %v1157 = vstv %s1156
    %v1158 = vmul.f32 %v610, %v1157
    %v1159 = vadd.f32 %v1155, %v1158
    %s1160 = sld [smem:[#allocation12 + $0x27]]
    %v1161 = vstv %s1160
    %v1162 = vmul.f32 %v653, %v1161
    %v1163 = vadd.f32 %v1159, %v1162
    %s1164 = sld [smem:[#allocation12 + $0x28]]
    %v1165 = vstv %s1164
    %v1166 = vmul.f32 %v696, %v1165
    %v1167 = vadd.f32 %v1163, %v1166
    %s1168 = sld [smem:[#allocation12 + $0x29]]
    %v1169 = vstv %s1168
    %v1170 = vmul.f32 %v739, %v1169
    %v1171 = vadd.f32 %v1167, %v1170
    %s1172 = sld [smem:[#allocation12 + $0x2a]]
    %v1173 = vstv %s1172
    %v1174 = vmul.f32 %v782, %v1173
    %v1175 = vadd.f32 %v1171, %v1174
    %s1176 = sld [smem:[#allocation12 + $0x2b]]
    %v1177 = vstv %s1176
    %v1178 = vmul.f32 %v825, %v1177
    %v1179 = vadd.f32 %v1175, %v1178
    %s1180 = sld [smem:[#allocation12 + $0x2c]]
    %v1181 = vstv %s1180
    %v1182 = vmul.f32 %v868, %v1181
    %v1183 = vadd.f32 %v1179, %v1182
    %s1184 = sld [smem:[#allocation12 + $0x2d]]
    %v1185 = vstv %s1184
    %v1186 = vmul.f32 %v911, %v1185
    %v1187 = vadd.f32 %v1183, %v1186
    %s1188 = sld [smem:[#allocation12 + $0x2e]]
    %v1189 = vstv %s1188
    %v1190 = vmul.f32 %v954, %v1189
    %v1191 = vadd.f32 %v1187, %v1190
    %s1192 = sld [smem:[#allocation12 + $0x2f]]
    %v1193 = vstv %s1192
    %v1194 = vmul.f32 %v997, %v1193
    %v1195 = vadd.f32 %v1191, %v1194
    %s1196 = sld [smem:[#allocation14 + $0x2]]
    %v1197 = vstv %s1196
    %v1198 = vadd.f32 %v1195, %v1197
    %s1199 = scalar_lea.vmem [#allocation15], %s114
    %1200 = vst [vmem:[%s1199] sm:$0xff] %v1198
    %s1201 = sld [smem:[#allocation12 + $0x30]]
    %v1202 = vstv %s1201
    %v1203 = vmul.f32 %v352, %v1202
    %s1204 = sld [smem:[#allocation12 + $0x31]]
    %v1205 = vstv %s1204
    %v1206 = vmul.f32 %v395, %v1205
    %v1207 = vadd.f32 %v1203, %v1206
    %s1208 = sld [smem:[#allocation12 + $0x32]]
    %v1209 = vstv %s1208
    %v1210 = vmul.f32 %v438, %v1209
    %v1211 = vadd.f32 %v1207, %v1210
    %s1212 = sld [smem:[#allocation12 + $0x33]]
    %v1213 = vstv %s1212
    %v1214 = vmul.f32 %v481, %v1213
    %v1215 = vadd.f32 %v1211, %v1214
    %s1216 = sld [smem:[#allocation12 + $0x34]]
    %v1217 = vstv %s1216
    %v1218 = vmul.f32 %v524, %v1217
    %v1219 = vadd.f32 %v1215, %v1218
    %s1220 = sld [smem:[#allocation12 + $0x35]]
    %v1221 = vstv %s1220
    %v1222 = vmul.f32 %v567, %v1221
    %v1223 = vadd.f32 %v1219, %v1222
    %s1224 = sld [smem:[#allocation12 + $0x36]]
    %v1225 = vstv %s1224
    %v1226 = vmul.f32 %v610, %v1225
    %v1227 = vadd.f32 %v1223, %v1226
    %s1228 = sld [smem:[#allocation12 + $0x37]]
    %v1229 = vstv %s1228
    %v1230 = vmul.f32 %v653, %v1229
    %v1231 = vadd.f32 %v1227, %v1230
    %s1232 = sld [smem:[#allocation12 + $0x38]]
    %v1233 = vstv %s1232
    %v1234 = vmul.f32 %v696, %v1233
    %v1235 = vadd.f32 %v1231, %v1234
    %s1236 = sld [smem:[#allocation12 + $0x39]]
    %v1237 = vstv %s1236
    %v1238 = vmul.f32 %v739, %v1237
    %v1239 = vadd.f32 %v1235, %v1238
    %s1240 = sld [smem:[#allocation12 + $0x3a]]
    %v1241 = vstv %s1240
    %v1242 = vmul.f32 %v782, %v1241
    %v1243 = vadd.f32 %v1239, %v1242
    %s1244 = sld [smem:[#allocation12 + $0x3b]]
    %v1245 = vstv %s1244
    %v1246 = vmul.f32 %v825, %v1245
    %v1247 = vadd.f32 %v1243, %v1246
    %s1248 = sld [smem:[#allocation12 + $0x3c]]
    %v1249 = vstv %s1248
    %v1250 = vmul.f32 %v868, %v1249
    %v1251 = vadd.f32 %v1247, %v1250
    %s1252 = sld [smem:[#allocation12 + $0x3d]]
    %v1253 = vstv %s1252
    %v1254 = vmul.f32 %v911, %v1253
    %v1255 = vadd.f32 %v1251, %v1254
    %s1256 = sld [smem:[#allocation12 + $0x3e]]
    %v1257 = vstv %s1256
    %v1258 = vmul.f32 %v954, %v1257
    %v1259 = vadd.f32 %v1255, %v1258
    %s1260 = sld [smem:[#allocation12 + $0x3f]]
    %v1261 = vstv %s1260
    %v1262 = vmul.f32 %v997, %v1261
    %v1263 = vadd.f32 %v1259, %v1262
    %s1264 = sld [smem:[#allocation14 + $0x3]]
    %v1265 = vstv %s1264
    %v1266 = vadd.f32 %v1263, %v1265
    %s1267 = scalar_lea.vmem [#allocation15], %s117
    %1268 = vst [vmem:[%s1267] sm:$0xff] %v1266
    %s1269 = sld [smem:[#allocation12 + $0x40]]
    %v1270 = vstv %s1269
    %v1271 = vmul.f32 %v352, %v1270
    %s1272 = sld [smem:[#allocation12 + $0x41]]
    %v1273 = vstv %s1272
    %v1274 = vmul.f32 %v395, %v1273
    %v1275 = vadd.f32 %v1271, %v1274
    %s1276 = sld [smem:[#allocation12 + $0x42]]
    %v1277 = vstv %s1276
    %v1278 = vmul.f32 %v438, %v1277
    %v1279 = vadd.f32 %v1275, %v1278
    %s1280 = sld [smem:[#allocation12 + $0x43]]
    %v1281 = vstv %s1280
    %v1282 = vmul.f32 %v481, %v1281
    %v1283 = vadd.f32 %v1279, %v1282
    %s1284 = sld [smem:[#allocation12 + $0x44]]
    %v1285 = vstv %s1284
    %v1286 = vmul.f32 %v524, %v1285
    %v1287 = vadd.f32 %v1283, %v1286
    %s1288 = sld [smem:[#allocation12 + $0x45]]
    %v1289 = vstv %s1288
    %v1290 = vmul.f32 %v567, %v1289
    %v1291 = vadd.f32 %v1287, %v1290
    %s1292 = sld [smem:[#allocation12 + $0x46]]
    %v1293 = vstv %s1292
    %v1294 = vmul.f32 %v610, %v1293
    %v1295 = vadd.f32 %v1291, %v1294
    %s1296 = sld [smem:[#allocation12 + $0x47]]
    %v1297 = vstv %s1296
    %v1298 = vmul.f32 %v653, %v1297
    %v1299 = vadd.f32 %v1295, %v1298
    %s1300 = sld [smem:[#allocation12 + $0x48]]
    %v1301 = vstv %s1300
    %v1302 = vmul.f32 %v696, %v1301
    %v1303 = vadd.f32 %v1299, %v1302
    %s1304 = sld [smem:[#allocation12 + $0x49]]
    %v1305 = vstv %s1304
    %v1306 = vmul.f32 %v739, %v1305
    %v1307 = vadd.f32 %v1303, %v1306
    %s1308 = sld [smem:[#allocation12 + $0x4a]]
    %v1309 = vstv %s1308
    %v1310 = vmul.f32 %v782, %v1309
    %v1311 = vadd.f32 %v1307, %v1310
    %s1312 = sld [smem:[#allocation12 + $0x4b]]
    %v1313 = vstv %s1312
    %v1314 = vmul.f32 %v825, %v1313
    %v1315 = vadd.f32 %v1311, %v1314
    %s1316 = sld [smem:[#allocation12 + $0x4c]]
    %v1317 = vstv %s1316
    %v1318 = vmul.f32 %v868, %v1317
    %v1319 = vadd.f32 %v1315, %v1318
    %s1320 = sld [smem:[#allocation12 + $0x4d]]
    %v1321 = vstv %s1320
    %v1322 = vmul.f32 %v911, %v1321
    %v1323 = vadd.f32 %v1319, %v1322
    %s1324 = sld [smem:[#allocation12 + $0x4e]]
    %v1325 = vstv %s1324
    %v1326 = vmul.f32 %v954, %v1325
    %v1327 = vadd.f32 %v1323, %v1326
    %s1328 = sld [smem:[#allocation12 + $0x4f]]
    %v1329 = vstv %s1328
    %v1330 = vmul.f32 %v997, %v1329
    %v1331 = vadd.f32 %v1327, %v1330
    %s1332 = sld [smem:[#allocation14 + $0x4]]
    %v1333 = vstv %s1332
    %v1334 = vadd.f32 %v1331, %v1333
    %s1335 = sadd.s32 0, 32
    %s1336 = scalar_lea.vmem [#allocation15], %s1335
    %1337 = vst [vmem:[%s1336] sm:$0xff] %v1334
    %s1338 = sld [smem:[#allocation12 + $0x50]]
    %v1339 = vstv %s1338
    %v1340 = vmul.f32 %v352, %v1339
    %s1341 = sld [smem:[#allocation12 + $0x51]]
    %v1342 = vstv %s1341
    %v1343 = vmul.f32 %v395, %v1342
    %v1344 = vadd.f32 %v1340, %v1343
    %s1345 = sld [smem:[#allocation12 + $0x52]]
    %v1346 = vstv %s1345
    %v1347 = vmul.f32 %v438, %v1346
    %v1348 = vadd.f32 %v1344, %v1347
    %s1349 = sld [smem:[#allocation12 + $0x53]]
    %v1350 = vstv %s1349
    %v1351 = vmul.f32 %v481, %v1350
    %v1352 = vadd.f32 %v1348, %v1351
    %s1353 = sld [smem:[#allocation12 + $0x54]]
    %v1354 = vstv %s1353
    %v1355 = vmul.f32 %v524, %v1354
    %v1356 = vadd.f32 %v1352, %v1355
    %s1357 = sld [smem:[#allocation12 + $0x55]]
    %v1358 = vstv %s1357
    %v1359 = vmul.f32 %v567, %v1358
    %v1360 = vadd.f32 %v1356, %v1359
    %s1361 = sld [smem:[#allocation12 + $0x56]]
    %v1362 = vstv %s1361
    %v1363 = vmul.f32 %v610, %v1362
    %v1364 = vadd.f32 %v1360, %v1363
    %s1365 = sld [smem:[#allocation12 + $0x57]]
    %v1366 = vstv %s1365
    %v1367 = vmul.f32 %v653, %v1366
    %v1368 = vadd.f32 %v1364, %v1367
    %s1369 = sld [smem:[#allocation12 + $0x58]]
    %v1370 = vstv %s1369
    %v1371 = vmul.f32 %v696, %v1370
    %v1372 = vadd.f32 %v1368, %v1371
    %s1373 = sld [smem:[#allocation12 + $0x59]]
    %v1374 = vstv %s1373
    %v1375 = vmul.f32 %v739, %v1374
    %v1376 = vadd.f32 %v1372, %v1375
    %s1377 = sld [smem:[#allocation12 + $0x5a]]
    %v1378 = vstv %s1377
    %v1379 = vmul.f32 %v782, %v1378
    %v1380 = vadd.f32 %v1376, %v1379
    %s1381 = sld [smem:[#allocation12 + $0x5b]]
    %v1382 = vstv %s1381
    %v1383 = vmul.f32 %v825, %v1382
    %v1384 = vadd.f32 %v1380, %v1383
    %s1385 = sld [smem:[#allocation12 + $0x5c]]
    %v1386 = vstv %s1385
    %v1387 = vmul.f32 %v868, %v1386
    %v1388 = vadd.f32 %v1384, %v1387
    %s1389 = sld [smem:[#allocation12 + $0x5d]]
    %v1390 = vstv %s1389
    %v1391 = vmul.f32 %v911, %v1390
    %v1392 = vadd.f32 %v1388, %v1391
    %s1393 = sld [smem:[#allocation12 + $0x5e]]
    %v1394 = vstv %s1393
    %v1395 = vmul.f32 %v954, %v1394
    %v1396 = vadd.f32 %v1392, %v1395
    %s1397 = sld [smem:[#allocation12 + $0x5f]]
    %v1398 = vstv %s1397
    %v1399 = vmul.f32 %v997, %v1398
    %v1400 = vadd.f32 %v1396, %v1399
    %s1401 = sld [smem:[#allocation14 + $0x5]]
    %v1402 = vstv %s1401
    %v1403 = vadd.f32 %v1400, %v1402
    %s1404 = sadd.s32 0, 40
    %s1405 = scalar_lea.vmem [#allocation15], %s1404
    %1406 = vst [vmem:[%s1405] sm:$0xff] %v1403
    %s1407 = sld [smem:[#allocation12 + $0x60]]
    %v1408 = vstv %s1407
    %v1409 = vmul.f32 %v352, %v1408
    %s1410 = sld [smem:[#allocation12 + $0x61]]
    %v1411 = vstv %s1410
    %v1412 = vmul.f32 %v395, %v1411
    %v1413 = vadd.f32 %v1409, %v1412
    %s1414 = sld [smem:[#allocation12 + $0x62]]
    %v1415 = vstv %s1414
    %v1416 = vmul.f32 %v438, %v1415
    %v1417 = vadd.f32 %v1413, %v1416
    %s1418 = sld [smem:[#allocation12 + $0x63]]
    %v1419 = vstv %s1418
    %v1420 = vmul.f32 %v481, %v1419
    %v1421 = vadd.f32 %v1417, %v1420
    %s1422 = sld [smem:[#allocation12 + $0x64]]
    %v1423 = vstv %s1422
    %v1424 = vmul.f32 %v524, %v1423
    %v1425 = vadd.f32 %v1421, %v1424
    %s1426 = sld [smem:[#allocation12 + $0x65]]
    %v1427 = vstv %s1426
    %v1428 = vmul.f32 %v567, %v1427
    %v1429 = vadd.f32 %v1425, %v1428
    %s1430 = sld [smem:[#allocation12 + $0x66]]
    %v1431 = vstv %s1430
    %v1432 = vmul.f32 %v610, %v1431
    %v1433 = vadd.f32 %v1429, %v1432
    %s1434 = sld [smem:[#allocation12 + $0x67]]
    %v1435 = vstv %s1434
    %v1436 = vmul.f32 %v653, %v1435
    %v1437 = vadd.f32 %v1433, %v1436
    %s1438 = sld [smem:[#allocation12 + $0x68]]
    %v1439 = vstv %s1438
    %v1440 = vmul.f32 %v696, %v1439
    %v1441 = vadd.f32 %v1437, %v1440
    %s1442 = sld [smem:[#allocation12 + $0x69]]
    %v1443 = vstv %s1442
    %v1444 = vmul.f32 %v739, %v1443
    %v1445 = vadd.f32 %v1441, %v1444
    %s1446 = sld [smem:[#allocation12 + $0x6a]]
    %v1447 = vstv %s1446
    %v1448 = vmul.f32 %v782, %v1447
    %v1449 = vadd.f32 %v1445, %v1448
    %s1450 = sld [smem:[#allocation12 + $0x6b]]
    %v1451 = vstv %s1450
    %v1452 = vmul.f32 %v825, %v1451
    %v1453 = vadd.f32 %v1449, %v1452
    %s1454 = sld [smem:[#allocation12 + $0x6c]]
    %v1455 = vstv %s1454
    %v1456 = vmul.f32 %v868, %v1455
    %v1457 = vadd.f32 %v1453, %v1456
    %s1458 = sld [smem:[#allocation12 + $0x6d]]
    %v1459 = vstv %s1458
    %v1460 = vmul.f32 %v911, %v1459
    %v1461 = vadd.f32 %v1457, %v1460
    %s1462 = sld [smem:[#allocation12 + $0x6e]]
    %v1463 = vstv %s1462
    %v1464 = vmul.f32 %v954, %v1463
    %v1465 = vadd.f32 %v1461, %v1464
    %s1466 = sld [smem:[#allocation12 + $0x6f]]
    %v1467 = vstv %s1466
    %v1468 = vmul.f32 %v997, %v1467
    %v1469 = vadd.f32 %v1465, %v1468
    %s1470 = sld [smem:[#allocation14 + $0x6]]
    %v1471 = vstv %s1470
    %v1472 = vadd.f32 %v1469, %v1471
    %s1473 = sadd.s32 0, 48
    %s1474 = scalar_lea.vmem [#allocation15], %s1473
    %1475 = vst [vmem:[%s1474] sm:$0xff] %v1472
    %s1476 = sld [smem:[#allocation12 + $0x70]]
    %v1477 = vstv %s1476
    %v1478 = vmul.f32 %v352, %v1477
    %s1479 = sld [smem:[#allocation12 + $0x71]]
    %v1480 = vstv %s1479
    %v1481 = vmul.f32 %v395, %v1480
    %v1482 = vadd.f32 %v1478, %v1481
    %s1483 = sld [smem:[#allocation12 + $0x72]]
    %v1484 = vstv %s1483
    %v1485 = vmul.f32 %v438, %v1484
    %v1486 = vadd.f32 %v1482, %v1485
    %s1487 = sld [smem:[#allocation12 + $0x73]]
    %v1488 = vstv %s1487
    %v1489 = vmul.f32 %v481, %v1488
    %v1490 = vadd.f32 %v1486, %v1489
    %s1491 = sld [smem:[#allocation12 + $0x74]]
    %v1492 = vstv %s1491
    %v1493 = vmul.f32 %v524, %v1492
    %v1494 = vadd.f32 %v1490, %v1493
    %s1495 = sld [smem:[#allocation12 + $0x75]]
    %v1496 = vstv %s1495
    %v1497 = vmul.f32 %v567, %v1496
    %v1498 = vadd.f32 %v1494, %v1497
    %s1499 = sld [smem:[#allocation12 + $0x76]]
    %v1500 = vstv %s1499
    %v1501 = vmul.f32 %v610, %v1500
    %v1502 = vadd.f32 %v1498, %v1501
    %s1503 = sld [smem:[#allocation12 + $0x77]]
    %v1504 = vstv %s1503
    %v1505 = vmul.f32 %v653, %v1504
    %v1506 = vadd.f32 %v1502, %v1505
    %s1507 = sld [smem:[#allocation12 + $0x78]]
    %v1508 = vstv %s1507
    %v1509 = vmul.f32 %v696, %v1508
    %v1510 = vadd.f32 %v1506, %v1509
    %s1511 = sld [smem:[#allocation12 + $0x79]]
    %v1512 = vstv %s1511
    %v1513 = vmul.f32 %v739, %v1512
    %v1514 = vadd.f32 %v1510, %v1513
    %s1515 = sld [smem:[#allocation12 + $0x7a]]
    %v1516 = vstv %s1515
    %v1517 = vmul.f32 %v782, %v1516
    %v1518 = vadd.f32 %v1514, %v1517
    %s1519 = sld [smem:[#allocation12 + $0x7b]]
    %v1520 = vstv %s1519
    %v1521 = vmul.f32 %v825, %v1520
    %v1522 = vadd.f32 %v1518, %v1521
    %s1523 = sld [smem:[#allocation12 + $0x7c]]
    %v1524 = vstv %s1523
    %v1525 = vmul.f32 %v868, %v1524
    %v1526 = vadd.f32 %v1522, %v1525
    %s1527 = sld [smem:[#allocation12 + $0x7d]]
    %v1528 = vstv %s1527
    %v1529 = vmul.f32 %v911, %v1528
    %v1530 = vadd.f32 %v1526, %v1529
    %s1531 = sld [smem:[#allocation12 + $0x7e]]
    %v1532 = vstv %s1531
    %v1533 = vmul.f32 %v954, %v1532
    %v1534 = vadd.f32 %v1530, %v1533
    %s1535 = sld [smem:[#allocation12 + $0x7f]]
    %v1536 = vstv %s1535
    %v1537 = vmul.f32 %v997, %v1536
    %v1538 = vadd.f32 %v1534, %v1537
    %s1539 = sld [smem:[#allocation14 + $0x7]]
    %v1540 = vstv %s1539
    %v1541 = vadd.f32 %v1538, %v1540
    %s1542 = sadd.s32 0, 56
    %s1543 = scalar_lea.vmem [#allocation15], %s1542
    %1544 = vst [vmem:[%s1543] sm:$0xff] %v1541
    // Predicated region
    $region58: #{tpu_custom_call.1} parent=1 // pred_check
      _
    $region59: #{tpu_custom_call.1} parent=1 // pred_check_branch
      %1546 = sbr.rel (0) target = $region61
    $region60: #{tpu_custom_call.1} parent=1 // pred_region
      %s1548 = ssub.s32 1024, 1024
      %1549 = vsyncadd [#allocation4], %s1548
      %s1550 = sshll.u32 [#allocation15], 4
      %s1551 = int_to_ptr.vmem [resolvable:$true] %s1550
      %1556 = dma.vmem_to_hbm [thread:$0]  %s1551, 1024, %s7, [#allocation4], 128, 128, 8
    $region61: #{tpu_custom_call.1} parent=1 // pred_fallthru
      _
    // Predicated region
    $region62: #{tpu_custom_call.1} parent=1 // pred_check
      _
    $region63: #{tpu_custom_call.1} parent=1 // pred_check_branch
      %1558 = sbr.rel (0) target = $region65
    $region64: #{tpu_custom_call.1} parent=1 // pred_region
      %1559 = dma.done [#allocation4], 1024
    $region65: #{tpu_custom_call.1} parent=1 // pred_fallthru
      _
    %1560 = vsyncpa [#allocation3], 1
    %1561 = vsyncpa [#allocation4], 1
    %1562 = vsyncpa [#allocation5], 1
    %1563 = vsyncpa [#allocation6], 1
    %1564 = vsyncpa [#allocation10], 1
    %1565 = vsyncpa [#allocation13], 1

</llo_original>
